<compile_context>
chip_gen: v7x
topology: tpu7x:2x2x1
jax: 0.10.0
libtpu: 0.0.40
codegen_flags: <defaults>
</compile_context>

<pallas_src>
import functools

import jax
import jax.numpy as jnp
from jax.experimental import pallas as pl
from jax.experimental.pallas import tpu as pltpu


def _mbd_kernel(mi_ref, mjt_ref, ob_ref, acc_ref, *,
                out_features, kernel_dims, n_valid, tile_j, padded, inv_scale):
    """One (i, j) tile of the pairwise exp(-L1) sum.

    mi_ref : (tile_i, B*C)        projected rows whose o_b we accumulate
    mjt_ref: (B*C, tile_j)        projected rows we compare against (transposed)
    ob_ref : (1, B, tile_i)       output block (written at the last j step)
    acc_ref: (B, tile_i, tile_j)  lane-dense f32 accumulator scratch
    """
    j = pl.program_id(1)

    @pl.when(j == 0)
    def _init():
        acc_ref[...] = jnp.zeros_like(acc_ref)

    mi = mi_ref[...]      # (tile_i, B*C) f32
    mjt = mjt_ref[...]    # (B*C, tile_j) f32

    if padded:
        lane = jax.lax.broadcasted_iota(jnp.int32, (1, tile_j), 1)
        valid = (j * tile_j + lane) < n_valid          # (1, tile_j)

    # Static unroll over the (out_features * kernel_dims) kernel columns (128
    # for the default config).  Each step is a canonical column-vs-row outer
    # difference producing a lane-dense (tile_i, tile_j) tile; the C reduction
    # is folded into the running sum so no lane-sparse tensor ever exists.
    for b in range(out_features):
        nrm = None
        for c in range(kernel_dims):
            k = b * kernel_dims + c
            d = jnp.abs(mi[:, k:k + 1] - mjt[k:k + 1, :])   # (tile_i, tile_j)
            nrm = d if nrm is None else nrm + d
        e = jnp.exp(-nrm)                                   # lane-dense EUP exp
        if padded:
            e = jnp.where(valid, e, 0.0)                    # drop padded j cols
        acc_ref[b] = acc_ref[b] + e

    @pl.when(j == pl.num_programs(1) - 1)
    def _finalize():
        tot = jnp.sum(acc_ref[...], axis=2)                 # (B, tile_i)
        res = tot - 1.0                                     # self-pair exp(0)=1
        if inv_scale != 1.0:                                # mean=True path
            res = res * inv_scale
        ob_ref[0] = res.astype(ob_ref.dtype)


def _round_up(v, m):
    return ((v + m - 1) // m) * m


def _choose_tiles(n):
    """(padded_n, tile_i, tile_j): lane-dense j tiles, >= 2 i blocks (v7x)."""
    if n > 128:
        npad = _round_up(n, 128)
        return npad, 128, 128
    npad = _round_up(n, 16)        # multiple of 16 so npad // 2 is 8-aligned
    return npad, npad // 2, npad


def minibatch_discrimination(x, T, mean=False):
    """Pallas TPU forward of MinibatchDiscrimination.

    x: (N, in_features); T: (in_features, out_features, kernel_dims).
    Returns concat([x, o_b], axis=1) with o_b of shape (N, out_features).
    """
    N, F = x.shape
    Fi, B, C = T.shape
    assert Fi == F

    # Projection hoisted out of the O(N^2) pairwise kernel (review item 3).
    m = x.astype(jnp.float32) @ T.reshape(Fi, B * C).astype(jnp.float32)

    Np, tile_i, tile_j = _choose_tiles(N)
    if Np != N:
        m = jnp.pad(m, ((0, Np - N), (0, 0)))
    mt = m.T                                                 # (B*C, Np)

    n_i = Np // tile_i
    n_j = Np // tile_j
    inv_scale = (1.0 / (N - 1)) if mean else 1.0

    kernel = functools.partial(
        _mbd_kernel, out_features=B, kernel_dims=C, n_valid=N, tile_j=tile_j,
        padded=(Np != N), inv_scale=inv_scale)

    obt = pl.pallas_call(
        kernel,
        out_shape=jax.ShapeDtypeStruct((n_i, B, tile_i), jnp.float32),
        grid_spec=pltpu.PrefetchScalarGridSpec(
            num_scalar_prefetch=0,
            grid=(n_i, n_j),
            in_specs=[
                pl.BlockSpec((tile_i, B * C), lambda i, j: (i, 0)),
                pl.BlockSpec((B * C, tile_j), lambda i, j: (0, j)),
            ],
            out_specs=pl.BlockSpec((1, B, tile_i), lambda i, j: (i, 0, 0)),
            scratch_shapes=[pltpu.VMEM((B, tile_i, tile_j), jnp.float32)],
        ),
        compiler_params=pltpu.CompilerParams(
            dimension_semantics=("parallel", "arbitrary"),
            vmem_limit_bytes=32 * 1024 * 1024,   # ~2 MiB actually used per step
        ),
    )(m, mt)

    # (n_i, B, tile_i) -> (Np, B); drop padded rows.  Concat stays outside the
    # kernel so x never round-trips through VMEM.
    o_b = jnp.transpose(obt, (0, 2, 1)).reshape(Np, B)[:N]
    return jnp.concatenate([x, o_b.astype(x.dtype)], axis=1)


def _reference(x, T, mean=False):
    N, F = x.shape
    Fi, B, C = T.shape
    m = (x @ T.reshape(Fi, B * C)).reshape(N, B, C)
    norm = jnp.abs(m[None, :, :, :] - m[:, None, :, :]).sum(-1)
    o_b = jnp.exp(-norm).sum(0) - 1.0
    if mean:
        o_b = o_b / (N - 1)
    return jnp.concatenate([x, o_b], axis=1)


if __name__ == "__main__":
    # Consistent with the module's __init__:
    #   in_features=32, out_features=16, kernel_dims=8, batch N=8
    N, in_features, out_features, kernel_dims = 8, 32, 16, 8

    key = jax.random.PRNGKey(0)
    kx, kt = jax.random.split(key)
    x = jax.random.normal(kx, (N, in_features), dtype=jnp.float32)
    # init.normal_(self.T, 0, 1)
    T = jax.random.normal(kt, (in_features, out_features, kernel_dims),
                          dtype=jnp.float32)

    out = jax.block_until_ready(minibatch_discrimination(x, T, mean=False))
    ref = _reference(x, T, mean=False)
    assert out.shape == (N, in_features + out_features)
    assert jnp.allclose(out, ref, rtol=1e-5, atol=1e-5), "mismatch vs reference"

    # Also exercise the mean=True path.
    out_m = jax.block_until_ready(minibatch_discrimination(x, T, mean=True))
    ref_m = _reference(x, T, mean=True)
    assert jnp.allclose(out_m, ref_m, rtol=1e-5, atol=1e-5), "mismatch (mean)"

    print("KERNEL_OK")
</pallas_src>

<mosaic_0001>
module attributes {stable_mosaic.version = 11 : i64} {
  func.func @_mbd_kernel(%arg0: i32, %arg1: i32, %arg2: memref<8x128xf32, #tpu.memory_space<vmem>>, %arg3: memref<128x16xf32, #tpu.memory_space<vmem>>, %arg4: memref<1x16x8xf32, #tpu.memory_space<vmem>>, %arg5: memref<16x8x16xf32, #tpu.memory_space<vmem>>) attributes {dimension_semantics = [#tpu.dimension_semantics<parallel>, #tpu.dimension_semantics<arbitrary>], iteration_bounds = array<i64: 2, 1>, scalar_prefetch = 0 : i64, scratch_operands = 1 : i64, tpu.core_type = #tpu.core_type<tc>, window_params = [{transform_indices = @transform_0, window_bounds = array<i64: 8, 128>}, {transform_indices = @transform_1, window_bounds = array<i64: 128, 16>}, {transform_indices = @transform_2, window_bounds = array<i64: 1, 16, 8>}]} {
    %c0_i32 = arith.constant 0 : i32
    %0 = arith.cmpi eq, %arg1, %c0_i32 : i32
    %1 = arith.extui %0 : i1 to i32
    %c0_i32_0 = arith.constant 0 : i32
    %2 = arith.cmpi ne, %1, %c0_i32_0 : i32
    scf.if %2 {
      %cst_118 = arith.constant 0.000000e+00 : f32
      %1102 = vector.broadcast %cst_118 : f32 to vector<16x8x16xf32>
      %c0_119 = arith.constant 0 : index
      %c0_120 = arith.constant 0 : index
      %c0_121 = arith.constant 0 : index
      %1103 = vector.load %arg5[%c0_119, %c0_120, %c0_121] : memref<16x8x16xf32, #tpu.memory_space<vmem>>, vector<16x8x16xf32>
      tpu.vector_store %arg5[%c0_119, %c0_120, %c0_121], %1102 {strides = array<i32>} : memref<16x8x16xf32, #tpu.memory_space<vmem>>, vector<16x8x16xf32>,
    } else {
    }
    %c0 = arith.constant 0 : index
    %c0_1 = arith.constant 0 : index
    %3 = vector.load %arg2[%c0, %c0_1] : memref<8x128xf32, #tpu.memory_space<vmem>>, vector<8x128xf32>
    %c0_2 = arith.constant 0 : index
    %c0_3 = arith.constant 0 : index
    %4 = vector.load %arg3[%c0_2, %c0_3] : memref<128x16xf32, #tpu.memory_space<vmem>>, vector<128x16xf32>
    %5 = tpu.iota {dimensions = array<i32: 1>} : vector<1x16xi32>
    %c16_i32 = arith.constant 16 : i32
    %6 = arith.muli %arg1, %c16_i32 : i32
    %7 = vector.broadcast %6 : i32 to vector<1x16xi32>
    %8 = arith.addi %7, %5 : vector<1x16xi32>
    %c8_i32 = arith.constant 8 : i32
    %9 = vector.broadcast %c8_i32 : i32 to vector<1x16xi32>
    %10 = arith.cmpi slt, %8, %9 : vector<1x16xi32>
    %11 = vector.extract_strided_slice %3 {offsets = [0, 0], sizes = [8, 1], strides = [1, 1]} : vector<8x128xf32> to vector<8x1xf32>
    %12 = vector.extract_strided_slice %4 {offsets = [0, 0], sizes = [1, 16], strides = [1, 1]} : vector<128x16xf32> to vector<1x16xf32>
    %13 = vector.broadcast %11 : vector<8x1xf32> to vector<8x16xf32>
    %14 = vector.broadcast %12 : vector<1x16xf32> to vector<8x16xf32>
    %15 = arith.subf %13, %14 : vector<8x16xf32>
    %16 = math.absf %15 : vector<8x16xf32>
    %17 = vector.extract_strided_slice %3 {offsets = [0, 1], sizes = [8, 1], strides = [1, 1]} : vector<8x128xf32> to vector<8x1xf32>
    %18 = vector.extract_strided_slice %4 {offsets = [1, 0], sizes = [1, 16], strides = [1, 1]} : vector<128x16xf32> to vector<1x16xf32>
    %19 = vector.broadcast %17 : vector<8x1xf32> to vector<8x16xf32>
    %20 = vector.broadcast %18 : vector<1x16xf32> to vector<8x16xf32>
    %21 = arith.subf %19, %20 : vector<8x16xf32>
    %22 = math.absf %21 : vector<8x16xf32>
    %23 = arith.addf %16, %22 : vector<8x16xf32>
    %24 = vector.extract_strided_slice %3 {offsets = [0, 2], sizes = [8, 1], strides = [1, 1]} : vector<8x128xf32> to vector<8x1xf32>
    %25 = vector.extract_strided_slice %4 {offsets = [2, 0], sizes = [1, 16], strides = [1, 1]} : vector<128x16xf32> to vector<1x16xf32>
    %26 = vector.broadcast %24 : vector<8x1xf32> to vector<8x16xf32>
    %27 = vector.broadcast %25 : vector<1x16xf32> to vector<8x16xf32>
    %28 = arith.subf %26, %27 : vector<8x16xf32>
    %29 = math.absf %28 : vector<8x16xf32>
    %30 = arith.addf %23, %29 : vector<8x16xf32>
    %31 = vector.extract_strided_slice %3 {offsets = [0, 3], sizes = [8, 1], strides = [1, 1]} : vector<8x128xf32> to vector<8x1xf32>
    %32 = vector.extract_strided_slice %4 {offsets = [3, 0], sizes = [1, 16], strides = [1, 1]} : vector<128x16xf32> to vector<1x16xf32>
    %33 = vector.broadcast %31 : vector<8x1xf32> to vector<8x16xf32>
    %34 = vector.broadcast %32 : vector<1x16xf32> to vector<8x16xf32>
    %35 = arith.subf %33, %34 : vector<8x16xf32>
    %36 = math.absf %35 : vector<8x16xf32>
    %37 = arith.addf %30, %36 : vector<8x16xf32>
    %38 = vector.extract_strided_slice %3 {offsets = [0, 4], sizes = [8, 1], strides = [1, 1]} : vector<8x128xf32> to vector<8x1xf32>
    %39 = vector.extract_strided_slice %4 {offsets = [4, 0], sizes = [1, 16], strides = [1, 1]} : vector<128x16xf32> to vector<1x16xf32>
    %40 = vector.broadcast %38 : vector<8x1xf32> to vector<8x16xf32>
    %41 = vector.broadcast %39 : vector<1x16xf32> to vector<8x16xf32>
    %42 = arith.subf %40, %41 : vector<8x16xf32>
    %43 = math.absf %42 : vector<8x16xf32>
    %44 = arith.addf %37, %43 : vector<8x16xf32>
    %45 = vector.extract_strided_slice %3 {offsets = [0, 5], sizes = [8, 1], strides = [1, 1]} : vector<8x128xf32> to vector<8x1xf32>
    %46 = vector.extract_strided_slice %4 {offsets = [5, 0], sizes = [1, 16], strides = [1, 1]} : vector<128x16xf32> to vector<1x16xf32>
    %47 = vector.broadcast %45 : vector<8x1xf32> to vector<8x16xf32>
    %48 = vector.broadcast %46 : vector<1x16xf32> to vector<8x16xf32>
    %49 = arith.subf %47, %48 : vector<8x16xf32>
    %50 = math.absf %49 : vector<8x16xf32>
    %51 = arith.addf %44, %50 : vector<8x16xf32>
    %52 = vector.extract_strided_slice %3 {offsets = [0, 6], sizes = [8, 1], strides = [1, 1]} : vector<8x128xf32> to vector<8x1xf32>
    %53 = vector.extract_strided_slice %4 {offsets = [6, 0], sizes = [1, 16], strides = [1, 1]} : vector<128x16xf32> to vector<1x16xf32>
    %54 = vector.broadcast %52 : vector<8x1xf32> to vector<8x16xf32>
    %55 = vector.broadcast %53 : vector<1x16xf32> to vector<8x16xf32>
    %56 = arith.subf %54, %55 : vector<8x16xf32>
    %57 = math.absf %56 : vector<8x16xf32>
    %58 = arith.addf %51, %57 : vector<8x16xf32>
    %59 = vector.extract_strided_slice %3 {offsets = [0, 7], sizes = [8, 1], strides = [1, 1]} : vector<8x128xf32> to vector<8x1xf32>
    %60 = vector.extract_strided_slice %4 {offsets = [7, 0], sizes = [1, 16], strides = [1, 1]} : vector<128x16xf32> to vector<1x16xf32>
    %61 = vector.broadcast %59 : vector<8x1xf32> to vector<8x16xf32>
    %62 = vector.broadcast %60 : vector<1x16xf32> to vector<8x16xf32>
    %63 = arith.subf %61, %62 : vector<8x16xf32>
    %64 = math.absf %63 : vector<8x16xf32>
    %65 = arith.addf %58, %64 : vector<8x16xf32>
    %cst = arith.constant 0.000000e+00 : f32
    %66 = vector.broadcast %cst : f32 to vector<8x16xf32>
    %67 = arith.subf %66, %65 : vector<8x16xf32>
    %68 = math.exp %67 : vector<8x16xf32>
    %cst_4 = arith.constant 0.000000e+00 : f32
    %69 = vector.shape_cast %10 : vector<1x16xi1> to vector<1x16xi1>
    %70 = vector.broadcast %69 : vector<1x16xi1> to vector<8x16xi1>
    %71 = vector.broadcast %cst_4 : f32 to vector<8x16xf32>
    %72 = arith.select %70, %68, %71 : vector<8x16xi1>, vector<8x16xf32>
    %c0_5 = arith.constant 0 : index
    %c0_6 = arith.constant 0 : index
    %c0_7 = arith.constant 0 : index
    %73 = vector.load %arg5[%c0_5, %c0_6, %c0_7] : memref<16x8x16xf32, #tpu.memory_space<vmem>>, vector<1x8x16xf32>
    %74 = vector.shape_cast %73 : vector<1x8x16xf32> to vector<8x16xf32>
    %75 = arith.addf %74, %72 : vector<8x16xf32>
    %c0_8 = arith.constant 0 : index
    %c0_9 = arith.constant 0 : index
    %c0_10 = arith.constant 0 : index
    %76 = vector.load %arg5[%c0_8, %c0_9, %c0_10] : memref<16x8x16xf32, #tpu.memory_space<vmem>>, vector<1x8x16xf32>
    %77 = vector.shape_cast %76 : vector<1x8x16xf32> to vector<8x16xf32>
    %78 = vector.shape_cast %75 : vector<8x16xf32> to vector<1x8x16xf32>
    tpu.vector_store %arg5[%c0_8, %c0_9, %c0_10], %78 {strides = array<i32>} : memref<16x8x16xf32, #tpu.memory_space<vmem>>, vector<1x8x16xf32>,
    %79 = vector.extract_strided_slice %3 {offsets = [0, 8], sizes = [8, 1], strides = [1, 1]} : vector<8x128xf32> to vector<8x1xf32>
    %80 = vector.extract_strided_slice %4 {offsets = [8, 0], sizes = [1, 16], strides = [1, 1]} : vector<128x16xf32> to vector<1x16xf32>
    %81 = vector.broadcast %79 : vector<8x1xf32> to vector<8x16xf32>
    %82 = vector.broadcast %80 : vector<1x16xf32> to vector<8x16xf32>
    %83 = arith.subf %81, %82 : vector<8x16xf32>
    %84 = math.absf %83 : vector<8x16xf32>
    %85 = vector.extract_strided_slice %3 {offsets = [0, 9], sizes = [8, 1], strides = [1, 1]} : vector<8x128xf32> to vector<8x1xf32>
    %86 = vector.extract_strided_slice %4 {offsets = [9, 0], sizes = [1, 16], strides = [1, 1]} : vector<128x16xf32> to vector<1x16xf32>
    %87 = vector.broadcast %85 : vector<8x1xf32> to vector<8x16xf32>
    %88 = vector.broadcast %86 : vector<1x16xf32> to vector<8x16xf32>
    %89 = arith.subf %87, %88 : vector<8x16xf32>
    %90 = math.absf %89 : vector<8x16xf32>
    %91 = arith.addf %84, %90 : vector<8x16xf32>
    %92 = vector.extract_strided_slice %3 {offsets = [0, 10], sizes = [8, 1], strides = [1, 1]} : vector<8x128xf32> to vector<8x1xf32>
    %93 = vector.extract_strided_slice %4 {offsets = [10, 0], sizes = [1, 16], strides = [1, 1]} : vector<128x16xf32> to vector<1x16xf32>
    %94 = vector.broadcast %92 : vector<8x1xf32> to vector<8x16xf32>
    %95 = vector.broadcast %93 : vector<1x16xf32> to vector<8x16xf32>
    %96 = arith.subf %94, %95 : vector<8x16xf32>
    %97 = math.absf %96 : vector<8x16xf32>
    %98 = arith.addf %91, %97 : vector<8x16xf32>
    %99 = vector.extract_strided_slice %3 {offsets = [0, 11], sizes = [8, 1], strides = [1, 1]} : vector<8x128xf32> to vector<8x1xf32>
    %100 = vector.extract_strided_slice %4 {offsets = [11, 0], sizes = [1, 16], strides = [1, 1]} : vector<128x16xf32> to vector<1x16xf32>
    %101 = vector.broadcast %99 : vector<8x1xf32> to vector<8x16xf32>
    %102 = vector.broadcast %100 : vector<1x16xf32> to vector<8x16xf32>
    %103 = arith.subf %101, %102 : vector<8x16xf32>
    %104 = math.absf %103 : vector<8x16xf32>
    %105 = arith.addf %98, %104 : vector<8x16xf32>
    %106 = vector.extract_strided_slice %3 {offsets = [0, 12], sizes = [8, 1], strides = [1, 1]} : vector<8x128xf32> to vector<8x1xf32>
    %107 = vector.extract_strided_slice %4 {offsets = [12, 0], sizes = [1, 16], strides = [1, 1]} : vector<128x16xf32> to vector<1x16xf32>
    %108 = vector.broadcast %106 : vector<8x1xf32> to vector<8x16xf32>
    %109 = vector.broadcast %107 : vector<1x16xf32> to vector<8x16xf32>
    %110 = arith.subf %108, %109 : vector<8x16xf32>
    %111 = math.absf %110 : vector<8x16xf32>
    %112 = arith.addf %105, %111 : vector<8x16xf32>
    %113 = vector.extract_strided_slice %3 {offsets = [0, 13], sizes = [8, 1], strides = [1, 1]} : vector<8x128xf32> to vector<8x1xf32>
    %114 = vector.extract_strided_slice %4 {offsets = [13, 0], sizes = [1, 16], strides = [1, 1]} : vector<128x16xf32> to vector<1x16xf32>
    %115 = vector.broadcast %113 : vector<8x1xf32> to vector<8x16xf32>
    %116 = vector.broadcast %114 : vector<1x16xf32> to vector<8x16xf32>
    %117 = arith.subf %115, %116 : vector<8x16xf32>
    %118 = math.absf %117 : vector<8x16xf32>
    %119 = arith.addf %112, %118 : vector<8x16xf32>
    %120 = vector.extract_strided_slice %3 {offsets = [0, 14], sizes = [8, 1], strides = [1, 1]} : vector<8x128xf32> to vector<8x1xf32>
    %121 = vector.extract_strided_slice %4 {offsets = [14, 0], sizes = [1, 16], strides = [1, 1]} : vector<128x16xf32> to vector<1x16xf32>
    %122 = vector.broadcast %120 : vector<8x1xf32> to vector<8x16xf32>
    %123 = vector.broadcast %121 : vector<1x16xf32> to vector<8x16xf32>
    %124 = arith.subf %122, %123 : vector<8x16xf32>
    %125 = math.absf %124 : vector<8x16xf32>
    %126 = arith.addf %119, %125 : vector<8x16xf32>
    %127 = vector.extract_strided_slice %3 {offsets = [0, 15], sizes = [8, 1], strides = [1, 1]} : vector<8x128xf32> to vector<8x1xf32>
    %128 = vector.extract_strided_slice %4 {offsets = [15, 0], sizes = [1, 16], strides = [1, 1]} : vector<128x16xf32> to vector<1x16xf32>
    %129 = vector.broadcast %127 : vector<8x1xf32> to vector<8x16xf32>
    %130 = vector.broadcast %128 : vector<1x16xf32> to vector<8x16xf32>
    %131 = arith.subf %129, %130 : vector<8x16xf32>
    %132 = math.absf %131 : vector<8x16xf32>
    %133 = arith.addf %126, %132 : vector<8x16xf32>
    %cst_11 = arith.constant 0.000000e+00 : f32
    %134 = vector.broadcast %cst_11 : f32 to vector<8x16xf32>
    %135 = arith.subf %134, %133 : vector<8x16xf32>
    %136 = math.exp %135 : vector<8x16xf32>
    %cst_12 = arith.constant 0.000000e+00 : f32
    %137 = vector.shape_cast %10 : vector<1x16xi1> to vector<1x16xi1>
    %138 = vector.broadcast %137 : vector<1x16xi1> to vector<8x16xi1>
    %139 = vector.broadcast %cst_12 : f32 to vector<8x16xf32>
    %140 = arith.select %138, %136, %139 : vector<8x16xi1>, vector<8x16xf32>
    %c1 = arith.constant 1 : index
    %c0_13 = arith.constant 0 : index
    %c0_14 = arith.constant 0 : index
    %141 = vector.load %arg5[%c1, %c0_13, %c0_14] : memref<16x8x16xf32, #tpu.memory_space<vmem>>, vector<1x8x16xf32>
    %142 = vector.shape_cast %141 : vector<1x8x16xf32> to vector<8x16xf32>
    %143 = arith.addf %142, %140 : vector<8x16xf32>
    %c1_15 = arith.constant 1 : index
    %c0_16 = arith.constant 0 : index
    %c0_17 = arith.constant 0 : index
    %144 = vector.load %arg5[%c1_15, %c0_16, %c0_17] : memref<16x8x16xf32, #tpu.memory_space<vmem>>, vector<1x8x16xf32>
    %145 = vector.shape_cast %144 : vector<1x8x16xf32> to vector<8x16xf32>
    %146 = vector.shape_cast %143 : vector<8x16xf32> to vector<1x8x16xf32>
    tpu.vector_store %arg5[%c1_15, %c0_16, %c0_17], %146 {strides = array<i32>} : memref<16x8x16xf32, #tpu.memory_space<vmem>>, vector<1x8x16xf32>,
    %147 = vector.extract_strided_slice %3 {offsets = [0, 16], sizes = [8, 1], strides = [1, 1]} : vector<8x128xf32> to vector<8x1xf32>
    %148 = vector.extract_strided_slice %4 {offsets = [16, 0], sizes = [1, 16], strides = [1, 1]} : vector<128x16xf32> to vector<1x16xf32>
    %149 = vector.broadcast %147 : vector<8x1xf32> to vector<8x16xf32>
    %150 = vector.broadcast %148 : vector<1x16xf32> to vector<8x16xf32>
    %151 = arith.subf %149, %150 : vector<8x16xf32>
    %152 = math.absf %151 : vector<8x16xf32>
    %153 = vector.extract_strided_slice %3 {offsets = [0, 17], sizes = [8, 1], strides = [1, 1]} : vector<8x128xf32> to vector<8x1xf32>
    %154 = vector.extract_strided_slice %4 {offsets = [17, 0], sizes = [1, 16], strides = [1, 1]} : vector<128x16xf32> to vector<1x16xf32>
    %155 = vector.broadcast %153 : vector<8x1xf32> to vector<8x16xf32>
    %156 = vector.broadcast %154 : vector<1x16xf32> to vector<8x16xf32>
    %157 = arith.subf %155, %156 : vector<8x16xf32>
    %158 = math.absf %157 : vector<8x16xf32>
    %159 = arith.addf %152, %158 : vector<8x16xf32>
    %160 = vector.extract_strided_slice %3 {offsets = [0, 18], sizes = [8, 1], strides = [1, 1]} : vector<8x128xf32> to vector<8x1xf32>
    %161 = vector.extract_strided_slice %4 {offsets = [18, 0], sizes = [1, 16], strides = [1, 1]} : vector<128x16xf32> to vector<1x16xf32>
    %162 = vector.broadcast %160 : vector<8x1xf32> to vector<8x16xf32>
    %163 = vector.broadcast %161 : vector<1x16xf32> to vector<8x16xf32>
    %164 = arith.subf %162, %163 : vector<8x16xf32>
    %165 = math.absf %164 : vector<8x16xf32>
    %166 = arith.addf %159, %165 : vector<8x16xf32>
    %167 = vector.extract_strided_slice %3 {offsets = [0, 19], sizes = [8, 1], strides = [1, 1]} : vector<8x128xf32> to vector<8x1xf32>
    %168 = vector.extract_strided_slice %4 {offsets = [19, 0], sizes = [1, 16], strides = [1, 1]} : vector<128x16xf32> to vector<1x16xf32>
    %169 = vector.broadcast %167 : vector<8x1xf32> to vector<8x16xf32>
    %170 = vector.broadcast %168 : vector<1x16xf32> to vector<8x16xf32>
    %171 = arith.subf %169, %170 : vector<8x16xf32>
    %172 = math.absf %171 : vector<8x16xf32>
    %173 = arith.addf %166, %172 : vector<8x16xf32>
    %174 = vector.extract_strided_slice %3 {offsets = [0, 20], sizes = [8, 1], strides = [1, 1]} : vector<8x128xf32> to vector<8x1xf32>
    %175 = vector.extract_strided_slice %4 {offsets = [20, 0], sizes = [1, 16], strides = [1, 1]} : vector<128x16xf32> to vector<1x16xf32>
    %176 = vector.broadcast %174 : vector<8x1xf32> to vector<8x16xf32>
    %177 = vector.broadcast %175 : vector<1x16xf32> to vector<8x16xf32>
    %178 = arith.subf %176, %177 : vector<8x16xf32>
    %179 = math.absf %178 : vector<8x16xf32>
    %180 = arith.addf %173, %179 : vector<8x16xf32>
    %181 = vector.extract_strided_slice %3 {offsets = [0, 21], sizes = [8, 1], strides = [1, 1]} : vector<8x128xf32> to vector<8x1xf32>
    %182 = vector.extract_strided_slice %4 {offsets = [21, 0], sizes = [1, 16], strides = [1, 1]} : vector<128x16xf32> to vector<1x16xf32>
    %183 = vector.broadcast %181 : vector<8x1xf32> to vector<8x16xf32>
    %184 = vector.broadcast %182 : vector<1x16xf32> to vector<8x16xf32>
    %185 = arith.subf %183, %184 : vector<8x16xf32>
    %186 = math.absf %185 : vector<8x16xf32>
    %187 = arith.addf %180, %186 : vector<8x16xf32>
    %188 = vector.extract_strided_slice %3 {offsets = [0, 22], sizes = [8, 1], strides = [1, 1]} : vector<8x128xf32> to vector<8x1xf32>
    %189 = vector.extract_strided_slice %4 {offsets = [22, 0], sizes = [1, 16], strides = [1, 1]} : vector<128x16xf32> to vector<1x16xf32>
    %190 = vector.broadcast %188 : vector<8x1xf32> to vector<8x16xf32>
    %191 = vector.broadcast %189 : vector<1x16xf32> to vector<8x16xf32>
    %192 = arith.subf %190, %191 : vector<8x16xf32>
    %193 = math.absf %192 : vector<8x16xf32>
    %194 = arith.addf %187, %193 : vector<8x16xf32>
    %195 = vector.extract_strided_slice %3 {offsets = [0, 23], sizes = [8, 1], strides = [1, 1]} : vector<8x128xf32> to vector<8x1xf32>
    %196 = vector.extract_strided_slice %4 {offsets = [23, 0], sizes = [1, 16], strides = [1, 1]} : vector<128x16xf32> to vector<1x16xf32>
    %197 = vector.broadcast %195 : vector<8x1xf32> to vector<8x16xf32>
    %198 = vector.broadcast %196 : vector<1x16xf32> to vector<8x16xf32>
    %199 = arith.subf %197, %198 : vector<8x16xf32>
    %200 = math.absf %199 : vector<8x16xf32>
    %201 = arith.addf %194, %200 : vector<8x16xf32>
    %cst_18 = arith.constant 0.000000e+00 : f32
    %202 = vector.broadcast %cst_18 : f32 to vector<8x16xf32>
    %203 = arith.subf %202, %201 : vector<8x16xf32>
    %204 = math.exp %203 : vector<8x16xf32>
    %cst_19 = arith.constant 0.000000e+00 : f32
    %205 = vector.shape_cast %10 : vector<1x16xi1> to vector<1x16xi1>
    %206 = vector.broadcast %205 : vector<1x16xi1> to vector<8x16xi1>
    %207 = vector.broadcast %cst_19 : f32 to vector<8x16xf32>
    %208 = arith.select %206, %204, %207 : vector<8x16xi1>, vector<8x16xf32>
    %c2 = arith.constant 2 : index
    %c0_20 = arith.constant 0 : index
    %c0_21 = arith.constant 0 : index
    %209 = vector.load %arg5[%c2, %c0_20, %c0_21] : memref<16x8x16xf32, #tpu.memory_space<vmem>>, vector<1x8x16xf32>
    %210 = vector.shape_cast %209 : vector<1x8x16xf32> to vector<8x16xf32>
    %211 = arith.addf %210, %208 : vector<8x16xf32>
    %c2_22 = arith.constant 2 : index
    %c0_23 = arith.constant 0 : index
    %c0_24 = arith.constant 0 : index
    %212 = vector.load %arg5[%c2_22, %c0_23, %c0_24] : memref<16x8x16xf32, #tpu.memory_space<vmem>>, vector<1x8x16xf32>
    %213 = vector.shape_cast %212 : vector<1x8x16xf32> to vector<8x16xf32>
    %214 = vector.shape_cast %211 : vector<8x16xf32> to vector<1x8x16xf32>
    tpu.vector_store %arg5[%c2_22, %c0_23, %c0_24], %214 {strides = array<i32>} : memref<16x8x16xf32, #tpu.memory_space<vmem>>, vector<1x8x16xf32>,
    %215 = vector.extract_strided_slice %3 {offsets = [0, 24], sizes = [8, 1], strides = [1, 1]} : vector<8x128xf32> to vector<8x1xf32>
    %216 = vector.extract_strided_slice %4 {offsets = [24, 0], sizes = [1, 16], strides = [1, 1]} : vector<128x16xf32> to vector<1x16xf32>
    %217 = vector.broadcast %215 : vector<8x1xf32> to vector<8x16xf32>
    %218 = vector.broadcast %216 : vector<1x16xf32> to vector<8x16xf32>
    %219 = arith.subf %217, %218 : vector<8x16xf32>
    %220 = math.absf %219 : vector<8x16xf32>
    %221 = vector.extract_strided_slice %3 {offsets = [0, 25], sizes = [8, 1], strides = [1, 1]} : vector<8x128xf32> to vector<8x1xf32>
    %222 = vector.extract_strided_slice %4 {offsets = [25, 0], sizes = [1, 16], strides = [1, 1]} : vector<128x16xf32> to vector<1x16xf32>
    %223 = vector.broadcast %221 : vector<8x1xf32> to vector<8x16xf32>
    %224 = vector.broadcast %222 : vector<1x16xf32> to vector<8x16xf32>
    %225 = arith.subf %223, %224 : vector<8x16xf32>
    %226 = math.absf %225 : vector<8x16xf32>
    %227 = arith.addf %220, %226 : vector<8x16xf32>
    %228 = vector.extract_strided_slice %3 {offsets = [0, 26], sizes = [8, 1], strides = [1, 1]} : vector<8x128xf32> to vector<8x1xf32>
    %229 = vector.extract_strided_slice %4 {offsets = [26, 0], sizes = [1, 16], strides = [1, 1]} : vector<128x16xf32> to vector<1x16xf32>
    %230 = vector.broadcast %228 : vector<8x1xf32> to vector<8x16xf32>
    %231 = vector.broadcast %229 : vector<1x16xf32> to vector<8x16xf32>
    %232 = arith.subf %230, %231 : vector<8x16xf32>
    %233 = math.absf %232 : vector<8x16xf32>
    %234 = arith.addf %227, %233 : vector<8x16xf32>
    %235 = vector.extract_strided_slice %3 {offsets = [0, 27], sizes = [8, 1], strides = [1, 1]} : vector<8x128xf32> to vector<8x1xf32>
    %236 = vector.extract_strided_slice %4 {offsets = [27, 0], sizes = [1, 16], strides = [1, 1]} : vector<128x16xf32> to vector<1x16xf32>
    %237 = vector.broadcast %235 : vector<8x1xf32> to vector<8x16xf32>
    %238 = vector.broadcast %236 : vector<1x16xf32> to vector<8x16xf32>
    %239 = arith.subf %237, %238 : vector<8x16xf32>
    %240 = math.absf %239 : vector<8x16xf32>
    %241 = arith.addf %234, %240 : vector<8x16xf32>
    %242 = vector.extract_strided_slice %3 {offsets = [0, 28], sizes = [8, 1], strides = [1, 1]} : vector<8x128xf32> to vector<8x1xf32>
    %243 = vector.extract_strided_slice %4 {offsets = [28, 0], sizes = [1, 16], strides = [1, 1]} : vector<128x16xf32> to vector<1x16xf32>
    %244 = vector.broadcast %242 : vector<8x1xf32> to vector<8x16xf32>
    %245 = vector.broadcast %243 : vector<1x16xf32> to vector<8x16xf32>
    %246 = arith.subf %244, %245 : vector<8x16xf32>
    %247 = math.absf %246 : vector<8x16xf32>
    %248 = arith.addf %241, %247 : vector<8x16xf32>
    %249 = vector.extract_strided_slice %3 {offsets = [0, 29], sizes = [8, 1], strides = [1, 1]} : vector<8x128xf32> to vector<8x1xf32>
    %250 = vector.extract_strided_slice %4 {offsets = [29, 0], sizes = [1, 16], strides = [1, 1]} : vector<128x16xf32> to vector<1x16xf32>
    %251 = vector.broadcast %249 : vector<8x1xf32> to vector<8x16xf32>
    %252 = vector.broadcast %250 : vector<1x16xf32> to vector<8x16xf32>
    %253 = arith.subf %251, %252 : vector<8x16xf32>
    %254 = math.absf %253 : vector<8x16xf32>
    %255 = arith.addf %248, %254 : vector<8x16xf32>
    %256 = vector.extract_strided_slice %3 {offsets = [0, 30], sizes = [8, 1], strides = [1, 1]} : vector<8x128xf32> to vector<8x1xf32>
    %257 = vector.extract_strided_slice %4 {offsets = [30, 0], sizes = [1, 16], strides = [1, 1]} : vector<128x16xf32> to vector<1x16xf32>
    %258 = vector.broadcast %256 : vector<8x1xf32> to vector<8x16xf32>
    %259 = vector.broadcast %257 : vector<1x16xf32> to vector<8x16xf32>
    %260 = arith.subf %258, %259 : vector<8x16xf32>
    %261 = math.absf %260 : vector<8x16xf32>
    %262 = arith.addf %255, %261 : vector<8x16xf32>
    %263 = vector.extract_strided_slice %3 {offsets = [0, 31], sizes = [8, 1], strides = [1, 1]} : vector<8x128xf32> to vector<8x1xf32>
    %264 = vector.extract_strided_slice %4 {offsets = [31, 0], sizes = [1, 16], strides = [1, 1]} : vector<128x16xf32> to vector<1x16xf32>
    %265 = vector.broadcast %263 : vector<8x1xf32> to vector<8x16xf32>
    %266 = vector.broadcast %264 : vector<1x16xf32> to vector<8x16xf32>
    %267 = arith.subf %265, %266 : vector<8x16xf32>
    %268 = math.absf %267 : vector<8x16xf32>
    %269 = arith.addf %262, %268 : vector<8x16xf32>
    %cst_25 = arith.constant 0.000000e+00 : f32
    %270 = vector.broadcast %cst_25 : f32 to vector<8x16xf32>
    %271 = arith.subf %270, %269 : vector<8x16xf32>
    %272 = math.exp %271 : vector<8x16xf32>
    %cst_26 = arith.constant 0.000000e+00 : f32
    %273 = vector.shape_cast %10 : vector<1x16xi1> to vector<1x16xi1>
    %274 = vector.broadcast %273 : vector<1x16xi1> to vector<8x16xi1>
    %275 = vector.broadcast %cst_26 : f32 to vector<8x16xf32>
    %276 = arith.select %274, %272, %275 : vector<8x16xi1>, vector<8x16xf32>
    %c3 = arith.constant 3 : index
    %c0_27 = arith.constant 0 : index
    %c0_28 = arith.constant 0 : index
    %277 = vector.load %arg5[%c3, %c0_27, %c0_28] : memref<16x8x16xf32, #tpu.memory_space<vmem>>, vector<1x8x16xf32>
    %278 = vector.shape_cast %277 : vector<1x8x16xf32> to vector<8x16xf32>
    %279 = arith.addf %278, %276 : vector<8x16xf32>
    %c3_29 = arith.constant 3 : index
    %c0_30 = arith.constant 0 : index
    %c0_31 = arith.constant 0 : index
    %280 = vector.load %arg5[%c3_29, %c0_30, %c0_31] : memref<16x8x16xf32, #tpu.memory_space<vmem>>, vector<1x8x16xf32>
    %281 = vector.shape_cast %280 : vector<1x8x16xf32> to vector<8x16xf32>
    %282 = vector.shape_cast %279 : vector<8x16xf32> to vector<1x8x16xf32>
    tpu.vector_store %arg5[%c3_29, %c0_30, %c0_31], %282 {strides = array<i32>} : memref<16x8x16xf32, #tpu.memory_space<vmem>>, vector<1x8x16xf32>,
    %283 = vector.extract_strided_slice %3 {offsets = [0, 32], sizes = [8, 1], strides = [1, 1]} : vector<8x128xf32> to vector<8x1xf32>
    %284 = vector.extract_strided_slice %4 {offsets = [32, 0], sizes = [1, 16], strides = [1, 1]} : vector<128x16xf32> to vector<1x16xf32>
    %285 = vector.broadcast %283 : vector<8x1xf32> to vector<8x16xf32>
    %286 = vector.broadcast %284 : vector<1x16xf32> to vector<8x16xf32>
    %287 = arith.subf %285, %286 : vector<8x16xf32>
    %288 = math.absf %287 : vector<8x16xf32>
    %289 = vector.extract_strided_slice %3 {offsets = [0, 33], sizes = [8, 1], strides = [1, 1]} : vector<8x128xf32> to vector<8x1xf32>
    %290 = vector.extract_strided_slice %4 {offsets = [33, 0], sizes = [1, 16], strides = [1, 1]} : vector<128x16xf32> to vector<1x16xf32>
    %291 = vector.broadcast %289 : vector<8x1xf32> to vector<8x16xf32>
    %292 = vector.broadcast %290 : vector<1x16xf32> to vector<8x16xf32>
    %293 = arith.subf %291, %292 : vector<8x16xf32>
    %294 = math.absf %293 : vector<8x16xf32>
    %295 = arith.addf %288, %294 : vector<8x16xf32>
    %296 = vector.extract_strided_slice %3 {offsets = [0, 34], sizes = [8, 1], strides = [1, 1]} : vector<8x128xf32> to vector<8x1xf32>
    %297 = vector.extract_strided_slice %4 {offsets = [34, 0], sizes = [1, 16], strides = [1, 1]} : vector<128x16xf32> to vector<1x16xf32>
    %298 = vector.broadcast %296 : vector<8x1xf32> to vector<8x16xf32>
    %299 = vector.broadcast %297 : vector<1x16xf32> to vector<8x16xf32>
    %300 = arith.subf %298, %299 : vector<8x16xf32>
    %301 = math.absf %300 : vector<8x16xf32>
    %302 = arith.addf %295, %301 : vector<8x16xf32>
    %303 = vector.extract_strided_slice %3 {offsets = [0, 35], sizes = [8, 1], strides = [1, 1]} : vector<8x128xf32> to vector<8x1xf32>
    %304 = vector.extract_strided_slice %4 {offsets = [35, 0], sizes = [1, 16], strides = [1, 1]} : vector<128x16xf32> to vector<1x16xf32>
    %305 = vector.broadcast %303 : vector<8x1xf32> to vector<8x16xf32>
    %306 = vector.broadcast %304 : vector<1x16xf32> to vector<8x16xf32>
    %307 = arith.subf %305, %306 : vector<8x16xf32>
    %308 = math.absf %307 : vector<8x16xf32>
    %309 = arith.addf %302, %308 : vector<8x16xf32>
    %310 = vector.extract_strided_slice %3 {offsets = [0, 36], sizes = [8, 1], strides = [1, 1]} : vector<8x128xf32> to vector<8x1xf32>
    %311 = vector.extract_strided_slice %4 {offsets = [36, 0], sizes = [1, 16], strides = [1, 1]} : vector<128x16xf32> to vector<1x16xf32>
    %312 = vector.broadcast %310 : vector<8x1xf32> to vector<8x16xf32>
    %313 = vector.broadcast %311 : vector<1x16xf32> to vector<8x16xf32>
    %314 = arith.subf %312, %313 : vector<8x16xf32>
    %315 = math.absf %314 : vector<8x16xf32>
    %316 = arith.addf %309, %315 : vector<8x16xf32>
    %317 = vector.extract_strided_slice %3 {offsets = [0, 37], sizes = [8, 1], strides = [1, 1]} : vector<8x128xf32> to vector<8x1xf32>
    %318 = vector.extract_strided_slice %4 {offsets = [37, 0], sizes = [1, 16], strides = [1, 1]} : vector<128x16xf32> to vector<1x16xf32>
    %319 = vector.broadcast %317 : vector<8x1xf32> to vector<8x16xf32>
    %320 = vector.broadcast %318 : vector<1x16xf32> to vector<8x16xf32>
    %321 = arith.subf %319, %320 : vector<8x16xf32>
    %322 = math.absf %321 : vector<8x16xf32>
    %323 = arith.addf %316, %322 : vector<8x16xf32>
    %324 = vector.extract_strided_slice %3 {offsets = [0, 38], sizes = [8, 1], strides = [1, 1]} : vector<8x128xf32> to vector<8x1xf32>
    %325 = vector.extract_strided_slice %4 {offsets = [38, 0], sizes = [1, 16], strides = [1, 1]} : vector<128x16xf32> to vector<1x16xf32>
    %326 = vector.broadcast %324 : vector<8x1xf32> to vector<8x16xf32>
    %327 = vector.broadcast %325 : vector<1x16xf32> to vector<8x16xf32>
    %328 = arith.subf %326, %327 : vector<8x16xf32>
    %329 = math.absf %328 : vector<8x16xf32>
    %330 = arith.addf %323, %329 : vector<8x16xf32>
    %331 = vector.extract_strided_slice %3 {offsets = [0, 39], sizes = [8, 1], strides = [1, 1]} : vector<8x128xf32> to vector<8x1xf32>
    %332 = vector.extract_strided_slice %4 {offsets = [39, 0], sizes = [1, 16], strides = [1, 1]} : vector<128x16xf32> to vector<1x16xf32>
    %333 = vector.broadcast %331 : vector<8x1xf32> to vector<8x16xf32>
    %334 = vector.broadcast %332 : vector<1x16xf32> to vector<8x16xf32>
    %335 = arith.subf %333, %334 : vector<8x16xf32>
    %336 = math.absf %335 : vector<8x16xf32>
    %337 = arith.addf %330, %336 : vector<8x16xf32>
    %cst_32 = arith.constant 0.000000e+00 : f32
    %338 = vector.broadcast %cst_32 : f32 to vector<8x16xf32>
    %339 = arith.subf %338, %337 : vector<8x16xf32>
    %340 = math.exp %339 : vector<8x16xf32>
    %cst_33 = arith.constant 0.000000e+00 : f32
    %341 = vector.shape_cast %10 : vector<1x16xi1> to vector<1x16xi1>
    %342 = vector.broadcast %341 : vector<1x16xi1> to vector<8x16xi1>
    %343 = vector.broadcast %cst_33 : f32 to vector<8x16xf32>
    %344 = arith.select %342, %340, %343 : vector<8x16xi1>, vector<8x16xf32>
    %c4 = arith.constant 4 : index
    %c0_34 = arith.constant 0 : index
    %c0_35 = arith.constant 0 : index
    %345 = vector.load %arg5[%c4, %c0_34, %c0_35] : memref<16x8x16xf32, #tpu.memory_space<vmem>>, vector<1x8x16xf32>
    %346 = vector.shape_cast %345 : vector<1x8x16xf32> to vector<8x16xf32>
    %347 = arith.addf %346, %344 : vector<8x16xf32>
    %c4_36 = arith.constant 4 : index
    %c0_37 = arith.constant 0 : index
    %c0_38 = arith.constant 0 : index
    %348 = vector.load %arg5[%c4_36, %c0_37, %c0_38] : memref<16x8x16xf32, #tpu.memory_space<vmem>>, vector<1x8x16xf32>
    %349 = vector.shape_cast %348 : vector<1x8x16xf32> to vector<8x16xf32>
    %350 = vector.shape_cast %347 : vector<8x16xf32> to vector<1x8x16xf32>
    tpu.vector_store %arg5[%c4_36, %c0_37, %c0_38], %350 {strides = array<i32>} : memref<16x8x16xf32, #tpu.memory_space<vmem>>, vector<1x8x16xf32>,
    %351 = vector.extract_strided_slice %3 {offsets = [0, 40], sizes = [8, 1], strides = [1, 1]} : vector<8x128xf32> to vector<8x1xf32>
    %352 = vector.extract_strided_slice %4 {offsets = [40, 0], sizes = [1, 16], strides = [1, 1]} : vector<128x16xf32> to vector<1x16xf32>
    %353 = vector.broadcast %351 : vector<8x1xf32> to vector<8x16xf32>
    %354 = vector.broadcast %352 : vector<1x16xf32> to vector<8x16xf32>
    %355 = arith.subf %353, %354 : vector<8x16xf32>
    %356 = math.absf %355 : vector<8x16xf32>
    %357 = vector.extract_strided_slice %3 {offsets = [0, 41], sizes = [8, 1], strides = [1, 1]} : vector<8x128xf32> to vector<8x1xf32>
    %358 = vector.extract_strided_slice %4 {offsets = [41, 0], sizes = [1, 16], strides = [1, 1]} : vector<128x16xf32> to vector<1x16xf32>
    %359 = vector.broadcast %357 : vector<8x1xf32> to vector<8x16xf32>
    %360 = vector.broadcast %358 : vector<1x16xf32> to vector<8x16xf32>
    %361 = arith.subf %359, %360 : vector<8x16xf32>
    %362 = math.absf %361 : vector<8x16xf32>
    %363 = arith.addf %356, %362 : vector<8x16xf32>
    %364 = vector.extract_strided_slice %3 {offsets = [0, 42], sizes = [8, 1], strides = [1, 1]} : vector<8x128xf32> to vector<8x1xf32>
    %365 = vector.extract_strided_slice %4 {offsets = [42, 0], sizes = [1, 16], strides = [1, 1]} : vector<128x16xf32> to vector<1x16xf32>
    %366 = vector.broadcast %364 : vector<8x1xf32> to vector<8x16xf32>
    %367 = vector.broadcast %365 : vector<1x16xf32> to vector<8x16xf32>
    %368 = arith.subf %366, %367 : vector<8x16xf32>
    %369 = math.absf %368 : vector<8x16xf32>
    %370 = arith.addf %363, %369 : vector<8x16xf32>
    %371 = vector.extract_strided_slice %3 {offsets = [0, 43], sizes = [8, 1], strides = [1, 1]} : vector<8x128xf32> to vector<8x1xf32>
    %372 = vector.extract_strided_slice %4 {offsets = [43, 0], sizes = [1, 16], strides = [1, 1]} : vector<128x16xf32> to vector<1x16xf32>
    %373 = vector.broadcast %371 : vector<8x1xf32> to vector<8x16xf32>
    %374 = vector.broadcast %372 : vector<1x16xf32> to vector<8x16xf32>
    %375 = arith.subf %373, %374 : vector<8x16xf32>
    %376 = math.absf %375 : vector<8x16xf32>
    %377 = arith.addf %370, %376 : vector<8x16xf32>
    %378 = vector.extract_strided_slice %3 {offsets = [0, 44], sizes = [8, 1], strides = [1, 1]} : vector<8x128xf32> to vector<8x1xf32>
    %379 = vector.extract_strided_slice %4 {offsets = [44, 0], sizes = [1, 16], strides = [1, 1]} : vector<128x16xf32> to vector<1x16xf32>
    %380 = vector.broadcast %378 : vector<8x1xf32> to vector<8x16xf32>
    %381 = vector.broadcast %379 : vector<1x16xf32> to vector<8x16xf32>
    %382 = arith.subf %380, %381 : vector<8x16xf32>
    %383 = math.absf %382 : vector<8x16xf32>
    %384 = arith.addf %377, %383 : vector<8x16xf32>
    %385 = vector.extract_strided_slice %3 {offsets = [0, 45], sizes = [8, 1], strides = [1, 1]} : vector<8x128xf32> to vector<8x1xf32>
    %386 = vector.extract_strided_slice %4 {offsets = [45, 0], sizes = [1, 16], strides = [1, 1]} : vector<128x16xf32> to vector<1x16xf32>
    %387 = vector.broadcast %385 : vector<8x1xf32> to vector<8x16xf32>
    %388 = vector.broadcast %386 : vector<1x16xf32> to vector<8x16xf32>
    %389 = arith.subf %387, %388 : vector<8x16xf32>
    %390 = math.absf %389 : vector<8x16xf32>
    %391 = arith.addf %384, %390 : vector<8x16xf32>
    %392 = vector.extract_strided_slice %3 {offsets = [0, 46], sizes = [8, 1], strides = [1, 1]} : vector<8x128xf32> to vector<8x1xf32>
    %393 = vector.extract_strided_slice %4 {offsets = [46, 0], sizes = [1, 16], strides = [1, 1]} : vector<128x16xf32> to vector<1x16xf32>
    %394 = vector.broadcast %392 : vector<8x1xf32> to vector<8x16xf32>
    %395 = vector.broadcast %393 : vector<1x16xf32> to vector<8x16xf32>
    %396 = arith.subf %394, %395 : vector<8x16xf32>
    %397 = math.absf %396 : vector<8x16xf32>
    %398 = arith.addf %391, %397 : vector<8x16xf32>
    %399 = vector.extract_strided_slice %3 {offsets = [0, 47], sizes = [8, 1], strides = [1, 1]} : vector<8x128xf32> to vector<8x1xf32>
    %400 = vector.extract_strided_slice %4 {offsets = [47, 0], sizes = [1, 16], strides = [1, 1]} : vector<128x16xf32> to vector<1x16xf32>
    %401 = vector.broadcast %399 : vector<8x1xf32> to vector<8x16xf32>
    %402 = vector.broadcast %400 : vector<1x16xf32> to vector<8x16xf32>
    %403 = arith.subf %401, %402 : vector<8x16xf32>
    %404 = math.absf %403 : vector<8x16xf32>
    %405 = arith.addf %398, %404 : vector<8x16xf32>
    %cst_39 = arith.constant 0.000000e+00 : f32
    %406 = vector.broadcast %cst_39 : f32 to vector<8x16xf32>
    %407 = arith.subf %406, %405 : vector<8x16xf32>
    %408 = math.exp %407 : vector<8x16xf32>
    %cst_40 = arith.constant 0.000000e+00 : f32
    %409 = vector.shape_cast %10 : vector<1x16xi1> to vector<1x16xi1>
    %410 = vector.broadcast %409 : vector<1x16xi1> to vector<8x16xi1>
    %411 = vector.broadcast %cst_40 : f32 to vector<8x16xf32>
    %412 = arith.select %410, %408, %411 : vector<8x16xi1>, vector<8x16xf32>
    %c5 = arith.constant 5 : index
    %c0_41 = arith.constant 0 : index
    %c0_42 = arith.constant 0 : index
    %413 = vector.load %arg5[%c5, %c0_41, %c0_42] : memref<16x8x16xf32, #tpu.memory_space<vmem>>, vector<1x8x16xf32>
    %414 = vector.shape_cast %413 : vector<1x8x16xf32> to vector<8x16xf32>
    %415 = arith.addf %414, %412 : vector<8x16xf32>
    %c5_43 = arith.constant 5 : index
    %c0_44 = arith.constant 0 : index
    %c0_45 = arith.constant 0 : index
    %416 = vector.load %arg5[%c5_43, %c0_44, %c0_45] : memref<16x8x16xf32, #tpu.memory_space<vmem>>, vector<1x8x16xf32>
    %417 = vector.shape_cast %416 : vector<1x8x16xf32> to vector<8x16xf32>
    %418 = vector.shape_cast %415 : vector<8x16xf32> to vector<1x8x16xf32>
    tpu.vector_store %arg5[%c5_43, %c0_44, %c0_45], %418 {strides = array<i32>} : memref<16x8x16xf32, #tpu.memory_space<vmem>>, vector<1x8x16xf32>,
    %419 = vector.extract_strided_slice %3 {offsets = [0, 48], sizes = [8, 1], strides = [1, 1]} : vector<8x128xf32> to vector<8x1xf32>
    %420 = vector.extract_strided_slice %4 {offsets = [48, 0], sizes = [1, 16], strides = [1, 1]} : vector<128x16xf32> to vector<1x16xf32>
    %421 = vector.broadcast %419 : vector<8x1xf32> to vector<8x16xf32>
    %422 = vector.broadcast %420 : vector<1x16xf32> to vector<8x16xf32>
    %423 = arith.subf %421, %422 : vector<8x16xf32>
    %424 = math.absf %423 : vector<8x16xf32>
    %425 = vector.extract_strided_slice %3 {offsets = [0, 49], sizes = [8, 1], strides = [1, 1]} : vector<8x128xf32> to vector<8x1xf32>
    %426 = vector.extract_strided_slice %4 {offsets = [49, 0], sizes = [1, 16], strides = [1, 1]} : vector<128x16xf32> to vector<1x16xf32>
    %427 = vector.broadcast %425 : vector<8x1xf32> to vector<8x16xf32>
    %428 = vector.broadcast %426 : vector<1x16xf32> to vector<8x16xf32>
    %429 = arith.subf %427, %428 : vector<8x16xf32>
    %430 = math.absf %429 : vector<8x16xf32>
    %431 = arith.addf %424, %430 : vector<8x16xf32>
    %432 = vector.extract_strided_slice %3 {offsets = [0, 50], sizes = [8, 1], strides = [1, 1]} : vector<8x128xf32> to vector<8x1xf32>
    %433 = vector.extract_strided_slice %4 {offsets = [50, 0], sizes = [1, 16], strides = [1, 1]} : vector<128x16xf32> to vector<1x16xf32>
    %434 = vector.broadcast %432 : vector<8x1xf32> to vector<8x16xf32>
    %435 = vector.broadcast %433 : vector<1x16xf32> to vector<8x16xf32>
    %436 = arith.subf %434, %435 : vector<8x16xf32>
    %437 = math.absf %436 : vector<8x16xf32>
    %438 = arith.addf %431, %437 : vector<8x16xf32>
    %439 = vector.extract_strided_slice %3 {offsets = [0, 51], sizes = [8, 1], strides = [1, 1]} : vector<8x128xf32> to vector<8x1xf32>
    %440 = vector.extract_strided_slice %4 {offsets = [51, 0], sizes = [1, 16], strides = [1, 1]} : vector<128x16xf32> to vector<1x16xf32>
    %441 = vector.broadcast %439 : vector<8x1xf32> to vector<8x16xf32>
    %442 = vector.broadcast %440 : vector<1x16xf32> to vector<8x16xf32>
    %443 = arith.subf %441, %442 : vector<8x16xf32>
    %444 = math.absf %443 : vector<8x16xf32>
    %445 = arith.addf %438, %444 : vector<8x16xf32>
    %446 = vector.extract_strided_slice %3 {offsets = [0, 52], sizes = [8, 1], strides = [1, 1]} : vector<8x128xf32> to vector<8x1xf32>
    %447 = vector.extract_strided_slice %4 {offsets = [52, 0], sizes = [1, 16], strides = [1, 1]} : vector<128x16xf32> to vector<1x16xf32>
    %448 = vector.broadcast %446 : vector<8x1xf32> to vector<8x16xf32>
    %449 = vector.broadcast %447 : vector<1x16xf32> to vector<8x16xf32>
    %450 = arith.subf %448, %449 : vector<8x16xf32>
    %451 = math.absf %450 : vector<8x16xf32>
    %452 = arith.addf %445, %451 : vector<8x16xf32>
    %453 = vector.extract_strided_slice %3 {offsets = [0, 53], sizes = [8, 1], strides = [1, 1]} : vector<8x128xf32> to vector<8x1xf32>
    %454 = vector.extract_strided_slice %4 {offsets = [53, 0], sizes = [1, 16], strides = [1, 1]} : vector<128x16xf32> to vector<1x16xf32>
    %455 = vector.broadcast %453 : vector<8x1xf32> to vector<8x16xf32>
    %456 = vector.broadcast %454 : vector<1x16xf32> to vector<8x16xf32>
    %457 = arith.subf %455, %456 : vector<8x16xf32>
    %458 = math.absf %457 : vector<8x16xf32>
    %459 = arith.addf %452, %458 : vector<8x16xf32>
    %460 = vector.extract_strided_slice %3 {offsets = [0, 54], sizes = [8, 1], strides = [1, 1]} : vector<8x128xf32> to vector<8x1xf32>
    %461 = vector.extract_strided_slice %4 {offsets = [54, 0], sizes = [1, 16], strides = [1, 1]} : vector<128x16xf32> to vector<1x16xf32>
    %462 = vector.broadcast %460 : vector<8x1xf32> to vector<8x16xf32>
    %463 = vector.broadcast %461 : vector<1x16xf32> to vector<8x16xf32>
    %464 = arith.subf %462, %463 : vector<8x16xf32>
    %465 = math.absf %464 : vector<8x16xf32>
    %466 = arith.addf %459, %465 : vector<8x16xf32>
    %467 = vector.extract_strided_slice %3 {offsets = [0, 55], sizes = [8, 1], strides = [1, 1]} : vector<8x128xf32> to vector<8x1xf32>
    %468 = vector.extract_strided_slice %4 {offsets = [55, 0], sizes = [1, 16], strides = [1, 1]} : vector<128x16xf32> to vector<1x16xf32>
    %469 = vector.broadcast %467 : vector<8x1xf32> to vector<8x16xf32>
    %470 = vector.broadcast %468 : vector<1x16xf32> to vector<8x16xf32>
    %471 = arith.subf %469, %470 : vector<8x16xf32>
    %472 = math.absf %471 : vector<8x16xf32>
    %473 = arith.addf %466, %472 : vector<8x16xf32>
    %cst_46 = arith.constant 0.000000e+00 : f32
    %474 = vector.broadcast %cst_46 : f32 to vector<8x16xf32>
    %475 = arith.subf %474, %473 : vector<8x16xf32>
    %476 = math.exp %475 : vector<8x16xf32>
    %cst_47 = arith.constant 0.000000e+00 : f32
    %477 = vector.shape_cast %10 : vector<1x16xi1> to vector<1x16xi1>
    %478 = vector.broadcast %477 : vector<1x16xi1> to vector<8x16xi1>
    %479 = vector.broadcast %cst_47 : f32 to vector<8x16xf32>
    %480 = arith.select %478, %476, %479 : vector<8x16xi1>, vector<8x16xf32>
    %c6 = arith.constant 6 : index
    %c0_48 = arith.constant 0 : index
    %c0_49 = arith.constant 0 : index
    %481 = vector.load %arg5[%c6, %c0_48, %c0_49] : memref<16x8x16xf32, #tpu.memory_space<vmem>>, vector<1x8x16xf32>
    %482 = vector.shape_cast %481 : vector<1x8x16xf32> to vector<8x16xf32>
    %483 = arith.addf %482, %480 : vector<8x16xf32>
    %c6_50 = arith.constant 6 : index
    %c0_51 = arith.constant 0 : index
    %c0_52 = arith.constant 0 : index
    %484 = vector.load %arg5[%c6_50, %c0_51, %c0_52] : memref<16x8x16xf32, #tpu.memory_space<vmem>>, vector<1x8x16xf32>
    %485 = vector.shape_cast %484 : vector<1x8x16xf32> to vector<8x16xf32>
    %486 = vector.shape_cast %483 : vector<8x16xf32> to vector<1x8x16xf32>
    tpu.vector_store %arg5[%c6_50, %c0_51, %c0_52], %486 {strides = array<i32>} : memref<16x8x16xf32, #tpu.memory_space<vmem>>, vector<1x8x16xf32>,
    %487 = vector.extract_strided_slice %3 {offsets = [0, 56], sizes = [8, 1], strides = [1, 1]} : vector<8x128xf32> to vector<8x1xf32>
    %488 = vector.extract_strided_slice %4 {offsets = [56, 0], sizes = [1, 16], strides = [1, 1]} : vector<128x16xf32> to vector<1x16xf32>
    %489 = vector.broadcast %487 : vector<8x1xf32> to vector<8x16xf32>
    %490 = vector.broadcast %488 : vector<1x16xf32> to vector<8x16xf32>
    %491 = arith.subf %489, %490 : vector<8x16xf32>
    %492 = math.absf %491 : vector<8x16xf32>
    %493 = vector.extract_strided_slice %3 {offsets = [0, 57], sizes = [8, 1], strides = [1, 1]} : vector<8x128xf32> to vector<8x1xf32>
    %494 = vector.extract_strided_slice %4 {offsets = [57, 0], sizes = [1, 16], strides = [1, 1]} : vector<128x16xf32> to vector<1x16xf32>
    %495 = vector.broadcast %493 : vector<8x1xf32> to vector<8x16xf32>
    %496 = vector.broadcast %494 : vector<1x16xf32> to vector<8x16xf32>
    %497 = arith.subf %495, %496 : vector<8x16xf32>
    %498 = math.absf %497 : vector<8x16xf32>
    %499 = arith.addf %492, %498 : vector<8x16xf32>
    %500 = vector.extract_strided_slice %3 {offsets = [0, 58], sizes = [8, 1], strides = [1, 1]} : vector<8x128xf32> to vector<8x1xf32>
    %501 = vector.extract_strided_slice %4 {offsets = [58, 0], sizes = [1, 16], strides = [1, 1]} : vector<128x16xf32> to vector<1x16xf32>
    %502 = vector.broadcast %500 : vector<8x1xf32> to vector<8x16xf32>
    %503 = vector.broadcast %501 : vector<1x16xf32> to vector<8x16xf32>
    %504 = arith.subf %502, %503 : vector<8x16xf32>
    %505 = math.absf %504 : vector<8x16xf32>
    %506 = arith.addf %499, %505 : vector<8x16xf32>
    %507 = vector.extract_strided_slice %3 {offsets = [0, 59], sizes = [8, 1], strides = [1, 1]} : vector<8x128xf32> to vector<8x1xf32>
    %508 = vector.extract_strided_slice %4 {offsets = [59, 0], sizes = [1, 16], strides = [1, 1]} : vector<128x16xf32> to vector<1x16xf32>
    %509 = vector.broadcast %507 : vector<8x1xf32> to vector<8x16xf32>
    %510 = vector.broadcast %508 : vector<1x16xf32> to vector<8x16xf32>
    %511 = arith.subf %509, %510 : vector<8x16xf32>
    %512 = math.absf %511 : vector<8x16xf32>
    %513 = arith.addf %506, %512 : vector<8x16xf32>
    %514 = vector.extract_strided_slice %3 {offsets = [0, 60], sizes = [8, 1], strides = [1, 1]} : vector<8x128xf32> to vector<8x1xf32>
    %515 = vector.extract_strided_slice %4 {offsets = [60, 0], sizes = [1, 16], strides = [1, 1]} : vector<128x16xf32> to vector<1x16xf32>
    %516 = vector.broadcast %514 : vector<8x1xf32> to vector<8x16xf32>
    %517 = vector.broadcast %515 : vector<1x16xf32> to vector<8x16xf32>
    %518 = arith.subf %516, %517 : vector<8x16xf32>
    %519 = math.absf %518 : vector<8x16xf32>
    %520 = arith.addf %513, %519 : vector<8x16xf32>
    %521 = vector.extract_strided_slice %3 {offsets = [0, 61], sizes = [8, 1], strides = [1, 1]} : vector<8x128xf32> to vector<8x1xf32>
    %522 = vector.extract_strided_slice %4 {offsets = [61, 0], sizes = [1, 16], strides = [1, 1]} : vector<128x16xf32> to vector<1x16xf32>
    %523 = vector.broadcast %521 : vector<8x1xf32> to vector<8x16xf32>
    %524 = vector.broadcast %522 : vector<1x16xf32> to vector<8x16xf32>
    %525 = arith.subf %523, %524 : vector<8x16xf32>
    %526 = math.absf %525 : vector<8x16xf32>
    %527 = arith.addf %520, %526 : vector<8x16xf32>
    %528 = vector.extract_strided_slice %3 {offsets = [0, 62], sizes = [8, 1], strides = [1, 1]} : vector<8x128xf32> to vector<8x1xf32>
    %529 = vector.extract_strided_slice %4 {offsets = [62, 0], sizes = [1, 16], strides = [1, 1]} : vector<128x16xf32> to vector<1x16xf32>
    %530 = vector.broadcast %528 : vector<8x1xf32> to vector<8x16xf32>
    %531 = vector.broadcast %529 : vector<1x16xf32> to vector<8x16xf32>
    %532 = arith.subf %530, %531 : vector<8x16xf32>
    %533 = math.absf %532 : vector<8x16xf32>
    %534 = arith.addf %527, %533 : vector<8x16xf32>
    %535 = vector.extract_strided_slice %3 {offsets = [0, 63], sizes = [8, 1], strides = [1, 1]} : vector<8x128xf32> to vector<8x1xf32>
    %536 = vector.extract_strided_slice %4 {offsets = [63, 0], sizes = [1, 16], strides = [1, 1]} : vector<128x16xf32> to vector<1x16xf32>
    %537 = vector.broadcast %535 : vector<8x1xf32> to vector<8x16xf32>
    %538 = vector.broadcast %536 : vector<1x16xf32> to vector<8x16xf32>
    %539 = arith.subf %537, %538 : vector<8x16xf32>
    %540 = math.absf %539 : vector<8x16xf32>
    %541 = arith.addf %534, %540 : vector<8x16xf32>
    %cst_53 = arith.constant 0.000000e+00 : f32
    %542 = vector.broadcast %cst_53 : f32 to vector<8x16xf32>
    %543 = arith.subf %542, %541 : vector<8x16xf32>
    %544 = math.exp %543 : vector<8x16xf32>
    %cst_54 = arith.constant 0.000000e+00 : f32
    %545 = vector.shape_cast %10 : vector<1x16xi1> to vector<1x16xi1>
    %546 = vector.broadcast %545 : vector<1x16xi1> to vector<8x16xi1>
    %547 = vector.broadcast %cst_54 : f32 to vector<8x16xf32>
    %548 = arith.select %546, %544, %547 : vector<8x16xi1>, vector<8x16xf32>
    %c7 = arith.constant 7 : index
    %c0_55 = arith.constant 0 : index
    %c0_56 = arith.constant 0 : index
    %549 = vector.load %arg5[%c7, %c0_55, %c0_56] : memref<16x8x16xf32, #tpu.memory_space<vmem>>, vector<1x8x16xf32>
    %550 = vector.shape_cast %549 : vector<1x8x16xf32> to vector<8x16xf32>
    %551 = arith.addf %550, %548 : vector<8x16xf32>
    %c7_57 = arith.constant 7 : index
    %c0_58 = arith.constant 0 : index
    %c0_59 = arith.constant 0 : index
    %552 = vector.load %arg5[%c7_57, %c0_58, %c0_59] : memref<16x8x16xf32, #tpu.memory_space<vmem>>, vector<1x8x16xf32>
    %553 = vector.shape_cast %552 : vector<1x8x16xf32> to vector<8x16xf32>
    %554 = vector.shape_cast %551 : vector<8x16xf32> to vector<1x8x16xf32>
    tpu.vector_store %arg5[%c7_57, %c0_58, %c0_59], %554 {strides = array<i32>} : memref<16x8x16xf32, #tpu.memory_space<vmem>>, vector<1x8x16xf32>,
    %555 = vector.extract_strided_slice %3 {offsets = [0, 64], sizes = [8, 1], strides = [1, 1]} : vector<8x128xf32> to vector<8x1xf32>
    %556 = vector.extract_strided_slice %4 {offsets = [64, 0], sizes = [1, 16], strides = [1, 1]} : vector<128x16xf32> to vector<1x16xf32>
    %557 = vector.broadcast %555 : vector<8x1xf32> to vector<8x16xf32>
    %558 = vector.broadcast %556 : vector<1x16xf32> to vector<8x16xf32>
    %559 = arith.subf %557, %558 : vector<8x16xf32>
    %560 = math.absf %559 : vector<8x16xf32>
    %561 = vector.extract_strided_slice %3 {offsets = [0, 65], sizes = [8, 1], strides = [1, 1]} : vector<8x128xf32> to vector<8x1xf32>
    %562 = vector.extract_strided_slice %4 {offsets = [65, 0], sizes = [1, 16], strides = [1, 1]} : vector<128x16xf32> to vector<1x16xf32>
    %563 = vector.broadcast %561 : vector<8x1xf32> to vector<8x16xf32>
    %564 = vector.broadcast %562 : vector<1x16xf32> to vector<8x16xf32>
    %565 = arith.subf %563, %564 : vector<8x16xf32>
    %566 = math.absf %565 : vector<8x16xf32>
    %567 = arith.addf %560, %566 : vector<8x16xf32>
    %568 = vector.extract_strided_slice %3 {offsets = [0, 66], sizes = [8, 1], strides = [1, 1]} : vector<8x128xf32> to vector<8x1xf32>
    %569 = vector.extract_strided_slice %4 {offsets = [66, 0], sizes = [1, 16], strides = [1, 1]} : vector<128x16xf32> to vector<1x16xf32>
    %570 = vector.broadcast %568 : vector<8x1xf32> to vector<8x16xf32>
    %571 = vector.broadcast %569 : vector<1x16xf32> to vector<8x16xf32>
    %572 = arith.subf %570, %571 : vector<8x16xf32>
    %573 = math.absf %572 : vector<8x16xf32>
    %574 = arith.addf %567, %573 : vector<8x16xf32>
    %575 = vector.extract_strided_slice %3 {offsets = [0, 67], sizes = [8, 1], strides = [1, 1]} : vector<8x128xf32> to vector<8x1xf32>
    %576 = vector.extract_strided_slice %4 {offsets = [67, 0], sizes = [1, 16], strides = [1, 1]} : vector<128x16xf32> to vector<1x16xf32>
    %577 = vector.broadcast %575 : vector<8x1xf32> to vector<8x16xf32>
    %578 = vector.broadcast %576 : vector<1x16xf32> to vector<8x16xf32>
    %579 = arith.subf %577, %578 : vector<8x16xf32>
    %580 = math.absf %579 : vector<8x16xf32>
    %581 = arith.addf %574, %580 : vector<8x16xf32>
    %582 = vector.extract_strided_slice %3 {offsets = [0, 68], sizes = [8, 1], strides = [1, 1]} : vector<8x128xf32> to vector<8x1xf32>
    %583 = vector.extract_strided_slice %4 {offsets = [68, 0], sizes = [1, 16], strides = [1, 1]} : vector<128x16xf32> to vector<1x16xf32>
    %584 = vector.broadcast %582 : vector<8x1xf32> to vector<8x16xf32>
    %585 = vector.broadcast %583 : vector<1x16xf32> to vector<8x16xf32>
    %586 = arith.subf %584, %585 : vector<8x16xf32>
    %587 = math.absf %586 : vector<8x16xf32>
    %588 = arith.addf %581, %587 : vector<8x16xf32>
    %589 = vector.extract_strided_slice %3 {offsets = [0, 69], sizes = [8, 1], strides = [1, 1]} : vector<8x128xf32> to vector<8x1xf32>
    %590 = vector.extract_strided_slice %4 {offsets = [69, 0], sizes = [1, 16], strides = [1, 1]} : vector<128x16xf32> to vector<1x16xf32>
    %591 = vector.broadcast %589 : vector<8x1xf32> to vector<8x16xf32>
    %592 = vector.broadcast %590 : vector<1x16xf32> to vector<8x16xf32>
    %593 = arith.subf %591, %592 : vector<8x16xf32>
    %594 = math.absf %593 : vector<8x16xf32>
    %595 = arith.addf %588, %594 : vector<8x16xf32>
    %596 = vector.extract_strided_slice %3 {offsets = [0, 70], sizes = [8, 1], strides = [1, 1]} : vector<8x128xf32> to vector<8x1xf32>
    %597 = vector.extract_strided_slice %4 {offsets = [70, 0], sizes = [1, 16], strides = [1, 1]} : vector<128x16xf32> to vector<1x16xf32>
    %598 = vector.broadcast %596 : vector<8x1xf32> to vector<8x16xf32>
    %599 = vector.broadcast %597 : vector<1x16xf32> to vector<8x16xf32>
    %600 = arith.subf %598, %599 : vector<8x16xf32>
    %601 = math.absf %600 : vector<8x16xf32>
    %602 = arith.addf %595, %601 : vector<8x16xf32>
    %603 = vector.extract_strided_slice %3 {offsets = [0, 71], sizes = [8, 1], strides = [1, 1]} : vector<8x128xf32> to vector<8x1xf32>
    %604 = vector.extract_strided_slice %4 {offsets = [71, 0], sizes = [1, 16], strides = [1, 1]} : vector<128x16xf32> to vector<1x16xf32>
    %605 = vector.broadcast %603 : vector<8x1xf32> to vector<8x16xf32>
    %606 = vector.broadcast %604 : vector<1x16xf32> to vector<8x16xf32>
    %607 = arith.subf %605, %606 : vector<8x16xf32>
    %608 = math.absf %607 : vector<8x16xf32>
    %609 = arith.addf %602, %608 : vector<8x16xf32>
    %cst_60 = arith.constant 0.000000e+00 : f32
    %610 = vector.broadcast %cst_60 : f32 to vector<8x16xf32>
    %611 = arith.subf %610, %609 : vector<8x16xf32>
    %612 = math.exp %611 : vector<8x16xf32>
    %cst_61 = arith.constant 0.000000e+00 : f32
    %613 = vector.shape_cast %10 : vector<1x16xi1> to vector<1x16xi1>
    %614 = vector.broadcast %613 : vector<1x16xi1> to vector<8x16xi1>
    %615 = vector.broadcast %cst_61 : f32 to vector<8x16xf32>
    %616 = arith.select %614, %612, %615 : vector<8x16xi1>, vector<8x16xf32>
    %c8 = arith.constant 8 : index
    %c0_62 = arith.constant 0 : index
    %c0_63 = arith.constant 0 : index
    %617 = vector.load %arg5[%c8, %c0_62, %c0_63] : memref<16x8x16xf32, #tpu.memory_space<vmem>>, vector<1x8x16xf32>
    %618 = vector.shape_cast %617 : vector<1x8x16xf32> to vector<8x16xf32>
    %619 = arith.addf %618, %616 : vector<8x16xf32>
    %c8_64 = arith.constant 8 : index
    %c0_65 = arith.constant 0 : index
    %c0_66 = arith.constant 0 : index
    %620 = vector.load %arg5[%c8_64, %c0_65, %c0_66] : memref<16x8x16xf32, #tpu.memory_space<vmem>>, vector<1x8x16xf32>
    %621 = vector.shape_cast %620 : vector<1x8x16xf32> to vector<8x16xf32>
    %622 = vector.shape_cast %619 : vector<8x16xf32> to vector<1x8x16xf32>
    tpu.vector_store %arg5[%c8_64, %c0_65, %c0_66], %622 {strides = array<i32>} : memref<16x8x16xf32, #tpu.memory_space<vmem>>, vector<1x8x16xf32>,
    %623 = vector.extract_strided_slice %3 {offsets = [0, 72], sizes = [8, 1], strides = [1, 1]} : vector<8x128xf32> to vector<8x1xf32>
    %624 = vector.extract_strided_slice %4 {offsets = [72, 0], sizes = [1, 16], strides = [1, 1]} : vector<128x16xf32> to vector<1x16xf32>
    %625 = vector.broadcast %623 : vector<8x1xf32> to vector<8x16xf32>
    %626 = vector.broadcast %624 : vector<1x16xf32> to vector<8x16xf32>
    %627 = arith.subf %625, %626 : vector<8x16xf32>
    %628 = math.absf %627 : vector<8x16xf32>
    %629 = vector.extract_strided_slice %3 {offsets = [0, 73], sizes = [8, 1], strides = [1, 1]} : vector<8x128xf32> to vector<8x1xf32>
    %630 = vector.extract_strided_slice %4 {offsets = [73, 0], sizes = [1, 16], strides = [1, 1]} : vector<128x16xf32> to vector<1x16xf32>
    %631 = vector.broadcast %629 : vector<8x1xf32> to vector<8x16xf32>
    %632 = vector.broadcast %630 : vector<1x16xf32> to vector<8x16xf32>
    %633 = arith.subf %631, %632 : vector<8x16xf32>
    %634 = math.absf %633 : vector<8x16xf32>
    %635 = arith.addf %628, %634 : vector<8x16xf32>
    %636 = vector.extract_strided_slice %3 {offsets = [0, 74], sizes = [8, 1], strides = [1, 1]} : vector<8x128xf32> to vector<8x1xf32>
    %637 = vector.extract_strided_slice %4 {offsets = [74, 0], sizes = [1, 16], strides = [1, 1]} : vector<128x16xf32> to vector<1x16xf32>
    %638 = vector.broadcast %636 : vector<8x1xf32> to vector<8x16xf32>
    %639 = vector.broadcast %637 : vector<1x16xf32> to vector<8x16xf32>
    %640 = arith.subf %638, %639 : vector<8x16xf32>
    %641 = math.absf %640 : vector<8x16xf32>
    %642 = arith.addf %635, %641 : vector<8x16xf32>
    %643 = vector.extract_strided_slice %3 {offsets = [0, 75], sizes = [8, 1], strides = [1, 1]} : vector<8x128xf32> to vector<8x1xf32>
    %644 = vector.extract_strided_slice %4 {offsets = [75, 0], sizes = [1, 16], strides = [1, 1]} : vector<128x16xf32> to vector<1x16xf32>
    %645 = vector.broadcast %643 : vector<8x1xf32> to vector<8x16xf32>
    %646 = vector.broadcast %644 : vector<1x16xf32> to vector<8x16xf32>
    %647 = arith.subf %645, %646 : vector<8x16xf32>
    %648 = math.absf %647 : vector<8x16xf32>
    %649 = arith.addf %642, %648 : vector<8x16xf32>
    %650 = vector.extract_strided_slice %3 {offsets = [0, 76], sizes = [8, 1], strides = [1, 1]} : vector<8x128xf32> to vector<8x1xf32>
    %651 = vector.extract_strided_slice %4 {offsets = [76, 0], sizes = [1, 16], strides = [1, 1]} : vector<128x16xf32> to vector<1x16xf32>
    %652 = vector.broadcast %650 : vector<8x1xf32> to vector<8x16xf32>
    %653 = vector.broadcast %651 : vector<1x16xf32> to vector<8x16xf32>
    %654 = arith.subf %652, %653 : vector<8x16xf32>
    %655 = math.absf %654 : vector<8x16xf32>
    %656 = arith.addf %649, %655 : vector<8x16xf32>
    %657 = vector.extract_strided_slice %3 {offsets = [0, 77], sizes = [8, 1], strides = [1, 1]} : vector<8x128xf32> to vector<8x1xf32>
    %658 = vector.extract_strided_slice %4 {offsets = [77, 0], sizes = [1, 16], strides = [1, 1]} : vector<128x16xf32> to vector<1x16xf32>
    %659 = vector.broadcast %657 : vector<8x1xf32> to vector<8x16xf32>
    %660 = vector.broadcast %658 : vector<1x16xf32> to vector<8x16xf32>
    %661 = arith.subf %659, %660 : vector<8x16xf32>
    %662 = math.absf %661 : vector<8x16xf32>
    %663 = arith.addf %656, %662 : vector<8x16xf32>
    %664 = vector.extract_strided_slice %3 {offsets = [0, 78], sizes = [8, 1], strides = [1, 1]} : vector<8x128xf32> to vector<8x1xf32>
    %665 = vector.extract_strided_slice %4 {offsets = [78, 0], sizes = [1, 16], strides = [1, 1]} : vector<128x16xf32> to vector<1x16xf32>
    %666 = vector.broadcast %664 : vector<8x1xf32> to vector<8x16xf32>
    %667 = vector.broadcast %665 : vector<1x16xf32> to vector<8x16xf32>
    %668 = arith.subf %666, %667 : vector<8x16xf32>
    %669 = math.absf %668 : vector<8x16xf32>
    %670 = arith.addf %663, %669 : vector<8x16xf32>
    %671 = vector.extract_strided_slice %3 {offsets = [0, 79], sizes = [8, 1], strides = [1, 1]} : vector<8x128xf32> to vector<8x1xf32>
    %672 = vector.extract_strided_slice %4 {offsets = [79, 0], sizes = [1, 16], strides = [1, 1]} : vector<128x16xf32> to vector<1x16xf32>
    %673 = vector.broadcast %671 : vector<8x1xf32> to vector<8x16xf32>
    %674 = vector.broadcast %672 : vector<1x16xf32> to vector<8x16xf32>
    %675 = arith.subf %673, %674 : vector<8x16xf32>
    %676 = math.absf %675 : vector<8x16xf32>
    %677 = arith.addf %670, %676 : vector<8x16xf32>
    %cst_67 = arith.constant 0.000000e+00 : f32
    %678 = vector.broadcast %cst_67 : f32 to vector<8x16xf32>
    %679 = arith.subf %678, %677 : vector<8x16xf32>
    %680 = math.exp %679 : vector<8x16xf32>
    %cst_68 = arith.constant 0.000000e+00 : f32
    %681 = vector.shape_cast %10 : vector<1x16xi1> to vector<1x16xi1>
    %682 = vector.broadcast %681 : vector<1x16xi1> to vector<8x16xi1>
    %683 = vector.broadcast %cst_68 : f32 to vector<8x16xf32>
    %684 = arith.select %682, %680, %683 : vector<8x16xi1>, vector<8x16xf32>
    %c9 = arith.constant 9 : index
    %c0_69 = arith.constant 0 : index
    %c0_70 = arith.constant 0 : index
    %685 = vector.load %arg5[%c9, %c0_69, %c0_70] : memref<16x8x16xf32, #tpu.memory_space<vmem>>, vector<1x8x16xf32>
    %686 = vector.shape_cast %685 : vector<1x8x16xf32> to vector<8x16xf32>
    %687 = arith.addf %686, %684 : vector<8x16xf32>
    %c9_71 = arith.constant 9 : index
    %c0_72 = arith.constant 0 : index
    %c0_73 = arith.constant 0 : index
    %688 = vector.load %arg5[%c9_71, %c0_72, %c0_73] : memref<16x8x16xf32, #tpu.memory_space<vmem>>, vector<1x8x16xf32>
    %689 = vector.shape_cast %688 : vector<1x8x16xf32> to vector<8x16xf32>
    %690 = vector.shape_cast %687 : vector<8x16xf32> to vector<1x8x16xf32>
    tpu.vector_store %arg5[%c9_71, %c0_72, %c0_73], %690 {strides = array<i32>} : memref<16x8x16xf32, #tpu.memory_space<vmem>>, vector<1x8x16xf32>,
    %691 = vector.extract_strided_slice %3 {offsets = [0, 80], sizes = [8, 1], strides = [1, 1]} : vector<8x128xf32> to vector<8x1xf32>
    %692 = vector.extract_strided_slice %4 {offsets = [80, 0], sizes = [1, 16], strides = [1, 1]} : vector<128x16xf32> to vector<1x16xf32>
    %693 = vector.broadcast %691 : vector<8x1xf32> to vector<8x16xf32>
    %694 = vector.broadcast %692 : vector<1x16xf32> to vector<8x16xf32>
    %695 = arith.subf %693, %694 : vector<8x16xf32>
    %696 = math.absf %695 : vector<8x16xf32>
    %697 = vector.extract_strided_slice %3 {offsets = [0, 81], sizes = [8, 1], strides = [1, 1]} : vector<8x128xf32> to vector<8x1xf32>
    %698 = vector.extract_strided_slice %4 {offsets = [81, 0], sizes = [1, 16], strides = [1, 1]} : vector<128x16xf32> to vector<1x16xf32>
    %699 = vector.broadcast %697 : vector<8x1xf32> to vector<8x16xf32>
    %700 = vector.broadcast %698 : vector<1x16xf32> to vector<8x16xf32>
    %701 = arith.subf %699, %700 : vector<8x16xf32>
    %702 = math.absf %701 : vector<8x16xf32>
    %703 = arith.addf %696, %702 : vector<8x16xf32>
    %704 = vector.extract_strided_slice %3 {offsets = [0, 82], sizes = [8, 1], strides = [1, 1]} : vector<8x128xf32> to vector<8x1xf32>
    %705 = vector.extract_strided_slice %4 {offsets = [82, 0], sizes = [1, 16], strides = [1, 1]} : vector<128x16xf32> to vector<1x16xf32>
    %706 = vector.broadcast %704 : vector<8x1xf32> to vector<8x16xf32>
    %707 = vector.broadcast %705 : vector<1x16xf32> to vector<8x16xf32>
    %708 = arith.subf %706, %707 : vector<8x16xf32>
    %709 = math.absf %708 : vector<8x16xf32>
    %710 = arith.addf %703, %709 : vector<8x16xf32>
    %711 = vector.extract_strided_slice %3 {offsets = [0, 83], sizes = [8, 1], strides = [1, 1]} : vector<8x128xf32> to vector<8x1xf32>
    %712 = vector.extract_strided_slice %4 {offsets = [83, 0], sizes = [1, 16], strides = [1, 1]} : vector<128x16xf32> to vector<1x16xf32>
    %713 = vector.broadcast %711 : vector<8x1xf32> to vector<8x16xf32>
    %714 = vector.broadcast %712 : vector<1x16xf32> to vector<8x16xf32>
    %715 = arith.subf %713, %714 : vector<8x16xf32>
    %716 = math.absf %715 : vector<8x16xf32>
    %717 = arith.addf %710, %716 : vector<8x16xf32>
    %718 = vector.extract_strided_slice %3 {offsets = [0, 84], sizes = [8, 1], strides = [1, 1]} : vector<8x128xf32> to vector<8x1xf32>
    %719 = vector.extract_strided_slice %4 {offsets = [84, 0], sizes = [1, 16], strides = [1, 1]} : vector<128x16xf32> to vector<1x16xf32>
    %720 = vector.broadcast %718 : vector<8x1xf32> to vector<8x16xf32>
    %721 = vector.broadcast %719 : vector<1x16xf32> to vector<8x16xf32>
    %722 = arith.subf %720, %721 : vector<8x16xf32>
    %723 = math.absf %722 : vector<8x16xf32>
    %724 = arith.addf %717, %723 : vector<8x16xf32>
    %725 = vector.extract_strided_slice %3 {offsets = [0, 85], sizes = [8, 1], strides = [1, 1]} : vector<8x128xf32> to vector<8x1xf32>
    %726 = vector.extract_strided_slice %4 {offsets = [85, 0], sizes = [1, 16], strides = [1, 1]} : vector<128x16xf32> to vector<1x16xf32>
    %727 = vector.broadcast %725 : vector<8x1xf32> to vector<8x16xf32>
    %728 = vector.broadcast %726 : vector<1x16xf32> to vector<8x16xf32>
    %729 = arith.subf %727, %728 : vector<8x16xf32>
    %730 = math.absf %729 : vector<8x16xf32>
    %731 = arith.addf %724, %730 : vector<8x16xf32>
    %732 = vector.extract_strided_slice %3 {offsets = [0, 86], sizes = [8, 1], strides = [1, 1]} : vector<8x128xf32> to vector<8x1xf32>
    %733 = vector.extract_strided_slice %4 {offsets = [86, 0], sizes = [1, 16], strides = [1, 1]} : vector<128x16xf32> to vector<1x16xf32>
    %734 = vector.broadcast %732 : vector<8x1xf32> to vector<8x16xf32>
    %735 = vector.broadcast %733 : vector<1x16xf32> to vector<8x16xf32>
    %736 = arith.subf %734, %735 : vector<8x16xf32>
    %737 = math.absf %736 : vector<8x16xf32>
    %738 = arith.addf %731, %737 : vector<8x16xf32>
    %739 = vector.extract_strided_slice %3 {offsets = [0, 87], sizes = [8, 1], strides = [1, 1]} : vector<8x128xf32> to vector<8x1xf32>
    %740 = vector.extract_strided_slice %4 {offsets = [87, 0], sizes = [1, 16], strides = [1, 1]} : vector<128x16xf32> to vector<1x16xf32>
    %741 = vector.broadcast %739 : vector<8x1xf32> to vector<8x16xf32>
    %742 = vector.broadcast %740 : vector<1x16xf32> to vector<8x16xf32>
    %743 = arith.subf %741, %742 : vector<8x16xf32>
    %744 = math.absf %743 : vector<8x16xf32>
    %745 = arith.addf %738, %744 : vector<8x16xf32>
    %cst_74 = arith.constant 0.000000e+00 : f32
    %746 = vector.broadcast %cst_74 : f32 to vector<8x16xf32>
    %747 = arith.subf %746, %745 : vector<8x16xf32>
    %748 = math.exp %747 : vector<8x16xf32>
    %cst_75 = arith.constant 0.000000e+00 : f32
    %749 = vector.shape_cast %10 : vector<1x16xi1> to vector<1x16xi1>
    %750 = vector.broadcast %749 : vector<1x16xi1> to vector<8x16xi1>
    %751 = vector.broadcast %cst_75 : f32 to vector<8x16xf32>
    %752 = arith.select %750, %748, %751 : vector<8x16xi1>, vector<8x16xf32>
    %c10 = arith.constant 10 : index
    %c0_76 = arith.constant 0 : index
    %c0_77 = arith.constant 0 : index
    %753 = vector.load %arg5[%c10, %c0_76, %c0_77] : memref<16x8x16xf32, #tpu.memory_space<vmem>>, vector<1x8x16xf32>
    %754 = vector.shape_cast %753 : vector<1x8x16xf32> to vector<8x16xf32>
    %755 = arith.addf %754, %752 : vector<8x16xf32>
    %c10_78 = arith.constant 10 : index
    %c0_79 = arith.constant 0 : index
    %c0_80 = arith.constant 0 : index
    %756 = vector.load %arg5[%c10_78, %c0_79, %c0_80] : memref<16x8x16xf32, #tpu.memory_space<vmem>>, vector<1x8x16xf32>
    %757 = vector.shape_cast %756 : vector<1x8x16xf32> to vector<8x16xf32>
    %758 = vector.shape_cast %755 : vector<8x16xf32> to vector<1x8x16xf32>
    tpu.vector_store %arg5[%c10_78, %c0_79, %c0_80], %758 {strides = array<i32>} : memref<16x8x16xf32, #tpu.memory_space<vmem>>, vector<1x8x16xf32>,
    %759 = vector.extract_strided_slice %3 {offsets = [0, 88], sizes = [8, 1], strides = [1, 1]} : vector<8x128xf32> to vector<8x1xf32>
    %760 = vector.extract_strided_slice %4 {offsets = [88, 0], sizes = [1, 16], strides = [1, 1]} : vector<128x16xf32> to vector<1x16xf32>
    %761 = vector.broadcast %759 : vector<8x1xf32> to vector<8x16xf32>
    %762 = vector.broadcast %760 : vector<1x16xf32> to vector<8x16xf32>
    %763 = arith.subf %761, %762 : vector<8x16xf32>
    %764 = math.absf %763 : vector<8x16xf32>
    %765 = vector.extract_strided_slice %3 {offsets = [0, 89], sizes = [8, 1], strides = [1, 1]} : vector<8x128xf32> to vector<8x1xf32>
    %766 = vector.extract_strided_slice %4 {offsets = [89, 0], sizes = [1, 16], strides = [1, 1]} : vector<128x16xf32> to vector<1x16xf32>
    %767 = vector.broadcast %765 : vector<8x1xf32> to vector<8x16xf32>
    %768 = vector.broadcast %766 : vector<1x16xf32> to vector<8x16xf32>
    %769 = arith.subf %767, %768 : vector<8x16xf32>
    %770 = math.absf %769 : vector<8x16xf32>
    %771 = arith.addf %764, %770 : vector<8x16xf32>
    %772 = vector.extract_strided_slice %3 {offsets = [0, 90], sizes = [8, 1], strides = [1, 1]} : vector<8x128xf32> to vector<8x1xf32>
    %773 = vector.extract_strided_slice %4 {offsets = [90, 0], sizes = [1, 16], strides = [1, 1]} : vector<128x16xf32> to vector<1x16xf32>
    %774 = vector.broadcast %772 : vector<8x1xf32> to vector<8x16xf32>
    %775 = vector.broadcast %773 : vector<1x16xf32> to vector<8x16xf32>
    %776 = arith.subf %774, %775 : vector<8x16xf32>
    %777 = math.absf %776 : vector<8x16xf32>
    %778 = arith.addf %771, %777 : vector<8x16xf32>
    %779 = vector.extract_strided_slice %3 {offsets = [0, 91], sizes = [8, 1], strides = [1, 1]} : vector<8x128xf32> to vector<8x1xf32>
    %780 = vector.extract_strided_slice %4 {offsets = [91, 0], sizes = [1, 16], strides = [1, 1]} : vector<128x16xf32> to vector<1x16xf32>
    %781 = vector.broadcast %779 : vector<8x1xf32> to vector<8x16xf32>
    %782 = vector.broadcast %780 : vector<1x16xf32> to vector<8x16xf32>
    %783 = arith.subf %781, %782 : vector<8x16xf32>
    %784 = math.absf %783 : vector<8x16xf32>
    %785 = arith.addf %778, %784 : vector<8x16xf32>
    %786 = vector.extract_strided_slice %3 {offsets = [0, 92], sizes = [8, 1], strides = [1, 1]} : vector<8x128xf32> to vector<8x1xf32>
    %787 = vector.extract_strided_slice %4 {offsets = [92, 0], sizes = [1, 16], strides = [1, 1]} : vector<128x16xf32> to vector<1x16xf32>
    %788 = vector.broadcast %786 : vector<8x1xf32> to vector<8x16xf32>
    %789 = vector.broadcast %787 : vector<1x16xf32> to vector<8x16xf32>
    %790 = arith.subf %788, %789 : vector<8x16xf32>
    %791 = math.absf %790 : vector<8x16xf32>
    %792 = arith.addf %785, %791 : vector<8x16xf32>
    %793 = vector.extract_strided_slice %3 {offsets = [0, 93], sizes = [8, 1], strides = [1, 1]} : vector<8x128xf32> to vector<8x1xf32>
    %794 = vector.extract_strided_slice %4 {offsets = [93, 0], sizes = [1, 16], strides = [1, 1]} : vector<128x16xf32> to vector<1x16xf32>
    %795 = vector.broadcast %793 : vector<8x1xf32> to vector<8x16xf32>
    %796 = vector.broadcast %794 : vector<1x16xf32> to vector<8x16xf32>
    %797 = arith.subf %795, %796 : vector<8x16xf32>
    %798 = math.absf %797 : vector<8x16xf32>
    %799 = arith.addf %792, %798 : vector<8x16xf32>
    %800 = vector.extract_strided_slice %3 {offsets = [0, 94], sizes = [8, 1], strides = [1, 1]} : vector<8x128xf32> to vector<8x1xf32>
    %801 = vector.extract_strided_slice %4 {offsets = [94, 0], sizes = [1, 16], strides = [1, 1]} : vector<128x16xf32> to vector<1x16xf32>
    %802 = vector.broadcast %800 : vector<8x1xf32> to vector<8x16xf32>
    %803 = vector.broadcast %801 : vector<1x16xf32> to vector<8x16xf32>
    %804 = arith.subf %802, %803 : vector<8x16xf32>
    %805 = math.absf %804 : vector<8x16xf32>
    %806 = arith.addf %799, %805 : vector<8x16xf32>
    %807 = vector.extract_strided_slice %3 {offsets = [0, 95], sizes = [8, 1], strides = [1, 1]} : vector<8x128xf32> to vector<8x1xf32>
    %808 = vector.extract_strided_slice %4 {offsets = [95, 0], sizes = [1, 16], strides = [1, 1]} : vector<128x16xf32> to vector<1x16xf32>
    %809 = vector.broadcast %807 : vector<8x1xf32> to vector<8x16xf32>
    %810 = vector.broadcast %808 : vector<1x16xf32> to vector<8x16xf32>
    %811 = arith.subf %809, %810 : vector<8x16xf32>
    %812 = math.absf %811 : vector<8x16xf32>
    %813 = arith.addf %806, %812 : vector<8x16xf32>
    %cst_81 = arith.constant 0.000000e+00 : f32
    %814 = vector.broadcast %cst_81 : f32 to vector<8x16xf32>
    %815 = arith.subf %814, %813 : vector<8x16xf32>
    %816 = math.exp %815 : vector<8x16xf32>
    %cst_82 = arith.constant 0.000000e+00 : f32
    %817 = vector.shape_cast %10 : vector<1x16xi1> to vector<1x16xi1>
    %818 = vector.broadcast %817 : vector<1x16xi1> to vector<8x16xi1>
    %819 = vector.broadcast %cst_82 : f32 to vector<8x16xf32>
    %820 = arith.select %818, %816, %819 : vector<8x16xi1>, vector<8x16xf32>
    %c11 = arith.constant 11 : index
    %c0_83 = arith.constant 0 : index
    %c0_84 = arith.constant 0 : index
    %821 = vector.load %arg5[%c11, %c0_83, %c0_84] : memref<16x8x16xf32, #tpu.memory_space<vmem>>, vector<1x8x16xf32>
    %822 = vector.shape_cast %821 : vector<1x8x16xf32> to vector<8x16xf32>
    %823 = arith.addf %822, %820 : vector<8x16xf32>
    %c11_85 = arith.constant 11 : index
    %c0_86 = arith.constant 0 : index
    %c0_87 = arith.constant 0 : index
    %824 = vector.load %arg5[%c11_85, %c0_86, %c0_87] : memref<16x8x16xf32, #tpu.memory_space<vmem>>, vector<1x8x16xf32>
    %825 = vector.shape_cast %824 : vector<1x8x16xf32> to vector<8x16xf32>
    %826 = vector.shape_cast %823 : vector<8x16xf32> to vector<1x8x16xf32>
    tpu.vector_store %arg5[%c11_85, %c0_86, %c0_87], %826 {strides = array<i32>} : memref<16x8x16xf32, #tpu.memory_space<vmem>>, vector<1x8x16xf32>,
    %827 = vector.extract_strided_slice %3 {offsets = [0, 96], sizes = [8, 1], strides = [1, 1]} : vector<8x128xf32> to vector<8x1xf32>
    %828 = vector.extract_strided_slice %4 {offsets = [96, 0], sizes = [1, 16], strides = [1, 1]} : vector<128x16xf32> to vector<1x16xf32>
    %829 = vector.broadcast %827 : vector<8x1xf32> to vector<8x16xf32>
    %830 = vector.broadcast %828 : vector<1x16xf32> to vector<8x16xf32>
    %831 = arith.subf %829, %830 : vector<8x16xf32>
    %832 = math.absf %831 : vector<8x16xf32>
    %833 = vector.extract_strided_slice %3 {offsets = [0, 97], sizes = [8, 1], strides = [1, 1]} : vector<8x128xf32> to vector<8x1xf32>
    %834 = vector.extract_strided_slice %4 {offsets = [97, 0], sizes = [1, 16], strides = [1, 1]} : vector<128x16xf32> to vector<1x16xf32>
    %835 = vector.broadcast %833 : vector<8x1xf32> to vector<8x16xf32>
    %836 = vector.broadcast %834 : vector<1x16xf32> to vector<8x16xf32>
    %837 = arith.subf %835, %836 : vector<8x16xf32>
    %838 = math.absf %837 : vector<8x16xf32>
    %839 = arith.addf %832, %838 : vector<8x16xf32>
    %840 = vector.extract_strided_slice %3 {offsets = [0, 98], sizes = [8, 1], strides = [1, 1]} : vector<8x128xf32> to vector<8x1xf32>
    %841 = vector.extract_strided_slice %4 {offsets = [98, 0], sizes = [1, 16], strides = [1, 1]} : vector<128x16xf32> to vector<1x16xf32>
    %842 = vector.broadcast %840 : vector<8x1xf32> to vector<8x16xf32>
    %843 = vector.broadcast %841 : vector<1x16xf32> to vector<8x16xf32>
    %844 = arith.subf %842, %843 : vector<8x16xf32>
    %845 = math.absf %844 : vector<8x16xf32>
    %846 = arith.addf %839, %845 : vector<8x16xf32>
    %847 = vector.extract_strided_slice %3 {offsets = [0, 99], sizes = [8, 1], strides = [1, 1]} : vector<8x128xf32> to vector<8x1xf32>
    %848 = vector.extract_strided_slice %4 {offsets = [99, 0], sizes = [1, 16], strides = [1, 1]} : vector<128x16xf32> to vector<1x16xf32>
    %849 = vector.broadcast %847 : vector<8x1xf32> to vector<8x16xf32>
    %850 = vector.broadcast %848 : vector<1x16xf32> to vector<8x16xf32>
    %851 = arith.subf %849, %850 : vector<8x16xf32>
    %852 = math.absf %851 : vector<8x16xf32>
    %853 = arith.addf %846, %852 : vector<8x16xf32>
    %854 = vector.extract_strided_slice %3 {offsets = [0, 100], sizes = [8, 1], strides = [1, 1]} : vector<8x128xf32> to vector<8x1xf32>
    %855 = vector.extract_strided_slice %4 {offsets = [100, 0], sizes = [1, 16], strides = [1, 1]} : vector<128x16xf32> to vector<1x16xf32>
    %856 = vector.broadcast %854 : vector<8x1xf32> to vector<8x16xf32>
    %857 = vector.broadcast %855 : vector<1x16xf32> to vector<8x16xf32>
    %858 = arith.subf %856, %857 : vector<8x16xf32>
    %859 = math.absf %858 : vector<8x16xf32>
    %860 = arith.addf %853, %859 : vector<8x16xf32>
    %861 = vector.extract_strided_slice %3 {offsets = [0, 101], sizes = [8, 1], strides = [1, 1]} : vector<8x128xf32> to vector<8x1xf32>
    %862 = vector.extract_strided_slice %4 {offsets = [101, 0], sizes = [1, 16], strides = [1, 1]} : vector<128x16xf32> to vector<1x16xf32>
    %863 = vector.broadcast %861 : vector<8x1xf32> to vector<8x16xf32>
    %864 = vector.broadcast %862 : vector<1x16xf32> to vector<8x16xf32>
    %865 = arith.subf %863, %864 : vector<8x16xf32>
    %866 = math.absf %865 : vector<8x16xf32>
    %867 = arith.addf %860, %866 : vector<8x16xf32>
    %868 = vector.extract_strided_slice %3 {offsets = [0, 102], sizes = [8, 1], strides = [1, 1]} : vector<8x128xf32> to vector<8x1xf32>
    %869 = vector.extract_strided_slice %4 {offsets = [102, 0], sizes = [1, 16], strides = [1, 1]} : vector<128x16xf32> to vector<1x16xf32>
    %870 = vector.broadcast %868 : vector<8x1xf32> to vector<8x16xf32>
    %871 = vector.broadcast %869 : vector<1x16xf32> to vector<8x16xf32>
    %872 = arith.subf %870, %871 : vector<8x16xf32>
    %873 = math.absf %872 : vector<8x16xf32>
    %874 = arith.addf %867, %873 : vector<8x16xf32>
    %875 = vector.extract_strided_slice %3 {offsets = [0, 103], sizes = [8, 1], strides = [1, 1]} : vector<8x128xf32> to vector<8x1xf32>
    %876 = vector.extract_strided_slice %4 {offsets = [103, 0], sizes = [1, 16], strides = [1, 1]} : vector<128x16xf32> to vector<1x16xf32>
    %877 = vector.broadcast %875 : vector<8x1xf32> to vector<8x16xf32>
    %878 = vector.broadcast %876 : vector<1x16xf32> to vector<8x16xf32>
    %879 = arith.subf %877, %878 : vector<8x16xf32>
    %880 = math.absf %879 : vector<8x16xf32>
    %881 = arith.addf %874, %880 : vector<8x16xf32>
    %cst_88 = arith.constant 0.000000e+00 : f32
    %882 = vector.broadcast %cst_88 : f32 to vector<8x16xf32>
    %883 = arith.subf %882, %881 : vector<8x16xf32>
    %884 = math.exp %883 : vector<8x16xf32>
    %cst_89 = arith.constant 0.000000e+00 : f32
    %885 = vector.shape_cast %10 : vector<1x16xi1> to vector<1x16xi1>
    %886 = vector.broadcast %885 : vector<1x16xi1> to vector<8x16xi1>
    %887 = vector.broadcast %cst_89 : f32 to vector<8x16xf32>
    %888 = arith.select %886, %884, %887 : vector<8x16xi1>, vector<8x16xf32>
    %c12 = arith.constant 12 : index
    %c0_90 = arith.constant 0 : index
    %c0_91 = arith.constant 0 : index
    %889 = vector.load %arg5[%c12, %c0_90, %c0_91] : memref<16x8x16xf32, #tpu.memory_space<vmem>>, vector<1x8x16xf32>
    %890 = vector.shape_cast %889 : vector<1x8x16xf32> to vector<8x16xf32>
    %891 = arith.addf %890, %888 : vector<8x16xf32>
    %c12_92 = arith.constant 12 : index
    %c0_93 = arith.constant 0 : index
    %c0_94 = arith.constant 0 : index
    %892 = vector.load %arg5[%c12_92, %c0_93, %c0_94] : memref<16x8x16xf32, #tpu.memory_space<vmem>>, vector<1x8x16xf32>
    %893 = vector.shape_cast %892 : vector<1x8x16xf32> to vector<8x16xf32>
    %894 = vector.shape_cast %891 : vector<8x16xf32> to vector<1x8x16xf32>
    tpu.vector_store %arg5[%c12_92, %c0_93, %c0_94], %894 {strides = array<i32>} : memref<16x8x16xf32, #tpu.memory_space<vmem>>, vector<1x8x16xf32>,
    %895 = vector.extract_strided_slice %3 {offsets = [0, 104], sizes = [8, 1], strides = [1, 1]} : vector<8x128xf32> to vector<8x1xf32>
    %896 = vector.extract_strided_slice %4 {offsets = [104, 0], sizes = [1, 16], strides = [1, 1]} : vector<128x16xf32> to vector<1x16xf32>
    %897 = vector.broadcast %895 : vector<8x1xf32> to vector<8x16xf32>
    %898 = vector.broadcast %896 : vector<1x16xf32> to vector<8x16xf32>
    %899 = arith.subf %897, %898 : vector<8x16xf32>
    %900 = math.absf %899 : vector<8x16xf32>
    %901 = vector.extract_strided_slice %3 {offsets = [0, 105], sizes = [8, 1], strides = [1, 1]} : vector<8x128xf32> to vector<8x1xf32>
    %902 = vector.extract_strided_slice %4 {offsets = [105, 0], sizes = [1, 16], strides = [1, 1]} : vector<128x16xf32> to vector<1x16xf32>
    %903 = vector.broadcast %901 : vector<8x1xf32> to vector<8x16xf32>
    %904 = vector.broadcast %902 : vector<1x16xf32> to vector<8x16xf32>
    %905 = arith.subf %903, %904 : vector<8x16xf32>
    %906 = math.absf %905 : vector<8x16xf32>
    %907 = arith.addf %900, %906 : vector<8x16xf32>
    %908 = vector.extract_strided_slice %3 {offsets = [0, 106], sizes = [8, 1], strides = [1, 1]} : vector<8x128xf32> to vector<8x1xf32>
    %909 = vector.extract_strided_slice %4 {offsets = [106, 0], sizes = [1, 16], strides = [1, 1]} : vector<128x16xf32> to vector<1x16xf32>
    %910 = vector.broadcast %908 : vector<8x1xf32> to vector<8x16xf32>
    %911 = vector.broadcast %909 : vector<1x16xf32> to vector<8x16xf32>
    %912 = arith.subf %910, %911 : vector<8x16xf32>
    %913 = math.absf %912 : vector<8x16xf32>
    %914 = arith.addf %907, %913 : vector<8x16xf32>
    %915 = vector.extract_strided_slice %3 {offsets = [0, 107], sizes = [8, 1], strides = [1, 1]} : vector<8x128xf32> to vector<8x1xf32>
    %916 = vector.extract_strided_slice %4 {offsets = [107, 0], sizes = [1, 16], strides = [1, 1]} : vector<128x16xf32> to vector<1x16xf32>
    %917 = vector.broadcast %915 : vector<8x1xf32> to vector<8x16xf32>
    %918 = vector.broadcast %916 : vector<1x16xf32> to vector<8x16xf32>
    %919 = arith.subf %917, %918 : vector<8x16xf32>
    %920 = math.absf %919 : vector<8x16xf32>
    %921 = arith.addf %914, %920 : vector<8x16xf32>
    %922 = vector.extract_strided_slice %3 {offsets = [0, 108], sizes = [8, 1], strides = [1, 1]} : vector<8x128xf32> to vector<8x1xf32>
    %923 = vector.extract_strided_slice %4 {offsets = [108, 0], sizes = [1, 16], strides = [1, 1]} : vector<128x16xf32> to vector<1x16xf32>
    %924 = vector.broadcast %922 : vector<8x1xf32> to vector<8x16xf32>
    %925 = vector.broadcast %923 : vector<1x16xf32> to vector<8x16xf32>
    %926 = arith.subf %924, %925 : vector<8x16xf32>
    %927 = math.absf %926 : vector<8x16xf32>
    %928 = arith.addf %921, %927 : vector<8x16xf32>
    %929 = vector.extract_strided_slice %3 {offsets = [0, 109], sizes = [8, 1], strides = [1, 1]} : vector<8x128xf32> to vector<8x1xf32>
    %930 = vector.extract_strided_slice %4 {offsets = [109, 0], sizes = [1, 16], strides = [1, 1]} : vector<128x16xf32> to vector<1x16xf32>
    %931 = vector.broadcast %929 : vector<8x1xf32> to vector<8x16xf32>
    %932 = vector.broadcast %930 : vector<1x16xf32> to vector<8x16xf32>
    %933 = arith.subf %931, %932 : vector<8x16xf32>
    %934 = math.absf %933 : vector<8x16xf32>
    %935 = arith.addf %928, %934 : vector<8x16xf32>
    %936 = vector.extract_strided_slice %3 {offsets = [0, 110], sizes = [8, 1], strides = [1, 1]} : vector<8x128xf32> to vector<8x1xf32>
    %937 = vector.extract_strided_slice %4 {offsets = [110, 0], sizes = [1, 16], strides = [1, 1]} : vector<128x16xf32> to vector<1x16xf32>
    %938 = vector.broadcast %936 : vector<8x1xf32> to vector<8x16xf32>
    %939 = vector.broadcast %937 : vector<1x16xf32> to vector<8x16xf32>
    %940 = arith.subf %938, %939 : vector<8x16xf32>
    %941 = math.absf %940 : vector<8x16xf32>
    %942 = arith.addf %935, %941 : vector<8x16xf32>
    %943 = vector.extract_strided_slice %3 {offsets = [0, 111], sizes = [8, 1], strides = [1, 1]} : vector<8x128xf32> to vector<8x1xf32>
    %944 = vector.extract_strided_slice %4 {offsets = [111, 0], sizes = [1, 16], strides = [1, 1]} : vector<128x16xf32> to vector<1x16xf32>
    %945 = vector.broadcast %943 : vector<8x1xf32> to vector<8x16xf32>
    %946 = vector.broadcast %944 : vector<1x16xf32> to vector<8x16xf32>
    %947 = arith.subf %945, %946 : vector<8x16xf32>
    %948 = math.absf %947 : vector<8x16xf32>
    %949 = arith.addf %942, %948 : vector<8x16xf32>
    %cst_95 = arith.constant 0.000000e+00 : f32
    %950 = vector.broadcast %cst_95 : f32 to vector<8x16xf32>
    %951 = arith.subf %950, %949 : vector<8x16xf32>
    %952 = math.exp %951 : vector<8x16xf32>
    %cst_96 = arith.constant 0.000000e+00 : f32
    %953 = vector.shape_cast %10 : vector<1x16xi1> to vector<1x16xi1>
    %954 = vector.broadcast %953 : vector<1x16xi1> to vector<8x16xi1>
    %955 = vector.broadcast %cst_96 : f32 to vector<8x16xf32>
    %956 = arith.select %954, %952, %955 : vector<8x16xi1>, vector<8x16xf32>
    %c13 = arith.constant 13 : index
    %c0_97 = arith.constant 0 : index
    %c0_98 = arith.constant 0 : index
    %957 = vector.load %arg5[%c13, %c0_97, %c0_98] : memref<16x8x16xf32, #tpu.memory_space<vmem>>, vector<1x8x16xf32>
    %958 = vector.shape_cast %957 : vector<1x8x16xf32> to vector<8x16xf32>
    %959 = arith.addf %958, %956 : vector<8x16xf32>
    %c13_99 = arith.constant 13 : index
    %c0_100 = arith.constant 0 : index
    %c0_101 = arith.constant 0 : index
    %960 = vector.load %arg5[%c13_99, %c0_100, %c0_101] : memref<16x8x16xf32, #tpu.memory_space<vmem>>, vector<1x8x16xf32>
    %961 = vector.shape_cast %960 : vector<1x8x16xf32> to vector<8x16xf32>
    %962 = vector.shape_cast %959 : vector<8x16xf32> to vector<1x8x16xf32>
    tpu.vector_store %arg5[%c13_99, %c0_100, %c0_101], %962 {strides = array<i32>} : memref<16x8x16xf32, #tpu.memory_space<vmem>>, vector<1x8x16xf32>,
    %963 = vector.extract_strided_slice %3 {offsets = [0, 112], sizes = [8, 1], strides = [1, 1]} : vector<8x128xf32> to vector<8x1xf32>
    %964 = vector.extract_strided_slice %4 {offsets = [112, 0], sizes = [1, 16], strides = [1, 1]} : vector<128x16xf32> to vector<1x16xf32>
    %965 = vector.broadcast %963 : vector<8x1xf32> to vector<8x16xf32>
    %966 = vector.broadcast %964 : vector<1x16xf32> to vector<8x16xf32>
    %967 = arith.subf %965, %966 : vector<8x16xf32>
    %968 = math.absf %967 : vector<8x16xf32>
    %969 = vector.extract_strided_slice %3 {offsets = [0, 113], sizes = [8, 1], strides = [1, 1]} : vector<8x128xf32> to vector<8x1xf32>
    %970 = vector.extract_strided_slice %4 {offsets = [113, 0], sizes = [1, 16], strides = [1, 1]} : vector<128x16xf32> to vector<1x16xf32>
    %971 = vector.broadcast %969 : vector<8x1xf32> to vector<8x16xf32>
    %972 = vector.broadcast %970 : vector<1x16xf32> to vector<8x16xf32>
    %973 = arith.subf %971, %972 : vector<8x16xf32>
    %974 = math.absf %973 : vector<8x16xf32>
    %975 = arith.addf %968, %974 : vector<8x16xf32>
    %976 = vector.extract_strided_slice %3 {offsets = [0, 114], sizes = [8, 1], strides = [1, 1]} : vector<8x128xf32> to vector<8x1xf32>
    %977 = vector.extract_strided_slice %4 {offsets = [114, 0], sizes = [1, 16], strides = [1, 1]} : vector<128x16xf32> to vector<1x16xf32>
    %978 = vector.broadcast %976 : vector<8x1xf32> to vector<8x16xf32>
    %979 = vector.broadcast %977 : vector<1x16xf32> to vector<8x16xf32>
    %980 = arith.subf %978, %979 : vector<8x16xf32>
    %981 = math.absf %980 : vector<8x16xf32>
    %982 = arith.addf %975, %981 : vector<8x16xf32>
    %983 = vector.extract_strided_slice %3 {offsets = [0, 115], sizes = [8, 1], strides = [1, 1]} : vector<8x128xf32> to vector<8x1xf32>
    %984 = vector.extract_strided_slice %4 {offsets = [115, 0], sizes = [1, 16], strides = [1, 1]} : vector<128x16xf32> to vector<1x16xf32>
    %985 = vector.broadcast %983 : vector<8x1xf32> to vector<8x16xf32>
    %986 = vector.broadcast %984 : vector<1x16xf32> to vector<8x16xf32>
    %987 = arith.subf %985, %986 : vector<8x16xf32>
    %988 = math.absf %987 : vector<8x16xf32>
    %989 = arith.addf %982, %988 : vector<8x16xf32>
    %990 = vector.extract_strided_slice %3 {offsets = [0, 116], sizes = [8, 1], strides = [1, 1]} : vector<8x128xf32> to vector<8x1xf32>
    %991 = vector.extract_strided_slice %4 {offsets = [116, 0], sizes = [1, 16], strides = [1, 1]} : vector<128x16xf32> to vector<1x16xf32>
    %992 = vector.broadcast %990 : vector<8x1xf32> to vector<8x16xf32>
    %993 = vector.broadcast %991 : vector<1x16xf32> to vector<8x16xf32>
    %994 = arith.subf %992, %993 : vector<8x16xf32>
    %995 = math.absf %994 : vector<8x16xf32>
    %996 = arith.addf %989, %995 : vector<8x16xf32>
    %997 = vector.extract_strided_slice %3 {offsets = [0, 117], sizes = [8, 1], strides = [1, 1]} : vector<8x128xf32> to vector<8x1xf32>
    %998 = vector.extract_strided_slice %4 {offsets = [117, 0], sizes = [1, 16], strides = [1, 1]} : vector<128x16xf32> to vector<1x16xf32>
    %999 = vector.broadcast %997 : vector<8x1xf32> to vector<8x16xf32>
    %1000 = vector.broadcast %998 : vector<1x16xf32> to vector<8x16xf32>
    %1001 = arith.subf %999, %1000 : vector<8x16xf32>
    %1002 = math.absf %1001 : vector<8x16xf32>
    %1003 = arith.addf %996, %1002 : vector<8x16xf32>
    %1004 = vector.extract_strided_slice %3 {offsets = [0, 118], sizes = [8, 1], strides = [1, 1]} : vector<8x128xf32> to vector<8x1xf32>
    %1005 = vector.extract_strided_slice %4 {offsets = [118, 0], sizes = [1, 16], strides = [1, 1]} : vector<128x16xf32> to vector<1x16xf32>
    %1006 = vector.broadcast %1004 : vector<8x1xf32> to vector<8x16xf32>
    %1007 = vector.broadcast %1005 : vector<1x16xf32> to vector<8x16xf32>
    %1008 = arith.subf %1006, %1007 : vector<8x16xf32>
    %1009 = math.absf %1008 : vector<8x16xf32>
    %1010 = arith.addf %1003, %1009 : vector<8x16xf32>
    %1011 = vector.extract_strided_slice %3 {offsets = [0, 119], sizes = [8, 1], strides = [1, 1]} : vector<8x128xf32> to vector<8x1xf32>
    %1012 = vector.extract_strided_slice %4 {offsets = [119, 0], sizes = [1, 16], strides = [1, 1]} : vector<128x16xf32> to vector<1x16xf32>
    %1013 = vector.broadcast %1011 : vector<8x1xf32> to vector<8x16xf32>
    %1014 = vector.broadcast %1012 : vector<1x16xf32> to vector<8x16xf32>
    %1015 = arith.subf %1013, %1014 : vector<8x16xf32>
    %1016 = math.absf %1015 : vector<8x16xf32>
    %1017 = arith.addf %1010, %1016 : vector<8x16xf32>
    %cst_102 = arith.constant 0.000000e+00 : f32
    %1018 = vector.broadcast %cst_102 : f32 to vector<8x16xf32>
    %1019 = arith.subf %1018, %1017 : vector<8x16xf32>
    %1020 = math.exp %1019 : vector<8x16xf32>
    %cst_103 = arith.constant 0.000000e+00 : f32
    %1021 = vector.shape_cast %10 : vector<1x16xi1> to vector<1x16xi1>
    %1022 = vector.broadcast %1021 : vector<1x16xi1> to vector<8x16xi1>
    %1023 = vector.broadcast %cst_103 : f32 to vector<8x16xf32>
    %1024 = arith.select %1022, %1020, %1023 : vector<8x16xi1>, vector<8x16xf32>
    %c14 = arith.constant 14 : index
    %c0_104 = arith.constant 0 : index
    %c0_105 = arith.constant 0 : index
    %1025 = vector.load %arg5[%c14, %c0_104, %c0_105] : memref<16x8x16xf32, #tpu.memory_space<vmem>>, vector<1x8x16xf32>
    %1026 = vector.shape_cast %1025 : vector<1x8x16xf32> to vector<8x16xf32>
    %1027 = arith.addf %1026, %1024 : vector<8x16xf32>
    %c14_106 = arith.constant 14 : index
    %c0_107 = arith.constant 0 : index
    %c0_108 = arith.constant 0 : index
    %1028 = vector.load %arg5[%c14_106, %c0_107, %c0_108] : memref<16x8x16xf32, #tpu.memory_space<vmem>>, vector<1x8x16xf32>
    %1029 = vector.shape_cast %1028 : vector<1x8x16xf32> to vector<8x16xf32>
    %1030 = vector.shape_cast %1027 : vector<8x16xf32> to vector<1x8x16xf32>
    tpu.vector_store %arg5[%c14_106, %c0_107, %c0_108], %1030 {strides = array<i32>} : memref<16x8x16xf32, #tpu.memory_space<vmem>>, vector<1x8x16xf32>,
    %1031 = vector.extract_strided_slice %3 {offsets = [0, 120], sizes = [8, 1], strides = [1, 1]} : vector<8x128xf32> to vector<8x1xf32>
    %1032 = vector.extract_strided_slice %4 {offsets = [120, 0], sizes = [1, 16], strides = [1, 1]} : vector<128x16xf32> to vector<1x16xf32>
    %1033 = vector.broadcast %1031 : vector<8x1xf32> to vector<8x16xf32>
    %1034 = vector.broadcast %1032 : vector<1x16xf32> to vector<8x16xf32>
    %1035 = arith.subf %1033, %1034 : vector<8x16xf32>
    %1036 = math.absf %1035 : vector<8x16xf32>
    %1037 = vector.extract_strided_slice %3 {offsets = [0, 121], sizes = [8, 1], strides = [1, 1]} : vector<8x128xf32> to vector<8x1xf32>
    %1038 = vector.extract_strided_slice %4 {offsets = [121, 0], sizes = [1, 16], strides = [1, 1]} : vector<128x16xf32> to vector<1x16xf32>
    %1039 = vector.broadcast %1037 : vector<8x1xf32> to vector<8x16xf32>
    %1040 = vector.broadcast %1038 : vector<1x16xf32> to vector<8x16xf32>
    %1041 = arith.subf %1039, %1040 : vector<8x16xf32>
    %1042 = math.absf %1041 : vector<8x16xf32>
    %1043 = arith.addf %1036, %1042 : vector<8x16xf32>
    %1044 = vector.extract_strided_slice %3 {offsets = [0, 122], sizes = [8, 1], strides = [1, 1]} : vector<8x128xf32> to vector<8x1xf32>
    %1045 = vector.extract_strided_slice %4 {offsets = [122, 0], sizes = [1, 16], strides = [1, 1]} : vector<128x16xf32> to vector<1x16xf32>
    %1046 = vector.broadcast %1044 : vector<8x1xf32> to vector<8x16xf32>
    %1047 = vector.broadcast %1045 : vector<1x16xf32> to vector<8x16xf32>
    %1048 = arith.subf %1046, %1047 : vector<8x16xf32>
    %1049 = math.absf %1048 : vector<8x16xf32>
    %1050 = arith.addf %1043, %1049 : vector<8x16xf32>
    %1051 = vector.extract_strided_slice %3 {offsets = [0, 123], sizes = [8, 1], strides = [1, 1]} : vector<8x128xf32> to vector<8x1xf32>
    %1052 = vector.extract_strided_slice %4 {offsets = [123, 0], sizes = [1, 16], strides = [1, 1]} : vector<128x16xf32> to vector<1x16xf32>
    %1053 = vector.broadcast %1051 : vector<8x1xf32> to vector<8x16xf32>
    %1054 = vector.broadcast %1052 : vector<1x16xf32> to vector<8x16xf32>
    %1055 = arith.subf %1053, %1054 : vector<8x16xf32>
    %1056 = math.absf %1055 : vector<8x16xf32>
    %1057 = arith.addf %1050, %1056 : vector<8x16xf32>
    %1058 = vector.extract_strided_slice %3 {offsets = [0, 124], sizes = [8, 1], strides = [1, 1]} : vector<8x128xf32> to vector<8x1xf32>
    %1059 = vector.extract_strided_slice %4 {offsets = [124, 0], sizes = [1, 16], strides = [1, 1]} : vector<128x16xf32> to vector<1x16xf32>
    %1060 = vector.broadcast %1058 : vector<8x1xf32> to vector<8x16xf32>
    %1061 = vector.broadcast %1059 : vector<1x16xf32> to vector<8x16xf32>
    %1062 = arith.subf %1060, %1061 : vector<8x16xf32>
    %1063 = math.absf %1062 : vector<8x16xf32>
    %1064 = arith.addf %1057, %1063 : vector<8x16xf32>
    %1065 = vector.extract_strided_slice %3 {offsets = [0, 125], sizes = [8, 1], strides = [1, 1]} : vector<8x128xf32> to vector<8x1xf32>
    %1066 = vector.extract_strided_slice %4 {offsets = [125, 0], sizes = [1, 16], strides = [1, 1]} : vector<128x16xf32> to vector<1x16xf32>
    %1067 = vector.broadcast %1065 : vector<8x1xf32> to vector<8x16xf32>
    %1068 = vector.broadcast %1066 : vector<1x16xf32> to vector<8x16xf32>
    %1069 = arith.subf %1067, %1068 : vector<8x16xf32>
    %1070 = math.absf %1069 : vector<8x16xf32>
    %1071 = arith.addf %1064, %1070 : vector<8x16xf32>
    %1072 = vector.extract_strided_slice %3 {offsets = [0, 126], sizes = [8, 1], strides = [1, 1]} : vector<8x128xf32> to vector<8x1xf32>
    %1073 = vector.extract_strided_slice %4 {offsets = [126, 0], sizes = [1, 16], strides = [1, 1]} : vector<128x16xf32> to vector<1x16xf32>
    %1074 = vector.broadcast %1072 : vector<8x1xf32> to vector<8x16xf32>
    %1075 = vector.broadcast %1073 : vector<1x16xf32> to vector<8x16xf32>
    %1076 = arith.subf %1074, %1075 : vector<8x16xf32>
    %1077 = math.absf %1076 : vector<8x16xf32>
    %1078 = arith.addf %1071, %1077 : vector<8x16xf32>
    %1079 = vector.extract_strided_slice %3 {offsets = [0, 127], sizes = [8, 1], strides = [1, 1]} : vector<8x128xf32> to vector<8x1xf32>
    %1080 = vector.extract_strided_slice %4 {offsets = [127, 0], sizes = [1, 16], strides = [1, 1]} : vector<128x16xf32> to vector<1x16xf32>
    %1081 = vector.broadcast %1079 : vector<8x1xf32> to vector<8x16xf32>
    %1082 = vector.broadcast %1080 : vector<1x16xf32> to vector<8x16xf32>
    %1083 = arith.subf %1081, %1082 : vector<8x16xf32>
    %1084 = math.absf %1083 : vector<8x16xf32>
    %1085 = arith.addf %1078, %1084 : vector<8x16xf32>
    %cst_109 = arith.constant 0.000000e+00 : f32
    %1086 = vector.broadcast %cst_109 : f32 to vector<8x16xf32>
    %1087 = arith.subf %1086, %1085 : vector<8x16xf32>
    %1088 = math.exp %1087 : vector<8x16xf32>
    %cst_110 = arith.constant 0.000000e+00 : f32
    %1089 = vector.shape_cast %10 : vector<1x16xi1> to vector<1x16xi1>
    %1090 = vector.broadcast %1089 : vector<1x16xi1> to vector<8x16xi1>
    %1091 = vector.broadcast %cst_110 : f32 to vector<8x16xf32>
    %1092 = arith.select %1090, %1088, %1091 : vector<8x16xi1>, vector<8x16xf32>
    %c15 = arith.constant 15 : index
    %c0_111 = arith.constant 0 : index
    %c0_112 = arith.constant 0 : index
    %1093 = vector.load %arg5[%c15, %c0_111, %c0_112] : memref<16x8x16xf32, #tpu.memory_space<vmem>>, vector<1x8x16xf32>
    %1094 = vector.shape_cast %1093 : vector<1x8x16xf32> to vector<8x16xf32>
    %1095 = arith.addf %1094, %1092 : vector<8x16xf32>
    %c15_113 = arith.constant 15 : index
    %c0_114 = arith.constant 0 : index
    %c0_115 = arith.constant 0 : index
    %1096 = vector.load %arg5[%c15_113, %c0_114, %c0_115] : memref<16x8x16xf32, #tpu.memory_space<vmem>>, vector<1x8x16xf32>
    %1097 = vector.shape_cast %1096 : vector<1x8x16xf32> to vector<8x16xf32>
    %1098 = vector.shape_cast %1095 : vector<8x16xf32> to vector<1x8x16xf32>
    tpu.vector_store %arg5[%c15_113, %c0_114, %c0_115], %1098 {strides = array<i32>} : memref<16x8x16xf32, #tpu.memory_space<vmem>>, vector<1x8x16xf32>,
    %c0_i32_116 = arith.constant 0 : i32
    %1099 = arith.cmpi eq, %arg1, %c0_i32_116 : i32
    %1100 = arith.extui %1099 : i1 to i32
    %c0_i32_117 = arith.constant 0 : i32
    %1101 = arith.cmpi ne, %1100, %c0_i32_117 : i32
    scf.if %1101 {
      %c0_118 = arith.constant 0 : index
      %c0_119 = arith.constant 0 : index
      %c0_120 = arith.constant 0 : index
      %1102 = vector.load %arg5[%c0_118, %c0_119, %c0_120] : memref<16x8x16xf32, #tpu.memory_space<vmem>>, vector<16x8x16xf32>
      %cst_121 = arith.constant dense<0.000000e+00> : vector<16x8xf32>
      %1103 = vector.multi_reduction <add>, %1102, %cst_121 [2] : vector<16x8x16xf32> to vector<16x8xf32>
      %cst_122 = arith.constant 1.000000e+00 : f32
      %1104 = vector.broadcast %cst_122 : f32 to vector<16x8xf32>
      %1105 = arith.subf %1103, %1104 : vector<16x8xf32>
      %c0_123 = arith.constant 0 : index
      %c0_124 = arith.constant 0 : index
      %c0_125 = arith.constant 0 : index
      %1106 = vector.load %arg4[%c0_123, %c0_124, %c0_125] : memref<1x16x8xf32, #tpu.memory_space<vmem>>, vector<1x16x8xf32>
      %1107 = vector.shape_cast %1106 : vector<1x16x8xf32> to vector<16x8xf32>
      %1108 = vector.shape_cast %1105 : vector<16x8xf32> to vector<1x16x8xf32>
      tpu.vector_store %arg4[%c0_123, %c0_124, %c0_125], %1108 {strides = array<i32>} : memref<1x16x8xf32, #tpu.memory_space<vmem>>, vector<1x16x8xf32>,
    } else {
    }
    return
  }
  func.func @transform_0(%arg0: i32, %arg1: i32) -> (i32, i32) {
    %c0_i32 = arith.constant 0 : i32
    %c0_i32_0 = arith.constant 0 : i32
    return %arg0, %c0_i32 : i32, i32
  }
  func.func @transform_1(%arg0: i32, %arg1: i32) -> (i32, i32) {
    %c0_i32 = arith.constant 0 : i32
    %c0_i32_0 = arith.constant 0 : i32
    return %c0_i32, %arg1 : i32, i32
  }
  func.func @transform_2(%arg0: i32, %arg1: i32) -> (i32, i32, i32) {
    %c0_i32 = arith.constant 0 : i32
    %c0_i32_0 = arith.constant 0 : i32
    %c0_i32_1 = arith.constant 0 : i32
    return %arg0, %c0_i32, %c0_i32_0 : i32, i32, i32
  }
}

</mosaic_0001>

<llo_original>
// kernel: tpu_custom_call.1
$region0: #{tpu_custom_call.1}
  #allocation0 [shape = 'u32[]', space=smem, size = 0x4, offset = 0x4, fixed_abs, tag = 'smem constant byte address 0x4 - core index']
  #allocation1 [shape = 'u32[144,128]{1,0:T(1,128)}', space=vmem, size = 0x12000, scoped, tag = 'internal scratch']
  #allocation2 [shape = 'f32[16,8,16]{2,1,0:T(8,128)}', space=vmem, size = 0x10000, scoped, tag = 'scratch operand']
  %s0 = inlined_call_operand.vmem [shape: f32[16,128], index: 0, kind: input, shape index: {}]
  %s1 = inlined_call_operand.vmem [shape: f32[128,16], index: 1, kind: input, shape index: {}]
  %s2 = inlined_call_operand.vmem [shape: f32[2,16,8], index: 2, kind: output, shape index: {}]
  %s3 = sld [smem:[#allocation0]]
  $region49: #{tpu_custom_call.1} parent=0
    _
  %s5 = ssub.s32 1, %s3
  %s6 = scalar_select 0, %s5, %s3
  loop: start=0, step=1, limit=4
  $region2: #{tpu_custom_call.1} parent=0 // loop_pre_header
    _
  $region3: #{tpu_custom_call.1} parent=0 // loop_header
    %s8 = sphi 0, %s12
    %p9 = scmp.ge.s32.totalorder %s8, 4
    %s15 = sphi 0, %s27
    %s16 = sphi 0, %s23
    %s17 = sphi 0, %s15
    %s18 = sphi 0, %s16
    %s19 = sphi 0, %s17
    %s20 = sphi 0, %s18
    %s30 = sphi 0, %s32
    %s33 = sphi 0, %s30
    %s34 = sphi 0, %s33
    %s50 = sphi 0, %s34
    %s56 = sphi 0, %s58
    %s59 = sphi 0, %s56
    %s60 = sphi 0, %s59
    %s76 = sphi 0, %s60
    %s82 = sphi 0, %s84
    %s85 = sphi 0, %s82
    %s86 = sphi 0, %s85
    %s102 = sphi 0, %s86
  $region4: #{tpu_custom_call.1} parent=0 // loop_header_branch
    %11 = sbr.rel (%p9) target = $region8
  $region5: #{tpu_custom_call.1} parent=0 // loop_body
    %s13 = ssub.s32 %s8, 1
    %s14 = ssub.s32 %s8, 2
    %s21 = sadd.s32 1, %s16
    %p22 = scmp.ge.s32.totalorder %s21, 1
    %s23 = scalar_select %p22, 0, %s21
    %s24 = sadd.s32 1, %s15
    %s25 = scalar_select %p22, %s24, %s15
    %p26 = scmp.ge.s32.totalorder %s25, 2
    %s27 = scalar_select %p26, 0, %s25
    %s28 = ssub.s32 %s15, %s27
    %p29 = scmp.eq.s32.totalorder %s28, 0
    %s31 = sadd.s32 %s30, 1
    %s32 = scalar_select %p29, %s30, %s31
    %p35 = pneg %p29
    %p36 = scmp.eq.s32.totalorder %s8, 1
    %p37 = por %p35, %p36
    %p38 = scmp.ne.s32.totalorder %s30, %s33
    %p39 = scmp.eq.s32.totalorder %s8, 0
    %p40 = por %p38, %p39
    %p41 = scmp.ne.s32.totalorder %s30, %s33
    %p42 = scmp.eq.s32.totalorder %s13, 1
    %p43 = por %p41, %p42
    %p44 = scmp.ne.s32.totalorder %s33, %s34
    %p45 = scmp.eq.s32.totalorder %s13, 0
    %p46 = por %p44, %p45
    %p47 = scmp.ne.s32.totalorder %s33, %s34
    %p48 = scmp.eq.s32.totalorder %s14, 1
    %p49 = por %p47, %p48
    %p51 = scmp.ne.s32.totalorder %s34, %s50
    %p52 = scmp.eq.s32.totalorder %s14, 0
    %p53 = por %p51, %p52
    %s54 = ssub.s32 %s16, %s23
    %p55 = scmp.eq.s32.totalorder %s54, 0
    %s57 = sadd.s32 %s56, 1
    %s58 = scalar_select %p55, %s56, %s57
    %p61 = pneg %p55
    %p62 = scmp.eq.s32.totalorder %s8, 1
    %p63 = por %p61, %p62
    %p64 = scmp.ne.s32.totalorder %s56, %s59
    %p65 = scmp.eq.s32.totalorder %s8, 0
    %p66 = por %p64, %p65
    %p67 = scmp.ne.s32.totalorder %s56, %s59
    %p68 = scmp.eq.s32.totalorder %s13, 1
    %p69 = por %p67, %p68
    %p70 = scmp.ne.s32.totalorder %s59, %s60
    %p71 = scmp.eq.s32.totalorder %s13, 0
    %p72 = por %p70, %p71
    %p73 = scmp.ne.s32.totalorder %s59, %s60
    %p74 = scmp.eq.s32.totalorder %s14, 1
    %p75 = por %p73, %p74
    %p77 = scmp.ne.s32.totalorder %s60, %s76
    %p78 = scmp.eq.s32.totalorder %s14, 0
    %p79 = por %p77, %p78
    %s80 = ssub.s32 %s15, %s27
    %p81 = scmp.eq.s32.totalorder %s80, 0
    %s83 = sadd.s32 %s82, 1
    %s84 = scalar_select %p81, %s82, %s83
    %p87 = pneg %p81
    %p88 = scmp.eq.s32.totalorder %s8, 1
    %p89 = por %p87, %p88
    %p90 = scmp.ne.s32.totalorder %s82, %s85
    %p91 = scmp.eq.s32.totalorder %s8, 0
    %p92 = por %p90, %p91
    %p93 = scmp.ne.s32.totalorder %s82, %s85
    %p94 = scmp.eq.s32.totalorder %s13, 1
    %p95 = por %p93, %p94
    %p96 = scmp.ne.s32.totalorder %s85, %s86
    %p97 = scmp.eq.s32.totalorder %s13, 0
    %p98 = por %p96, %p97
    %p99 = scmp.ne.s32.totalorder %s85, %s86
    %p100 = scmp.eq.s32.totalorder %s14, 1
    %p101 = por %p99, %p100
    %p103 = scmp.ne.s32.totalorder %s86, %s102
    %p104 = scmp.eq.s32.totalorder %s14, 0
    %p105 = por %p103, %p104
    %p106 = scmp.le.s32.totalorder 1, %s8
    %p107 = scmp.lt.s32.totalorder %s8, 3
    %p108 = pnand %p106, %p107
    %p109 = pneg %p108
    // Predicated region
    $region9: #{tpu_custom_call.1} parent=5 // pred_check
      _
    $region10: #{tpu_custom_call.1} parent=5 // pred_check_branch
      %111 = sbr.rel (%p108) target = $region12
    $region11: #{tpu_custom_call.1} parent=5 // pred_region
      %s112 = ssub.s32 %s8, 1
      // Predicated region
      $region13: #{tpu_custom_call.1} parent=11 // pred_check
        %p113 = pneg %p72
      $region14: #{tpu_custom_call.1} parent=11 // pred_check_branch
        %115 = sbr.rel (%p113) target = $region16
      $region15: #{tpu_custom_call.1} parent=11 // pred_region
        %p116 = scmp.lt.s32.totalorder %s18, 0
        %s117 = scalar_select %p116, %s18, 0
        %s118 = smul.addr %s117, 8
        %s119 = scalar_lea.vmem %s1, %s118
      $region16: #{tpu_custom_call.1} parent=11 // pred_fallthru
        _
    $region12: #{tpu_custom_call.1} parent=5 // pred_fallthru
      _
    %p120 = scmp.lt.s32.totalorder %s8, 2
    // Predicated region
    $region17: #{tpu_custom_call.1} parent=5 // pred_check
      %p121 = pneg %p120
    $region18: #{tpu_custom_call.1} parent=5 // pred_check_branch
      %123 = sbr.rel (%p121) target = $region20
    $region19: #{tpu_custom_call.1} parent=5 // pred_region
      // Predicated region
      $region21: #{tpu_custom_call.1} parent=19 // pred_check
        %p124 = pneg %p40
      $region22: #{tpu_custom_call.1} parent=19 // pred_check_branch
        %126 = sbr.rel (%p124) target = $region24
      $region23: #{tpu_custom_call.1} parent=19 // pred_region
        %p127 = scmp.lt.s32.totalorder %s15, 1
        %s128 = scalar_select %p127, %s15, 1
        %s129 = smul.addr %s128, 8
        %s130 = scalar_lea.vmem %s0, %s129
      $region24: #{tpu_custom_call.1} parent=19 // pred_fallthru
        _
    $region20: #{tpu_custom_call.1} parent=5 // pred_fallthru
      _
    %p131 = scmp.le.s32.totalorder 1, %s8
    %p132 = scmp.lt.s32.totalorder %s8, 3
    %p133 = pnand %p131, %p132
    %p134 = pneg %p133
    // Predicated region
    $region25: #{tpu_custom_call.1} parent=5 // pred_check
      _
    $region26: #{tpu_custom_call.1} parent=5 // pred_check_branch
      %136 = sbr.rel (%p133) target = $region28
    $region27: #{tpu_custom_call.1} parent=5 // pred_region
      %s137 = ssub.s32 %s8, 1
      %p138 = scmp.lt.s32.totalorder %s17, 1
      %s139 = scalar_select %p138, %s17, 1
      %s140 = smul.addr %s139, 8
      %s141 = scalar_lea.vmem %s0, %s140
      %p142 = pneg %p46
      %p143 = pneg %p43
      %p144 = scmp.lt.s32.totalorder %s18, 0
      %s145 = scalar_select %p144, %s18, 0
      %s146 = smul.addr %s145, 8
      %s147 = scalar_lea.vmem %s1, %s146
      %p148 = pneg %p72
      %p149 = pneg %p69
      %p150 = pneg %p98
      %p151 = pneg %p95
      %p152 = scmp.lt.s32.totalorder %s17, 1
      %s153 = scalar_select %p152, %s17, 1
      %s154 = smul.addr %s153, 2
      %s155 = smul.addr %s154, 8
      %s156 = scalar_lea.vmem %s2, %s155
      %p157 = scmp.lt.s32.totalorder %s17, 1
      %s158 = scalar_select %p157, %s17, 1
      %s159 = smul.addr %s158, 8
      %s160 = scalar_lea.vmem %s0, %s159
      %p161 = scmp.lt.s32.totalorder %s18, 0
      %s162 = scalar_select %p161, %s18, 0
      %s163 = smul.addr %s162, 8
      %s164 = scalar_lea.vmem %s1, %s163
      %p165 = scmp.lt.s32.totalorder %s17, 1
      %s166 = scalar_select %p165, %s17, 1
      %s167 = smul.addr %s166, 2
      %s168 = smul.addr %s167, 8
      %s169 = scalar_lea.vmem %s2, %s168
      %p170 = scmp.eq.s32.totalorder %s18, 0
      // Predicated region
      $region29: #{tpu_custom_call.1} parent=27 // pred_check
        %p171 = pneg %p170
      $region30: #{tpu_custom_call.1} parent=27 // pred_check_branch
        %173 = sbr.rel (%p171) target = $region32
      $region31: #{tpu_custom_call.1} parent=27 // pred_region
        %vm174 = vcmask 130048
        %175 = vst.msk [vmem:[#allocation2] sm:$0xff] %vm174, 0.0
        %176 = vst.msk [vmem:[#allocation2 + $0x8] sm:$0xff] %vm174, 0.0
        %177 = vst.msk [vmem:[#allocation2 + $0x10] sm:$0xff] %vm174, 0.0
        %178 = vst.msk [vmem:[#allocation2 + $0x18] sm:$0xff] %vm174, 0.0
        %179 = vst.msk [vmem:[#allocation2 + $0x20] sm:$0xff] %vm174, 0.0
        %180 = vst.msk [vmem:[#allocation2 + $0x28] sm:$0xff] %vm174, 0.0
        %181 = vst.msk [vmem:[#allocation2 + $0x30] sm:$0xff] %vm174, 0.0
        %182 = vst.msk [vmem:[#allocation2 + $0x38] sm:$0xff] %vm174, 0.0
        %183 = vst.msk [vmem:[#allocation2 + $0x40] sm:$0xff] %vm174, 0.0
        %184 = vst.msk [vmem:[#allocation2 + $0x48] sm:$0xff] %vm174, 0.0
        %185 = vst.msk [vmem:[#allocation2 + $0x50] sm:$0xff] %vm174, 0.0
        %186 = vst.msk [vmem:[#allocation2 + $0x58] sm:$0xff] %vm174, 0.0
        %187 = vst.msk [vmem:[#allocation2 + $0x60] sm:$0xff] %vm174, 0.0
        %188 = vst.msk [vmem:[#allocation2 + $0x68] sm:$0xff] %vm174, 0.0
        %189 = vst.msk [vmem:[#allocation2 + $0x70] sm:$0xff] %vm174, 0.0
        %190 = vst.msk [vmem:[#allocation2 + $0x78] sm:$0xff] %vm174, 0.0
      $region32: #{tpu_custom_call.1} parent=27 // pred_fallthru
        _
      %v191 = vld [vmem:[%s160] sm:$0xff]
      %v192 = vld [vmem:[%s164] sm:$0xff]
      %v193 = vld [vmem:[%s164 + $0x8] sm:$0xff]
      %v194 = vld [vmem:[%s164 + $0x10] sm:$0xff]
      %v195 = vld [vmem:[%s164 + $0x18] sm:$0xff]
      %v196 = vld [vmem:[%s164 + $0x20] sm:$0xff]
      %v197 = vld [vmem:[%s164 + $0x28] sm:$0xff]
      %v198 = vld [vmem:[%s164 + $0x30] sm:$0xff]
      %v199 = vld [vmem:[%s164 + $0x38] sm:$0xff]
      %v200 = vld [vmem:[%s164 + $0x40] sm:$0xff]
      %v201 = vld [vmem:[%s164 + $0x48] sm:$0xff]
      %v202 = vld [vmem:[%s164 + $0x50] sm:$0xff]
      %v203 = vld [vmem:[%s164 + $0x58] sm:$0xff]
      %v204 = vld [vmem:[%s164 + $0x60] sm:$0xff]
      %v205 = vld [vmem:[%s164 + $0x68] sm:$0xff]
      %v206 = vld [vmem:[%s164 + $0x70] sm:$0xff]
      %v207 = vld [vmem:[%s164 + $0x78] sm:$0xff]
      %v208 = vlaneseq
      %v209 = vand.u32 %v208, 127
      %s210 = smul.u32 %s18, 16
      %v211 = vstv %s210
      %v212 = vadd.s32 %v211, %v209
      %vm213 = vcmp.lt.s32.totalorder %v212, 8
      %215 = vset.pattern.permute.xlu0 0
      %216 = vperm.xlu0 %215, %v191
      %v217 = vpop.permute.xlu0 %216
      %v219 = vlaneseq
      %v220 = vshrl.u32 %v219, 7
      %v221 = vsub.s32 0, %v220
      %v222 = vrot.slane %v192, %v221
      %v223 = vsub.f32 %v217, %v222
      %v224 = vand.u32 2147483647, %v223
      %225 = vset.pattern.permute.xlu0 1
      %226 = vperm.xlu0 %225, %v191
      %v227 = vpop.permute.xlu0 %226
      %v229 = vlaneseq
      %v230 = vshrl.u32 %v229, 7
      %v231 = vsub.s32 1, %v230
      %v232 = vrot.slane %v192, %v231
      %v233 = vsub.f32 %v227, %v232
      %v234 = vand.u32 2147483647, %v233
      %v235 = vadd.f32 %v224, %v234
      %236 = vset.pattern.permute.xlu0 2
      %237 = vperm.xlu0 %236, %v191
      %v238 = vpop.permute.xlu0 %237
      %v240 = vlaneseq
      %v241 = vshrl.u32 %v240, 7
      %v242 = vsub.s32 2, %v241
      %v243 = vrot.slane %v192, %v242
      %v244 = vsub.f32 %v238, %v243
      %v245 = vand.u32 2147483647, %v244
      %v246 = vadd.f32 %v235, %v245
      %247 = vset.pattern.permute.xlu0 3
      %248 = vperm.xlu0 %247, %v191
      %v249 = vpop.permute.xlu0 %248
      %v251 = vlaneseq
      %v252 = vshrl.u32 %v251, 7
      %v253 = vsub.s32 3, %v252
      %v254 = vrot.slane %v192, %v253
      %v255 = vsub.f32 %v249, %v254
      %v256 = vand.u32 2147483647, %v255
      %v257 = vadd.f32 %v246, %v256
      %258 = vset.pattern.permute.xlu0 4
      %259 = vperm.xlu0 %258, %v191
      %v260 = vpop.permute.xlu0 %259
      %v262 = vlaneseq
      %v263 = vshrl.u32 %v262, 7
      %v264 = vsub.s32 4, %v263
      %v265 = vrot.slane %v192, %v264
      %v266 = vsub.f32 %v260, %v265
      %v267 = vand.u32 2147483647, %v266
      %v268 = vadd.f32 %v257, %v267
      %269 = vset.pattern.permute.xlu0 5
      %270 = vperm.xlu0 %269, %v191
      %v271 = vpop.permute.xlu0 %270
      %v273 = vlaneseq
      %v274 = vshrl.u32 %v273, 7
      %v275 = vsub.s32 5, %v274
      %v276 = vrot.slane %v192, %v275
      %v277 = vsub.f32 %v271, %v276
      %v278 = vand.u32 2147483647, %v277
      %v279 = vadd.f32 %v268, %v278
      %280 = vset.pattern.permute.xlu0 6
      %281 = vperm.xlu0 %280, %v191
      %v282 = vpop.permute.xlu0 %281
      %v284 = vlaneseq
      %v285 = vshrl.u32 %v284, 7
      %v286 = vsub.s32 6, %v285
      %v287 = vrot.slane %v192, %v286
      %v288 = vsub.f32 %v282, %v287
      %v289 = vand.u32 2147483647, %v288
      %v290 = vadd.f32 %v279, %v289
      %291 = vset.pattern.permute.xlu0 7
      %292 = vperm.xlu0 %291, %v191
      %v293 = vpop.permute.xlu0 %292
      %v295 = vlaneseq
      %v296 = vshrl.u32 %v295, 7
      %v297 = vsub.s32 7, %v296
      %v298 = vrot.slane %v192, %v297
      %v299 = vsub.f32 %v293, %v298
      %v300 = vand.u32 2147483647, %v299
      %v301 = vadd.f32 %v290, %v300
      %v302 = vsub.f32 0.0, %v301
      %v303 = vmul.f32 %v302, 1.442695
      %v304 = vpow.pop %v303
      %v305 = vsel %vm213, 1, 0
      %vm306 = vcmp.eq.s32.totalorder %v305, 1
      %v307 = vsel %vm306, %v304, 0.0
      %v308 = vld [vmem:[#allocation2] sm:$0xff]
      %v309 = vadd.f32 %v308, %v307
      %vm310 = vcmask 130048
      %311 = vst.msk [vmem:[#allocation2] sm:$0xff] %vm310, %v309
      %312 = vset.pattern.permute.xlu0 8
      %313 = vperm.xlu0 %312, %v191
      %v314 = vpop.permute.xlu0 %313
      %v316 = vlaneseq
      %v317 = vshrl.u32 %v316, 7
      %v318 = vsub.s32 0, %v317
      %v319 = vrot.slane %v193, %v318
      %v320 = vsub.f32 %v314, %v319
      %v321 = vand.u32 2147483647, %v320
      %322 = vset.pattern.permute.xlu0 9
      %323 = vperm.xlu0 %322, %v191
      %v324 = vpop.permute.xlu0 %323
      %v326 = vlaneseq
      %v327 = vshrl.u32 %v326, 7
      %v328 = vsub.s32 1, %v327
      %v329 = vrot.slane %v193, %v328
      %v330 = vsub.f32 %v324, %v329
      %v331 = vand.u32 2147483647, %v330
      %v332 = vadd.f32 %v321, %v331
      %333 = vset.pattern.permute.xlu0 10
      %334 = vperm.xlu0 %333, %v191
      %v335 = vpop.permute.xlu0 %334
      %v337 = vlaneseq
      %v338 = vshrl.u32 %v337, 7
      %v339 = vsub.s32 2, %v338
      %v340 = vrot.slane %v193, %v339
      %v341 = vsub.f32 %v335, %v340
      %v342 = vand.u32 2147483647, %v341
      %v343 = vadd.f32 %v332, %v342
      %344 = vset.pattern.permute.xlu0 11
      %345 = vperm.xlu0 %344, %v191
      %v346 = vpop.permute.xlu0 %345
      %v348 = vlaneseq
      %v349 = vshrl.u32 %v348, 7
      %v350 = vsub.s32 3, %v349
      %v351 = vrot.slane %v193, %v350
      %v352 = vsub.f32 %v346, %v351
      %v353 = vand.u32 2147483647, %v352
      %v354 = vadd.f32 %v343, %v353
      %355 = vset.pattern.permute.xlu0 12
      %356 = vperm.xlu0 %355, %v191
      %v357 = vpop.permute.xlu0 %356
      %v359 = vlaneseq
      %v360 = vshrl.u32 %v359, 7
      %v361 = vsub.s32 4, %v360
      %v362 = vrot.slane %v193, %v361
      %v363 = vsub.f32 %v357, %v362
      %v364 = vand.u32 2147483647, %v363
      %v365 = vadd.f32 %v354, %v364
      %366 = vset.pattern.permute.xlu0 13
      %367 = vperm.xlu0 %366, %v191
      %v368 = vpop.permute.xlu0 %367
      %v370 = vlaneseq
      %v371 = vshrl.u32 %v370, 7
      %v372 = vsub.s32 5, %v371
      %v373 = vrot.slane %v193, %v372
      %v374 = vsub.f32 %v368, %v373
      %v375 = vand.u32 2147483647, %v374
      %v376 = vadd.f32 %v365, %v375
      %377 = vset.pattern.permute.xlu0 14
      %378 = vperm.xlu0 %377, %v191
      %v379 = vpop.permute.xlu0 %378
      %v381 = vlaneseq
      %v382 = vshrl.u32 %v381, 7
      %v383 = vsub.s32 6, %v382
      %v384 = vrot.slane %v193, %v383
      %v385 = vsub.f32 %v379, %v384
      %v386 = vand.u32 2147483647, %v385
      %v387 = vadd.f32 %v376, %v386
      %388 = vset.pattern.permute.xlu0 15
      %389 = vperm.xlu0 %388, %v191
      %v390 = vpop.permute.xlu0 %389
      %v392 = vlaneseq
      %v393 = vshrl.u32 %v392, 7
      %v394 = vsub.s32 7, %v393
      %v395 = vrot.slane %v193, %v394
      %v396 = vsub.f32 %v390, %v395
      %v397 = vand.u32 2147483647, %v396
      %v398 = vadd.f32 %v387, %v397
      %v399 = vsub.f32 0.0, %v398
      %v400 = vmul.f32 %v399, 1.442695
      %v401 = vpow.pop %v400
      %v402 = vsel %vm306, %v401, 0.0
      %s403 = scalar_lea.vmem [#allocation2], 8
      %v404 = vld [vmem:[%s403] sm:$0xff]
      %v405 = vadd.f32 %v404, %v402
      %406 = vst.msk [vmem:[%s403] sm:$0xff] %vm310, %v405
      %407 = vset.pattern.permute.xlu0 16
      %408 = vperm.xlu0 %407, %v191
      %v409 = vpop.permute.xlu0 %408
      %v411 = vlaneseq
      %v412 = vshrl.u32 %v411, 7
      %v413 = vsub.s32 0, %v412
      %v414 = vrot.slane %v194, %v413
      %v415 = vsub.f32 %v409, %v414
      %v416 = vand.u32 2147483647, %v415
      %417 = vset.pattern.permute.xlu0 17
      %418 = vperm.xlu0 %417, %v191
      %v419 = vpop.permute.xlu0 %418
      %v421 = vlaneseq
      %v422 = vshrl.u32 %v421, 7
      %v423 = vsub.s32 1, %v422
      %v424 = vrot.slane %v194, %v423
      %v425 = vsub.f32 %v419, %v424
      %v426 = vand.u32 2147483647, %v425
      %v427 = vadd.f32 %v416, %v426
      %428 = vset.pattern.permute.xlu0 18
      %429 = vperm.xlu0 %428, %v191
      %v430 = vpop.permute.xlu0 %429
      %v432 = vlaneseq
      %v433 = vshrl.u32 %v432, 7
      %v434 = vsub.s32 2, %v433
      %v435 = vrot.slane %v194, %v434
      %v436 = vsub.f32 %v430, %v435
      %v437 = vand.u32 2147483647, %v436
      %v438 = vadd.f32 %v427, %v437
      %439 = vset.pattern.permute.xlu0 19
      %440 = vperm.xlu0 %439, %v191
      %v441 = vpop.permute.xlu0 %440
      %v443 = vlaneseq
      %v444 = vshrl.u32 %v443, 7
      %v445 = vsub.s32 3, %v444
      %v446 = vrot.slane %v194, %v445
      %v447 = vsub.f32 %v441, %v446
      %v448 = vand.u32 2147483647, %v447
      %v449 = vadd.f32 %v438, %v448
      %450 = vset.pattern.permute.xlu0 20
      %451 = vperm.xlu0 %450, %v191
      %v452 = vpop.permute.xlu0 %451
      %v454 = vlaneseq
      %v455 = vshrl.u32 %v454, 7
      %v456 = vsub.s32 4, %v455
      %v457 = vrot.slane %v194, %v456
      %v458 = vsub.f32 %v452, %v457
      %v459 = vand.u32 2147483647, %v458
      %v460 = vadd.f32 %v449, %v459
      %461 = vset.pattern.permute.xlu0 21
      %462 = vperm.xlu0 %461, %v191
      %v463 = vpop.permute.xlu0 %462
      %v465 = vlaneseq
      %v466 = vshrl.u32 %v465, 7
      %v467 = vsub.s32 5, %v466
      %v468 = vrot.slane %v194, %v467
      %v469 = vsub.f32 %v463, %v468
      %v470 = vand.u32 2147483647, %v469
      %v471 = vadd.f32 %v460, %v470
      %472 = vset.pattern.permute.xlu0 22
      %473 = vperm.xlu0 %472, %v191
      %v474 = vpop.permute.xlu0 %473
      %v476 = vlaneseq
      %v477 = vshrl.u32 %v476, 7
      %v478 = vsub.s32 6, %v477
      %v479 = vrot.slane %v194, %v478
      %v480 = vsub.f32 %v474, %v479
      %v481 = vand.u32 2147483647, %v480
      %v482 = vadd.f32 %v471, %v481
      %483 = vset.pattern.permute.xlu0 23
      %484 = vperm.xlu0 %483, %v191
      %v485 = vpop.permute.xlu0 %484
      %v487 = vlaneseq
      %v488 = vshrl.u32 %v487, 7
      %v489 = vsub.s32 7, %v488
      %v490 = vrot.slane %v194, %v489
      %v491 = vsub.f32 %v485, %v490
      %v492 = vand.u32 2147483647, %v491
      %v493 = vadd.f32 %v482, %v492
      %v494 = vsub.f32 0.0, %v493
      %v495 = vmul.f32 %v494, 1.442695
      %v496 = vpow.pop %v495
      %v497 = vsel %vm306, %v496, 0.0
      %s498 = scalar_lea.vmem [#allocation2], 16
      %v499 = vld [vmem:[%s498] sm:$0xff]
      %v500 = vadd.f32 %v499, %v497
      %501 = vst.msk [vmem:[%s498] sm:$0xff] %vm310, %v500
      %502 = vset.pattern.permute.xlu0 24
      %503 = vperm.xlu0 %502, %v191
      %v504 = vpop.permute.xlu0 %503
      %v506 = vlaneseq
      %v507 = vshrl.u32 %v506, 7
      %v508 = vsub.s32 0, %v507
      %v509 = vrot.slane %v195, %v508
      %v510 = vsub.f32 %v504, %v509
      %v511 = vand.u32 2147483647, %v510
      %512 = vset.pattern.permute.xlu0 25
      %513 = vperm.xlu0 %512, %v191
      %v514 = vpop.permute.xlu0 %513
      %v516 = vlaneseq
      %v517 = vshrl.u32 %v516, 7
      %v518 = vsub.s32 1, %v517
      %v519 = vrot.slane %v195, %v518
      %v520 = vsub.f32 %v514, %v519
      %v521 = vand.u32 2147483647, %v520
      %v522 = vadd.f32 %v511, %v521
      %523 = vset.pattern.permute.xlu0 26
      %524 = vperm.xlu0 %523, %v191
      %v525 = vpop.permute.xlu0 %524
      %v527 = vlaneseq
      %v528 = vshrl.u32 %v527, 7
      %v529 = vsub.s32 2, %v528
      %v530 = vrot.slane %v195, %v529
      %v531 = vsub.f32 %v525, %v530
      %v532 = vand.u32 2147483647, %v531
      %v533 = vadd.f32 %v522, %v532
      %534 = vset.pattern.permute.xlu0 27
      %535 = vperm.xlu0 %534, %v191
      %v536 = vpop.permute.xlu0 %535
      %v538 = vlaneseq
      %v539 = vshrl.u32 %v538, 7
      %v540 = vsub.s32 3, %v539
      %v541 = vrot.slane %v195, %v540
      %v542 = vsub.f32 %v536, %v541
      %v543 = vand.u32 2147483647, %v542
      %v544 = vadd.f32 %v533, %v543
      %545 = vset.pattern.permute.xlu0 28
      %546 = vperm.xlu0 %545, %v191
      %v547 = vpop.permute.xlu0 %546
      %v549 = vlaneseq
      %v550 = vshrl.u32 %v549, 7
      %v551 = vsub.s32 4, %v550
      %v552 = vrot.slane %v195, %v551
      %v553 = vsub.f32 %v547, %v552
      %v554 = vand.u32 2147483647, %v553
      %v555 = vadd.f32 %v544, %v554
      %556 = vset.pattern.permute.xlu0 29
      %557 = vperm.xlu0 %556, %v191
      %v558 = vpop.permute.xlu0 %557
      %v560 = vlaneseq
      %v561 = vshrl.u32 %v560, 7
      %v562 = vsub.s32 5, %v561
      %v563 = vrot.slane %v195, %v562
      %v564 = vsub.f32 %v558, %v563
      %v565 = vand.u32 2147483647, %v564
      %v566 = vadd.f32 %v555, %v565
      %567 = vset.pattern.permute.xlu0 30
      %568 = vperm.xlu0 %567, %v191
      %v569 = vpop.permute.xlu0 %568
      %v571 = vlaneseq
      %v572 = vshrl.u32 %v571, 7
      %v573 = vsub.s32 6, %v572
      %v574 = vrot.slane %v195, %v573
      %v575 = vsub.f32 %v569, %v574
      %v576 = vand.u32 2147483647, %v575
      %v577 = vadd.f32 %v566, %v576
      %578 = vset.pattern.permute.xlu0 31
      %579 = vperm.xlu0 %578, %v191
      %v580 = vpop.permute.xlu0 %579
      %v582 = vlaneseq
      %v583 = vshrl.u32 %v582, 7
      %v584 = vsub.s32 7, %v583
      %v585 = vrot.slane %v195, %v584
      %v586 = vsub.f32 %v580, %v585
      %v587 = vand.u32 2147483647, %v586
      %v588 = vadd.f32 %v577, %v587
      %v589 = vsub.f32 0.0, %v588
      %v590 = vmul.f32 %v589, 1.442695
      %v591 = vpow.pop %v590
      %v592 = vsel %vm306, %v591, 0.0
      %s593 = scalar_lea.vmem [#allocation2], 24
      %v594 = vld [vmem:[%s593] sm:$0xff]
      %v595 = vadd.f32 %v594, %v592
      %596 = vst.msk [vmem:[%s593] sm:$0xff] %vm310, %v595
      %597 = vset.pattern.permute.xlu0 32
      %598 = vperm.xlu0 %597, %v191
      %v599 = vpop.permute.xlu0 %598
      %v601 = vlaneseq
      %v602 = vshrl.u32 %v601, 7
      %v603 = vsub.s32 0, %v602
      %v604 = vrot.slane %v196, %v603
      %v605 = vsub.f32 %v599, %v604
      %v606 = vand.u32 2147483647, %v605
      %607 = vset.pattern.permute.xlu0 33
      %608 = vperm.xlu0 %607, %v191
      %v609 = vpop.permute.xlu0 %608
      %v611 = vlaneseq
      %v612 = vshrl.u32 %v611, 7
      %v613 = vsub.s32 1, %v612
      %v614 = vrot.slane %v196, %v613
      %v615 = vsub.f32 %v609, %v614
      %v616 = vand.u32 2147483647, %v615
      %v617 = vadd.f32 %v606, %v616
      %618 = vset.pattern.permute.xlu0 34
      %619 = vperm.xlu0 %618, %v191
      %v620 = vpop.permute.xlu0 %619
      %v622 = vlaneseq
      %v623 = vshrl.u32 %v622, 7
      %v624 = vsub.s32 2, %v623
      %v625 = vrot.slane %v196, %v624
      %v626 = vsub.f32 %v620, %v625
      %v627 = vand.u32 2147483647, %v626
      %v628 = vadd.f32 %v617, %v627
      %629 = vset.pattern.permute.xlu0 35
      %630 = vperm.xlu0 %629, %v191
      %v631 = vpop.permute.xlu0 %630
      %v633 = vlaneseq
      %v634 = vshrl.u32 %v633, 7
      %v635 = vsub.s32 3, %v634
      %v636 = vrot.slane %v196, %v635
      %v637 = vsub.f32 %v631, %v636
      %v638 = vand.u32 2147483647, %v637
      %v639 = vadd.f32 %v628, %v638
      %640 = vset.pattern.permute.xlu0 36
      %641 = vperm.xlu0 %640, %v191
      %v642 = vpop.permute.xlu0 %641
      %v644 = vlaneseq
      %v645 = vshrl.u32 %v644, 7
      %v646 = vsub.s32 4, %v645
      %v647 = vrot.slane %v196, %v646
      %v648 = vsub.f32 %v642, %v647
      %v649 = vand.u32 2147483647, %v648
      %v650 = vadd.f32 %v639, %v649
      %651 = vset.pattern.permute.xlu0 37
      %652 = vperm.xlu0 %651, %v191
      %v653 = vpop.permute.xlu0 %652
      %v655 = vlaneseq
      %v656 = vshrl.u32 %v655, 7
      %v657 = vsub.s32 5, %v656
      %v658 = vrot.slane %v196, %v657
      %v659 = vsub.f32 %v653, %v658
      %v660 = vand.u32 2147483647, %v659
      %v661 = vadd.f32 %v650, %v660
      %662 = vset.pattern.permute.xlu0 38
      %663 = vperm.xlu0 %662, %v191
      %v664 = vpop.permute.xlu0 %663
      %v666 = vlaneseq
      %v667 = vshrl.u32 %v666, 7
      %v668 = vsub.s32 6, %v667
      %v669 = vrot.slane %v196, %v668
      %v670 = vsub.f32 %v664, %v669
      %v671 = vand.u32 2147483647, %v670
      %v672 = vadd.f32 %v661, %v671
      %673 = vset.pattern.permute.xlu0 39
      %674 = vperm.xlu0 %673, %v191
      %v675 = vpop.permute.xlu0 %674
      %v677 = vlaneseq
      %v678 = vshrl.u32 %v677, 7
      %v679 = vsub.s32 7, %v678
      %v680 = vrot.slane %v196, %v679
      %v681 = vsub.f32 %v675, %v680
      %v682 = vand.u32 2147483647, %v681
      %v683 = vadd.f32 %v672, %v682
      %v684 = vsub.f32 0.0, %v683
      %v685 = vmul.f32 %v684, 1.442695
      %v686 = vpow.pop %v685
      %v687 = vsel %vm306, %v686, 0.0
      %s688 = scalar_lea.vmem [#allocation2], 32
      %v689 = vld [vmem:[%s688] sm:$0xff]
      %v690 = vadd.f32 %v689, %v687
      %691 = vst.msk [vmem:[%s688] sm:$0xff] %vm310, %v690
      %692 = vset.pattern.permute.xlu0 40
      %693 = vperm.xlu0 %692, %v191
      %v694 = vpop.permute.xlu0 %693
      %v696 = vlaneseq
      %v697 = vshrl.u32 %v696, 7
      %v698 = vsub.s32 0, %v697
      %v699 = vrot.slane %v197, %v698
      %v700 = vsub.f32 %v694, %v699
      %v701 = vand.u32 2147483647, %v700
      %702 = vset.pattern.permute.xlu0 41
      %703 = vperm.xlu0 %702, %v191
      %v704 = vpop.permute.xlu0 %703
      %v706 = vlaneseq
      %v707 = vshrl.u32 %v706, 7
      %v708 = vsub.s32 1, %v707
      %v709 = vrot.slane %v197, %v708
      %v710 = vsub.f32 %v704, %v709
      %v711 = vand.u32 2147483647, %v710
      %v712 = vadd.f32 %v701, %v711
      %713 = vset.pattern.permute.xlu0 42
      %714 = vperm.xlu0 %713, %v191
      %v715 = vpop.permute.xlu0 %714
      %v717 = vlaneseq
      %v718 = vshrl.u32 %v717, 7
      %v719 = vsub.s32 2, %v718
      %v720 = vrot.slane %v197, %v719
      %v721 = vsub.f32 %v715, %v720
      %v722 = vand.u32 2147483647, %v721
      %v723 = vadd.f32 %v712, %v722
      %724 = vset.pattern.permute.xlu0 43
      %725 = vperm.xlu0 %724, %v191
      %v726 = vpop.permute.xlu0 %725
      %v728 = vlaneseq
      %v729 = vshrl.u32 %v728, 7
      %v730 = vsub.s32 3, %v729
      %v731 = vrot.slane %v197, %v730
      %v732 = vsub.f32 %v726, %v731
      %v733 = vand.u32 2147483647, %v732
      %v734 = vadd.f32 %v723, %v733
      %735 = vset.pattern.permute.xlu0 44
      %736 = vperm.xlu0 %735, %v191
      %v737 = vpop.permute.xlu0 %736
      %v739 = vlaneseq
      %v740 = vshrl.u32 %v739, 7
      %v741 = vsub.s32 4, %v740
      %v742 = vrot.slane %v197, %v741
      %v743 = vsub.f32 %v737, %v742
      %v744 = vand.u32 2147483647, %v743
      %v745 = vadd.f32 %v734, %v744
      %746 = vset.pattern.permute.xlu0 45
      %747 = vperm.xlu0 %746, %v191
      %v748 = vpop.permute.xlu0 %747
      %v750 = vlaneseq
      %v751 = vshrl.u32 %v750, 7
      %v752 = vsub.s32 5, %v751
      %v753 = vrot.slane %v197, %v752
      %v754 = vsub.f32 %v748, %v753
      %v755 = vand.u32 2147483647, %v754
      %v756 = vadd.f32 %v745, %v755
      %757 = vset.pattern.permute.xlu0 46
      %758 = vperm.xlu0 %757, %v191
      %v759 = vpop.permute.xlu0 %758
      %v761 = vlaneseq
      %v762 = vshrl.u32 %v761, 7
      %v763 = vsub.s32 6, %v762
      %v764 = vrot.slane %v197, %v763
      %v765 = vsub.f32 %v759, %v764
      %v766 = vand.u32 2147483647, %v765
      %v767 = vadd.f32 %v756, %v766
      %768 = vset.pattern.permute.xlu0 47
      %769 = vperm.xlu0 %768, %v191
      %v770 = vpop.permute.xlu0 %769
      %v772 = vlaneseq
      %v773 = vshrl.u32 %v772, 7
      %v774 = vsub.s32 7, %v773
      %v775 = vrot.slane %v197, %v774
      %v776 = vsub.f32 %v770, %v775
      %v777 = vand.u32 2147483647, %v776
      %v778 = vadd.f32 %v767, %v777
      %v779 = vsub.f32 0.0, %v778
      %v780 = vmul.f32 %v779, 1.442695
      %v781 = vpow.pop %v780
      %v782 = vsel %vm306, %v781, 0.0
      %s783 = scalar_lea.vmem [#allocation2], 40
      %v784 = vld [vmem:[%s783] sm:$0xff]
      %v785 = vadd.f32 %v784, %v782
      %786 = vst.msk [vmem:[%s783] sm:$0xff] %vm310, %v785
      %787 = vset.pattern.permute.xlu0 48
      %788 = vperm.xlu0 %787, %v191
      %v789 = vpop.permute.xlu0 %788
      %v791 = vlaneseq
      %v792 = vshrl.u32 %v791, 7
      %v793 = vsub.s32 0, %v792
      %v794 = vrot.slane %v198, %v793
      %v795 = vsub.f32 %v789, %v794
      %v796 = vand.u32 2147483647, %v795
      %797 = vset.pattern.permute.xlu0 49
      %798 = vperm.xlu0 %797, %v191
      %v799 = vpop.permute.xlu0 %798
      %v801 = vlaneseq
      %v802 = vshrl.u32 %v801, 7
      %v803 = vsub.s32 1, %v802
      %v804 = vrot.slane %v198, %v803
      %v805 = vsub.f32 %v799, %v804
      %v806 = vand.u32 2147483647, %v805
      %v807 = vadd.f32 %v796, %v806
      %808 = vset.pattern.permute.xlu0 50
      %809 = vperm.xlu0 %808, %v191
      %v810 = vpop.permute.xlu0 %809
      %v812 = vlaneseq
      %v813 = vshrl.u32 %v812, 7
      %v814 = vsub.s32 2, %v813
      %v815 = vrot.slane %v198, %v814
      %v816 = vsub.f32 %v810, %v815
      %v817 = vand.u32 2147483647, %v816
      %v818 = vadd.f32 %v807, %v817
      %819 = vset.pattern.permute.xlu0 51
      %820 = vperm.xlu0 %819, %v191
      %v821 = vpop.permute.xlu0 %820
      %v823 = vlaneseq
      %v824 = vshrl.u32 %v823, 7
      %v825 = vsub.s32 3, %v824
      %v826 = vrot.slane %v198, %v825
      %v827 = vsub.f32 %v821, %v826
      %v828 = vand.u32 2147483647, %v827
      %v829 = vadd.f32 %v818, %v828
      %830 = vset.pattern.permute.xlu0 52
      %831 = vperm.xlu0 %830, %v191
      %v832 = vpop.permute.xlu0 %831
      %v834 = vlaneseq
      %v835 = vshrl.u32 %v834, 7
      %v836 = vsub.s32 4, %v835
      %v837 = vrot.slane %v198, %v836
      %v838 = vsub.f32 %v832, %v837
      %v839 = vand.u32 2147483647, %v838
      %v840 = vadd.f32 %v829, %v839
      %841 = vset.pattern.permute.xlu0 53
      %842 = vperm.xlu0 %841, %v191
      %v843 = vpop.permute.xlu0 %842
      %v845 = vlaneseq
      %v846 = vshrl.u32 %v845, 7
      %v847 = vsub.s32 5, %v846
      %v848 = vrot.slane %v198, %v847
      %v849 = vsub.f32 %v843, %v848
      %v850 = vand.u32 2147483647, %v849
      %v851 = vadd.f32 %v840, %v850
      %852 = vset.pattern.permute.xlu0 54
      %853 = vperm.xlu0 %852, %v191
      %v854 = vpop.permute.xlu0 %853
      %v856 = vlaneseq
      %v857 = vshrl.u32 %v856, 7
      %v858 = vsub.s32 6, %v857
      %v859 = vrot.slane %v198, %v858
      %v860 = vsub.f32 %v854, %v859
      %v861 = vand.u32 2147483647, %v860
      %v862 = vadd.f32 %v851, %v861
      %863 = vset.pattern.permute.xlu0 55
      %864 = vperm.xlu0 %863, %v191
      %v865 = vpop.permute.xlu0 %864
      %v867 = vlaneseq
      %v868 = vshrl.u32 %v867, 7
      %v869 = vsub.s32 7, %v868
      %v870 = vrot.slane %v198, %v869
      %v871 = vsub.f32 %v865, %v870
      %v872 = vand.u32 2147483647, %v871
      %v873 = vadd.f32 %v862, %v872
      %v874 = vsub.f32 0.0, %v873
      %v875 = vmul.f32 %v874, 1.442695
      %v876 = vpow.pop %v875
      %v877 = vsel %vm306, %v876, 0.0
      %s878 = scalar_lea.vmem [#allocation2], 48
      %v879 = vld [vmem:[%s878] sm:$0xff]
      %v880 = vadd.f32 %v879, %v877
      %881 = vst.msk [vmem:[%s878] sm:$0xff] %vm310, %v880
      %882 = vset.pattern.permute.xlu0 56
      %883 = vperm.xlu0 %882, %v191
      %v884 = vpop.permute.xlu0 %883
      %v886 = vlaneseq
      %v887 = vshrl.u32 %v886, 7
      %v888 = vsub.s32 0, %v887
      %v889 = vrot.slane %v199, %v888
      %v890 = vsub.f32 %v884, %v889
      %v891 = vand.u32 2147483647, %v890
      %892 = vset.pattern.permute.xlu0 57
      %893 = vperm.xlu0 %892, %v191
      %v894 = vpop.permute.xlu0 %893
      %v896 = vlaneseq
      %v897 = vshrl.u32 %v896, 7
      %v898 = vsub.s32 1, %v897
      %v899 = vrot.slane %v199, %v898
      %v900 = vsub.f32 %v894, %v899
      %v901 = vand.u32 2147483647, %v900
      %v902 = vadd.f32 %v891, %v901
      %903 = vset.pattern.permute.xlu0 58
      %904 = vperm.xlu0 %903, %v191
      %v905 = vpop.permute.xlu0 %904
      %v907 = vlaneseq
      %v908 = vshrl.u32 %v907, 7
      %v909 = vsub.s32 2, %v908
      %v910 = vrot.slane %v199, %v909
      %v911 = vsub.f32 %v905, %v910
      %v912 = vand.u32 2147483647, %v911
      %v913 = vadd.f32 %v902, %v912
      %914 = vset.pattern.permute.xlu0 59
      %915 = vperm.xlu0 %914, %v191
      %v916 = vpop.permute.xlu0 %915
      %v918 = vlaneseq
      %v919 = vshrl.u32 %v918, 7
      %v920 = vsub.s32 3, %v919
      %v921 = vrot.slane %v199, %v920
      %v922 = vsub.f32 %v916, %v921
      %v923 = vand.u32 2147483647, %v922
      %v924 = vadd.f32 %v913, %v923
      %925 = vset.pattern.permute.xlu0 60
      %926 = vperm.xlu0 %925, %v191
      %v927 = vpop.permute.xlu0 %926
      %v929 = vlaneseq
      %v930 = vshrl.u32 %v929, 7
      %v931 = vsub.s32 4, %v930
      %v932 = vrot.slane %v199, %v931
      %v933 = vsub.f32 %v927, %v932
      %v934 = vand.u32 2147483647, %v933
      %v935 = vadd.f32 %v924, %v934
      %936 = vset.pattern.permute.xlu0 61
      %937 = vperm.xlu0 %936, %v191
      %v938 = vpop.permute.xlu0 %937
      %v940 = vlaneseq
      %v941 = vshrl.u32 %v940, 7
      %v942 = vsub.s32 5, %v941
      %v943 = vrot.slane %v199, %v942
      %v944 = vsub.f32 %v938, %v943
      %v945 = vand.u32 2147483647, %v944
      %v946 = vadd.f32 %v935, %v945
      %947 = vset.pattern.permute.xlu0 62
      %948 = vperm.xlu0 %947, %v191
      %v949 = vpop.permute.xlu0 %948
      %v951 = vlaneseq
      %v952 = vshrl.u32 %v951, 7
      %v953 = vsub.s32 6, %v952
      %v954 = vrot.slane %v199, %v953
      %v955 = vsub.f32 %v949, %v954
      %v956 = vand.u32 2147483647, %v955
      %v957 = vadd.f32 %v946, %v956
      %958 = vset.pattern.permute.xlu0 63
      %959 = vperm.xlu0 %958, %v191
      %v960 = vpop.permute.xlu0 %959
      %v962 = vlaneseq
      %v963 = vshrl.u32 %v962, 7
      %v964 = vsub.s32 7, %v963
      %v965 = vrot.slane %v199, %v964
      %v966 = vsub.f32 %v960, %v965
      %v967 = vand.u32 2147483647, %v966
      %v968 = vadd.f32 %v957, %v967
      %v969 = vsub.f32 0.0, %v968
      %v970 = vmul.f32 %v969, 1.442695
      %v971 = vpow.pop %v970
      %v972 = vsel %vm306, %v971, 0.0
      %s973 = scalar_lea.vmem [#allocation2], 56
      %v974 = vld [vmem:[%s973] sm:$0xff]
      %v975 = vadd.f32 %v974, %v972
      %976 = vst.msk [vmem:[%s973] sm:$0xff] %vm310, %v975
      %977 = vset.pattern.permute.xlu0 64
      %978 = vperm.xlu0 %977, %v191
      %v979 = vpop.permute.xlu0 %978
      %v981 = vlaneseq
      %v982 = vshrl.u32 %v981, 7
      %v983 = vsub.s32 0, %v982
      %v984 = vrot.slane %v200, %v983
      %v985 = vsub.f32 %v979, %v984
      %v986 = vand.u32 2147483647, %v985
      %987 = vset.pattern.permute.xlu0 65
      %988 = vperm.xlu0 %987, %v191
      %v989 = vpop.permute.xlu0 %988
      %v991 = vlaneseq
      %v992 = vshrl.u32 %v991, 7
      %v993 = vsub.s32 1, %v992
      %v994 = vrot.slane %v200, %v993
      %v995 = vsub.f32 %v989, %v994
      %v996 = vand.u32 2147483647, %v995
      %v997 = vadd.f32 %v986, %v996
      %998 = vset.pattern.permute.xlu0 66
      %999 = vperm.xlu0 %998, %v191
      %v1000 = vpop.permute.xlu0 %999
      %v1002 = vlaneseq
      %v1003 = vshrl.u32 %v1002, 7
      %v1004 = vsub.s32 2, %v1003
      %v1005 = vrot.slane %v200, %v1004
      %v1006 = vsub.f32 %v1000, %v1005
      %v1007 = vand.u32 2147483647, %v1006
      %v1008 = vadd.f32 %v997, %v1007
      %1009 = vset.pattern.permute.xlu0 67
      %1010 = vperm.xlu0 %1009, %v191
      %v1011 = vpop.permute.xlu0 %1010
      %v1013 = vlaneseq
      %v1014 = vshrl.u32 %v1013, 7
      %v1015 = vsub.s32 3, %v1014
      %v1016 = vrot.slane %v200, %v1015
      %v1017 = vsub.f32 %v1011, %v1016
      %v1018 = vand.u32 2147483647, %v1017
      %v1019 = vadd.f32 %v1008, %v1018
      %1020 = vset.pattern.permute.xlu0 68
      %1021 = vperm.xlu0 %1020, %v191
      %v1022 = vpop.permute.xlu0 %1021
      %v1024 = vlaneseq
      %v1025 = vshrl.u32 %v1024, 7
      %v1026 = vsub.s32 4, %v1025
      %v1027 = vrot.slane %v200, %v1026
      %v1028 = vsub.f32 %v1022, %v1027
      %v1029 = vand.u32 2147483647, %v1028
      %v1030 = vadd.f32 %v1019, %v1029
      %1031 = vset.pattern.permute.xlu0 69
      %1032 = vperm.xlu0 %1031, %v191
      %v1033 = vpop.permute.xlu0 %1032
      %v1035 = vlaneseq
      %v1036 = vshrl.u32 %v1035, 7
      %v1037 = vsub.s32 5, %v1036
      %v1038 = vrot.slane %v200, %v1037
      %v1039 = vsub.f32 %v1033, %v1038
      %v1040 = vand.u32 2147483647, %v1039
      %v1041 = vadd.f32 %v1030, %v1040
      %1042 = vset.pattern.permute.xlu0 70
      %1043 = vperm.xlu0 %1042, %v191
      %v1044 = vpop.permute.xlu0 %1043
      %v1046 = vlaneseq
      %v1047 = vshrl.u32 %v1046, 7
      %v1048 = vsub.s32 6, %v1047
      %v1049 = vrot.slane %v200, %v1048
      %v1050 = vsub.f32 %v1044, %v1049
      %v1051 = vand.u32 2147483647, %v1050
      %v1052 = vadd.f32 %v1041, %v1051
      %1053 = vset.pattern.permute.xlu0 71
      %1054 = vperm.xlu0 %1053, %v191
      %v1055 = vpop.permute.xlu0 %1054
      %v1057 = vlaneseq
      %v1058 = vshrl.u32 %v1057, 7
      %v1059 = vsub.s32 7, %v1058
      %v1060 = vrot.slane %v200, %v1059
      %v1061 = vsub.f32 %v1055, %v1060
      %v1062 = vand.u32 2147483647, %v1061
      %v1063 = vadd.f32 %v1052, %v1062
      %v1064 = vsub.f32 0.0, %v1063
      %v1065 = vmul.f32 %v1064, 1.442695
      %v1066 = vpow.pop %v1065
      %v1067 = vsel %vm306, %v1066, 0.0
      %s1068 = scalar_lea.vmem [#allocation2], 64
      %v1069 = vld [vmem:[%s1068] sm:$0xff]
      %v1070 = vadd.f32 %v1069, %v1067
      %1071 = vst.msk [vmem:[%s1068] sm:$0xff] %vm310, %v1070
      %1072 = vset.pattern.permute.xlu0 72
      %1073 = vperm.xlu0 %1072, %v191
      %v1074 = vpop.permute.xlu0 %1073
      %v1076 = vlaneseq
      %v1077 = vshrl.u32 %v1076, 7
      %v1078 = vsub.s32 0, %v1077
      %v1079 = vrot.slane %v201, %v1078
      %v1080 = vsub.f32 %v1074, %v1079
      %v1081 = vand.u32 2147483647, %v1080
      %1082 = vset.pattern.permute.xlu0 73
      %1083 = vperm.xlu0 %1082, %v191
      %v1084 = vpop.permute.xlu0 %1083
      %v1086 = vlaneseq
      %v1087 = vshrl.u32 %v1086, 7
      %v1088 = vsub.s32 1, %v1087
      %v1089 = vrot.slane %v201, %v1088
      %v1090 = vsub.f32 %v1084, %v1089
      %v1091 = vand.u32 2147483647, %v1090
      %v1092 = vadd.f32 %v1081, %v1091
      %1093 = vset.pattern.permute.xlu0 74
      %1094 = vperm.xlu0 %1093, %v191
      %v1095 = vpop.permute.xlu0 %1094
      %v1097 = vlaneseq
      %v1098 = vshrl.u32 %v1097, 7
      %v1099 = vsub.s32 2, %v1098
      %v1100 = vrot.slane %v201, %v1099
      %v1101 = vsub.f32 %v1095, %v1100
      %v1102 = vand.u32 2147483647, %v1101
      %v1103 = vadd.f32 %v1092, %v1102
      %1104 = vset.pattern.permute.xlu0 75
      %1105 = vperm.xlu0 %1104, %v191
      %v1106 = vpop.permute.xlu0 %1105
      %v1108 = vlaneseq
      %v1109 = vshrl.u32 %v1108, 7
      %v1110 = vsub.s32 3, %v1109
      %v1111 = vrot.slane %v201, %v1110
      %v1112 = vsub.f32 %v1106, %v1111
      %v1113 = vand.u32 2147483647, %v1112
      %v1114 = vadd.f32 %v1103, %v1113
      %1115 = vset.pattern.permute.xlu0 76
      %1116 = vperm.xlu0 %1115, %v191
      %v1117 = vpop.permute.xlu0 %1116
      %v1119 = vlaneseq
      %v1120 = vshrl.u32 %v1119, 7
      %v1121 = vsub.s32 4, %v1120
      %v1122 = vrot.slane %v201, %v1121
      %v1123 = vsub.f32 %v1117, %v1122
      %v1124 = vand.u32 2147483647, %v1123
      %v1125 = vadd.f32 %v1114, %v1124
      %1126 = vset.pattern.permute.xlu0 77
      %1127 = vperm.xlu0 %1126, %v191
      %v1128 = vpop.permute.xlu0 %1127
      %v1130 = vlaneseq
      %v1131 = vshrl.u32 %v1130, 7
      %v1132 = vsub.s32 5, %v1131
      %v1133 = vrot.slane %v201, %v1132
      %v1134 = vsub.f32 %v1128, %v1133
      %v1135 = vand.u32 2147483647, %v1134
      %v1136 = vadd.f32 %v1125, %v1135
      %1137 = vset.pattern.permute.xlu0 78
      %1138 = vperm.xlu0 %1137, %v191
      %v1139 = vpop.permute.xlu0 %1138
      %v1141 = vlaneseq
      %v1142 = vshrl.u32 %v1141, 7
      %v1143 = vsub.s32 6, %v1142
      %v1144 = vrot.slane %v201, %v1143
      %v1145 = vsub.f32 %v1139, %v1144
      %v1146 = vand.u32 2147483647, %v1145
      %v1147 = vadd.f32 %v1136, %v1146
      %1148 = vset.pattern.permute.xlu0 79
      %1149 = vperm.xlu0 %1148, %v191
      %v1150 = vpop.permute.xlu0 %1149
      %v1152 = vlaneseq
      %v1153 = vshrl.u32 %v1152, 7
      %v1154 = vsub.s32 7, %v1153
      %v1155 = vrot.slane %v201, %v1154
      %v1156 = vsub.f32 %v1150, %v1155
      %v1157 = vand.u32 2147483647, %v1156
      %v1158 = vadd.f32 %v1147, %v1157
      %v1159 = vsub.f32 0.0, %v1158
      %v1160 = vmul.f32 %v1159, 1.442695
      %v1161 = vpow.pop %v1160
      %v1162 = vsel %vm306, %v1161, 0.0
      %s1163 = scalar_lea.vmem [#allocation2], 72
      %v1164 = vld [vmem:[%s1163] sm:$0xff]
      %v1165 = vadd.f32 %v1164, %v1162
      %1166 = vst.msk [vmem:[%s1163] sm:$0xff] %vm310, %v1165
      %1167 = vset.pattern.permute.xlu0 80
      %1168 = vperm.xlu0 %1167, %v191
      %v1169 = vpop.permute.xlu0 %1168
      %v1171 = vlaneseq
      %v1172 = vshrl.u32 %v1171, 7
      %v1173 = vsub.s32 0, %v1172
      %v1174 = vrot.slane %v202, %v1173
      %v1175 = vsub.f32 %v1169, %v1174
      %v1176 = vand.u32 2147483647, %v1175
      %1177 = vset.pattern.permute.xlu0 81
      %1178 = vperm.xlu0 %1177, %v191
      %v1179 = vpop.permute.xlu0 %1178
      %v1181 = vlaneseq
      %v1182 = vshrl.u32 %v1181, 7
      %v1183 = vsub.s32 1, %v1182
      %v1184 = vrot.slane %v202, %v1183
      %v1185 = vsub.f32 %v1179, %v1184
      %v1186 = vand.u32 2147483647, %v1185
      %v1187 = vadd.f32 %v1176, %v1186
      %1188 = vset.pattern.permute.xlu0 82
      %1189 = vperm.xlu0 %1188, %v191
      %v1190 = vpop.permute.xlu0 %1189
      %v1192 = vlaneseq
      %v1193 = vshrl.u32 %v1192, 7
      %v1194 = vsub.s32 2, %v1193
      %v1195 = vrot.slane %v202, %v1194
      %v1196 = vsub.f32 %v1190, %v1195
      %v1197 = vand.u32 2147483647, %v1196
      %v1198 = vadd.f32 %v1187, %v1197
      %1199 = vset.pattern.permute.xlu0 83
      %1200 = vperm.xlu0 %1199, %v191
      %v1201 = vpop.permute.xlu0 %1200
      %v1203 = vlaneseq
      %v1204 = vshrl.u32 %v1203, 7
      %v1205 = vsub.s32 3, %v1204
      %v1206 = vrot.slane %v202, %v1205
      %v1207 = vsub.f32 %v1201, %v1206
      %v1208 = vand.u32 2147483647, %v1207
      %v1209 = vadd.f32 %v1198, %v1208
      %1210 = vset.pattern.permute.xlu0 84
      %1211 = vperm.xlu0 %1210, %v191
      %v1212 = vpop.permute.xlu0 %1211
      %v1214 = vlaneseq
      %v1215 = vshrl.u32 %v1214, 7
      %v1216 = vsub.s32 4, %v1215
      %v1217 = vrot.slane %v202, %v1216
      %v1218 = vsub.f32 %v1212, %v1217
      %v1219 = vand.u32 2147483647, %v1218
      %v1220 = vadd.f32 %v1209, %v1219
      %1221 = vset.pattern.permute.xlu0 85
      %1222 = vperm.xlu0 %1221, %v191
      %v1223 = vpop.permute.xlu0 %1222
      %v1225 = vlaneseq
      %v1226 = vshrl.u32 %v1225, 7
      %v1227 = vsub.s32 5, %v1226
      %v1228 = vrot.slane %v202, %v1227
      %v1229 = vsub.f32 %v1223, %v1228
      %v1230 = vand.u32 2147483647, %v1229
      %v1231 = vadd.f32 %v1220, %v1230
      %1232 = vset.pattern.permute.xlu0 86
      %1233 = vperm.xlu0 %1232, %v191
      %v1234 = vpop.permute.xlu0 %1233
      %v1236 = vlaneseq
      %v1237 = vshrl.u32 %v1236, 7
      %v1238 = vsub.s32 6, %v1237
      %v1239 = vrot.slane %v202, %v1238
      %v1240 = vsub.f32 %v1234, %v1239
      %v1241 = vand.u32 2147483647, %v1240
      %v1242 = vadd.f32 %v1231, %v1241
      %1243 = vset.pattern.permute.xlu0 87
      %1244 = vperm.xlu0 %1243, %v191
      %v1245 = vpop.permute.xlu0 %1244
      %v1247 = vlaneseq
      %v1248 = vshrl.u32 %v1247, 7
      %v1249 = vsub.s32 7, %v1248
      %v1250 = vrot.slane %v202, %v1249
      %v1251 = vsub.f32 %v1245, %v1250
      %v1252 = vand.u32 2147483647, %v1251
      %v1253 = vadd.f32 %v1242, %v1252
      %v1254 = vsub.f32 0.0, %v1253
      %v1255 = vmul.f32 %v1254, 1.442695
      %v1256 = vpow.pop %v1255
      %v1257 = vsel %vm306, %v1256, 0.0
      %s1258 = scalar_lea.vmem [#allocation2], 80
      %v1259 = vld [vmem:[%s1258] sm:$0xff]
      %v1260 = vadd.f32 %v1259, %v1257
      %1261 = vst.msk [vmem:[%s1258] sm:$0xff] %vm310, %v1260
      %1262 = vset.pattern.permute.xlu0 88
      %1263 = vperm.xlu0 %1262, %v191
      %v1264 = vpop.permute.xlu0 %1263
      %v1266 = vlaneseq
      %v1267 = vshrl.u32 %v1266, 7
      %v1268 = vsub.s32 0, %v1267
      %v1269 = vrot.slane %v203, %v1268
      %v1270 = vsub.f32 %v1264, %v1269
      %v1271 = vand.u32 2147483647, %v1270
      %1272 = vset.pattern.permute.xlu0 89
      %1273 = vperm.xlu0 %1272, %v191
      %v1274 = vpop.permute.xlu0 %1273
      %v1276 = vlaneseq
      %v1277 = vshrl.u32 %v1276, 7
      %v1278 = vsub.s32 1, %v1277
      %v1279 = vrot.slane %v203, %v1278
      %v1280 = vsub.f32 %v1274, %v1279
      %v1281 = vand.u32 2147483647, %v1280
      %v1282 = vadd.f32 %v1271, %v1281
      %1283 = vset.pattern.permute.xlu0 90
      %1284 = vperm.xlu0 %1283, %v191
      %v1285 = vpop.permute.xlu0 %1284
      %v1287 = vlaneseq
      %v1288 = vshrl.u32 %v1287, 7
      %v1289 = vsub.s32 2, %v1288
      %v1290 = vrot.slane %v203, %v1289
      %v1291 = vsub.f32 %v1285, %v1290
      %v1292 = vand.u32 2147483647, %v1291
      %v1293 = vadd.f32 %v1282, %v1292
      %1294 = vset.pattern.permute.xlu0 91
      %1295 = vperm.xlu0 %1294, %v191
      %v1296 = vpop.permute.xlu0 %1295
      %v1298 = vlaneseq
      %v1299 = vshrl.u32 %v1298, 7
      %v1300 = vsub.s32 3, %v1299
      %v1301 = vrot.slane %v203, %v1300
      %v1302 = vsub.f32 %v1296, %v1301
      %v1303 = vand.u32 2147483647, %v1302
      %v1304 = vadd.f32 %v1293, %v1303
      %1305 = vset.pattern.permute.xlu0 92
      %1306 = vperm.xlu0 %1305, %v191
      %v1307 = vpop.permute.xlu0 %1306
      %v1309 = vlaneseq
      %v1310 = vshrl.u32 %v1309, 7
      %v1311 = vsub.s32 4, %v1310
      %v1312 = vrot.slane %v203, %v1311
      %v1313 = vsub.f32 %v1307, %v1312
      %v1314 = vand.u32 2147483647, %v1313
      %v1315 = vadd.f32 %v1304, %v1314
      %1316 = vset.pattern.permute.xlu0 93
      %1317 = vperm.xlu0 %1316, %v191
      %v1318 = vpop.permute.xlu0 %1317
      %v1320 = vlaneseq
      %v1321 = vshrl.u32 %v1320, 7
      %v1322 = vsub.s32 5, %v1321
      %v1323 = vrot.slane %v203, %v1322
      %v1324 = vsub.f32 %v1318, %v1323
      %v1325 = vand.u32 2147483647, %v1324
      %v1326 = vadd.f32 %v1315, %v1325
      %1327 = vset.pattern.permute.xlu0 94
      %1328 = vperm.xlu0 %1327, %v191
      %v1329 = vpop.permute.xlu0 %1328
      %v1331 = vlaneseq
      %v1332 = vshrl.u32 %v1331, 7
      %v1333 = vsub.s32 6, %v1332
      %v1334 = vrot.slane %v203, %v1333
      %v1335 = vsub.f32 %v1329, %v1334
      %v1336 = vand.u32 2147483647, %v1335
      %v1337 = vadd.f32 %v1326, %v1336
      %1338 = vset.pattern.permute.xlu0 95
      %1339 = vperm.xlu0 %1338, %v191
      %v1340 = vpop.permute.xlu0 %1339
      %v1342 = vlaneseq
      %v1343 = vshrl.u32 %v1342, 7
      %v1344 = vsub.s32 7, %v1343
      %v1345 = vrot.slane %v203, %v1344
      %v1346 = vsub.f32 %v1340, %v1345
      %v1347 = vand.u32 2147483647, %v1346
      %v1348 = vadd.f32 %v1337, %v1347
      %v1349 = vsub.f32 0.0, %v1348
      %v1350 = vmul.f32 %v1349, 1.442695
      %v1351 = vpow.pop %v1350
      %v1352 = vsel %vm306, %v1351, 0.0
      %s1353 = scalar_lea.vmem [#allocation2], 88
      %v1354 = vld [vmem:[%s1353] sm:$0xff]
      %v1355 = vadd.f32 %v1354, %v1352
      %1356 = vst.msk [vmem:[%s1353] sm:$0xff] %vm310, %v1355
      %1357 = vset.pattern.permute.xlu0 96
      %1358 = vperm.xlu0 %1357, %v191
      %v1359 = vpop.permute.xlu0 %1358
      %v1361 = vlaneseq
      %v1362 = vshrl.u32 %v1361, 7
      %v1363 = vsub.s32 0, %v1362
      %v1364 = vrot.slane %v204, %v1363
      %v1365 = vsub.f32 %v1359, %v1364
      %v1366 = vand.u32 2147483647, %v1365
      %1367 = vset.pattern.permute.xlu0 97
      %1368 = vperm.xlu0 %1367, %v191
      %v1369 = vpop.permute.xlu0 %1368
      %v1371 = vlaneseq
      %v1372 = vshrl.u32 %v1371, 7
      %v1373 = vsub.s32 1, %v1372
      %v1374 = vrot.slane %v204, %v1373
      %v1375 = vsub.f32 %v1369, %v1374
      %v1376 = vand.u32 2147483647, %v1375
      %v1377 = vadd.f32 %v1366, %v1376
      %1378 = vset.pattern.permute.xlu0 98
      %1379 = vperm.xlu0 %1378, %v191
      %v1380 = vpop.permute.xlu0 %1379
      %v1382 = vlaneseq
      %v1383 = vshrl.u32 %v1382, 7
      %v1384 = vsub.s32 2, %v1383
      %v1385 = vrot.slane %v204, %v1384
      %v1386 = vsub.f32 %v1380, %v1385
      %v1387 = vand.u32 2147483647, %v1386
      %v1388 = vadd.f32 %v1377, %v1387
      %1389 = vset.pattern.permute.xlu0 99
      %1390 = vperm.xlu0 %1389, %v191
      %v1391 = vpop.permute.xlu0 %1390
      %v1393 = vlaneseq
      %v1394 = vshrl.u32 %v1393, 7
      %v1395 = vsub.s32 3, %v1394
      %v1396 = vrot.slane %v204, %v1395
      %v1397 = vsub.f32 %v1391, %v1396
      %v1398 = vand.u32 2147483647, %v1397
      %v1399 = vadd.f32 %v1388, %v1398
      %1400 = vset.pattern.permute.xlu0 100
      %1401 = vperm.xlu0 %1400, %v191
      %v1402 = vpop.permute.xlu0 %1401
      %v1404 = vlaneseq
      %v1405 = vshrl.u32 %v1404, 7
      %v1406 = vsub.s32 4, %v1405
      %v1407 = vrot.slane %v204, %v1406
      %v1408 = vsub.f32 %v1402, %v1407
      %v1409 = vand.u32 2147483647, %v1408
      %v1410 = vadd.f32 %v1399, %v1409
      %1411 = vset.pattern.permute.xlu0 101
      %1412 = vperm.xlu0 %1411, %v191
      %v1413 = vpop.permute.xlu0 %1412
      %v1415 = vlaneseq
      %v1416 = vshrl.u32 %v1415, 7
      %v1417 = vsub.s32 5, %v1416
      %v1418 = vrot.slane %v204, %v1417
      %v1419 = vsub.f32 %v1413, %v1418
      %v1420 = vand.u32 2147483647, %v1419
      %v1421 = vadd.f32 %v1410, %v1420
      %1422 = vset.pattern.permute.xlu0 102
      %1423 = vperm.xlu0 %1422, %v191
      %v1424 = vpop.permute.xlu0 %1423
      %v1426 = vlaneseq
      %v1427 = vshrl.u32 %v1426, 7
      %v1428 = vsub.s32 6, %v1427
      %v1429 = vrot.slane %v204, %v1428
      %v1430 = vsub.f32 %v1424, %v1429
      %v1431 = vand.u32 2147483647, %v1430
      %v1432 = vadd.f32 %v1421, %v1431
      %1433 = vset.pattern.permute.xlu0 103
      %1434 = vperm.xlu0 %1433, %v191
      %v1435 = vpop.permute.xlu0 %1434
      %v1437 = vlaneseq
      %v1438 = vshrl.u32 %v1437, 7
      %v1439 = vsub.s32 7, %v1438
      %v1440 = vrot.slane %v204, %v1439
      %v1441 = vsub.f32 %v1435, %v1440
      %v1442 = vand.u32 2147483647, %v1441
      %v1443 = vadd.f32 %v1432, %v1442
      %v1444 = vsub.f32 0.0, %v1443
      %v1445 = vmul.f32 %v1444, 1.442695
      %v1446 = vpow.pop %v1445
      %v1447 = vsel %vm306, %v1446, 0.0
      %s1448 = scalar_lea.vmem [#allocation2], 96
      %v1449 = vld [vmem:[%s1448] sm:$0xff]
      %v1450 = vadd.f32 %v1449, %v1447
      %1451 = vst.msk [vmem:[%s1448] sm:$0xff] %vm310, %v1450
      %1452 = vset.pattern.permute.xlu0 104
      %1453 = vperm.xlu0 %1452, %v191
      %v1454 = vpop.permute.xlu0 %1453
      %v1456 = vlaneseq
      %v1457 = vshrl.u32 %v1456, 7
      %v1458 = vsub.s32 0, %v1457
      %v1459 = vrot.slane %v205, %v1458
      %v1460 = vsub.f32 %v1454, %v1459
      %v1461 = vand.u32 2147483647, %v1460
      %1462 = vset.pattern.permute.xlu0 105
      %1463 = vperm.xlu0 %1462, %v191
      %v1464 = vpop.permute.xlu0 %1463
      %v1466 = vlaneseq
      %v1467 = vshrl.u32 %v1466, 7
      %v1468 = vsub.s32 1, %v1467
      %v1469 = vrot.slane %v205, %v1468
      %v1470 = vsub.f32 %v1464, %v1469
      %v1471 = vand.u32 2147483647, %v1470
      %v1472 = vadd.f32 %v1461, %v1471
      %1473 = vset.pattern.permute.xlu0 106
      %1474 = vperm.xlu0 %1473, %v191
      %v1475 = vpop.permute.xlu0 %1474
      %v1477 = vlaneseq
      %v1478 = vshrl.u32 %v1477, 7
      %v1479 = vsub.s32 2, %v1478
      %v1480 = vrot.slane %v205, %v1479
      %v1481 = vsub.f32 %v1475, %v1480
      %v1482 = vand.u32 2147483647, %v1481
      %v1483 = vadd.f32 %v1472, %v1482
      %1484 = vset.pattern.permute.xlu0 107
      %1485 = vperm.xlu0 %1484, %v191
      %v1486 = vpop.permute.xlu0 %1485
      %v1488 = vlaneseq
      %v1489 = vshrl.u32 %v1488, 7
      %v1490 = vsub.s32 3, %v1489
      %v1491 = vrot.slane %v205, %v1490
      %v1492 = vsub.f32 %v1486, %v1491
      %v1493 = vand.u32 2147483647, %v1492
      %v1494 = vadd.f32 %v1483, %v1493
      %1495 = vset.pattern.permute.xlu0 108
      %1496 = vperm.xlu0 %1495, %v191
      %v1497 = vpop.permute.xlu0 %1496
      %v1499 = vlaneseq
      %v1500 = vshrl.u32 %v1499, 7
      %v1501 = vsub.s32 4, %v1500
      %v1502 = vrot.slane %v205, %v1501
      %v1503 = vsub.f32 %v1497, %v1502
      %v1504 = vand.u32 2147483647, %v1503
      %v1505 = vadd.f32 %v1494, %v1504
      %1506 = vset.pattern.permute.xlu0 109
      %1507 = vperm.xlu0 %1506, %v191
      %v1508 = vpop.permute.xlu0 %1507
      %v1510 = vlaneseq
      %v1511 = vshrl.u32 %v1510, 7
      %v1512 = vsub.s32 5, %v1511
      %v1513 = vrot.slane %v205, %v1512
      %v1514 = vsub.f32 %v1508, %v1513
      %v1515 = vand.u32 2147483647, %v1514
      %v1516 = vadd.f32 %v1505, %v1515
      %1517 = vset.pattern.permute.xlu0 110
      %1518 = vperm.xlu0 %1517, %v191
      %v1519 = vpop.permute.xlu0 %1518
      %v1521 = vlaneseq
      %v1522 = vshrl.u32 %v1521, 7
      %v1523 = vsub.s32 6, %v1522
      %v1524 = vrot.slane %v205, %v1523
      %v1525 = vsub.f32 %v1519, %v1524
      %v1526 = vand.u32 2147483647, %v1525
      %v1527 = vadd.f32 %v1516, %v1526
      %1528 = vset.pattern.permute.xlu0 111
      %1529 = vperm.xlu0 %1528, %v191
      %v1530 = vpop.permute.xlu0 %1529
      %v1532 = vlaneseq
      %v1533 = vshrl.u32 %v1532, 7
      %v1534 = vsub.s32 7, %v1533
      %v1535 = vrot.slane %v205, %v1534
      %v1536 = vsub.f32 %v1530, %v1535
      %v1537 = vand.u32 2147483647, %v1536
      %v1538 = vadd.f32 %v1527, %v1537
      %v1539 = vsub.f32 0.0, %v1538
      %v1540 = vmul.f32 %v1539, 1.442695
      %v1541 = vpow.pop %v1540
      %v1542 = vsel %vm306, %v1541, 0.0
      %s1543 = scalar_lea.vmem [#allocation2], 104
      %v1544 = vld [vmem:[%s1543] sm:$0xff]
      %v1545 = vadd.f32 %v1544, %v1542
      %1546 = vst.msk [vmem:[%s1543] sm:$0xff] %vm310, %v1545
      %1547 = vset.pattern.permute.xlu0 112
      %1548 = vperm.xlu0 %1547, %v191
      %v1549 = vpop.permute.xlu0 %1548
      %v1551 = vlaneseq
      %v1552 = vshrl.u32 %v1551, 7
      %v1553 = vsub.s32 0, %v1552
      %v1554 = vrot.slane %v206, %v1553
      %v1555 = vsub.f32 %v1549, %v1554
      %v1556 = vand.u32 2147483647, %v1555
      %1557 = vset.pattern.permute.xlu0 113
      %1558 = vperm.xlu0 %1557, %v191
      %v1559 = vpop.permute.xlu0 %1558
      %v1561 = vlaneseq
      %v1562 = vshrl.u32 %v1561, 7
      %v1563 = vsub.s32 1, %v1562
      %v1564 = vrot.slane %v206, %v1563
      %v1565 = vsub.f32 %v1559, %v1564
      %v1566 = vand.u32 2147483647, %v1565
      %v1567 = vadd.f32 %v1556, %v1566
      %1568 = vset.pattern.permute.xlu0 114
      %1569 = vperm.xlu0 %1568, %v191
      %v1570 = vpop.permute.xlu0 %1569
      %v1572 = vlaneseq
      %v1573 = vshrl.u32 %v1572, 7
      %v1574 = vsub.s32 2, %v1573
      %v1575 = vrot.slane %v206, %v1574
      %v1576 = vsub.f32 %v1570, %v1575
      %v1577 = vand.u32 2147483647, %v1576
      %v1578 = vadd.f32 %v1567, %v1577
      %1579 = vset.pattern.permute.xlu0 115
      %1580 = vperm.xlu0 %1579, %v191
      %v1581 = vpop.permute.xlu0 %1580
      %v1583 = vlaneseq
      %v1584 = vshrl.u32 %v1583, 7
      %v1585 = vsub.s32 3, %v1584
      %v1586 = vrot.slane %v206, %v1585
      %v1587 = vsub.f32 %v1581, %v1586
      %v1588 = vand.u32 2147483647, %v1587
      %v1589 = vadd.f32 %v1578, %v1588
      %1590 = vset.pattern.permute.xlu0 116
      %1591 = vperm.xlu0 %1590, %v191
      %v1592 = vpop.permute.xlu0 %1591
      %v1594 = vlaneseq
      %v1595 = vshrl.u32 %v1594, 7
      %v1596 = vsub.s32 4, %v1595
      %v1597 = vrot.slane %v206, %v1596
      %v1598 = vsub.f32 %v1592, %v1597
      %v1599 = vand.u32 2147483647, %v1598
      %v1600 = vadd.f32 %v1589, %v1599
      %1601 = vset.pattern.permute.xlu0 117
      %1602 = vperm.xlu0 %1601, %v191
      %v1603 = vpop.permute.xlu0 %1602
      %v1605 = vlaneseq
      %v1606 = vshrl.u32 %v1605, 7
      %v1607 = vsub.s32 5, %v1606
      %v1608 = vrot.slane %v206, %v1607
      %v1609 = vsub.f32 %v1603, %v1608
      %v1610 = vand.u32 2147483647, %v1609
      %v1611 = vadd.f32 %v1600, %v1610
      %1612 = vset.pattern.permute.xlu0 118
      %1613 = vperm.xlu0 %1612, %v191
      %v1614 = vpop.permute.xlu0 %1613
      %v1616 = vlaneseq
      %v1617 = vshrl.u32 %v1616, 7
      %v1618 = vsub.s32 6, %v1617
      %v1619 = vrot.slane %v206, %v1618
      %v1620 = vsub.f32 %v1614, %v1619
      %v1621 = vand.u32 2147483647, %v1620
      %v1622 = vadd.f32 %v1611, %v1621
      %1623 = vset.pattern.permute.xlu0 119
      %1624 = vperm.xlu0 %1623, %v191
      %v1625 = vpop.permute.xlu0 %1624
      %v1627 = vlaneseq
      %v1628 = vshrl.u32 %v1627, 7
      %v1629 = vsub.s32 7, %v1628
      %v1630 = vrot.slane %v206, %v1629
      %v1631 = vsub.f32 %v1625, %v1630
      %v1632 = vand.u32 2147483647, %v1631
      %v1633 = vadd.f32 %v1622, %v1632
      %v1634 = vsub.f32 0.0, %v1633
      %v1635 = vmul.f32 %v1634, 1.442695
      %v1636 = vpow.pop %v1635
      %v1637 = vsel %vm306, %v1636, 0.0
      %s1638 = scalar_lea.vmem [#allocation2], 112
      %v1639 = vld [vmem:[%s1638] sm:$0xff]
      %v1640 = vadd.f32 %v1639, %v1637
      %1641 = vst.msk [vmem:[%s1638] sm:$0xff] %vm310, %v1640
      %1642 = vset.pattern.permute.xlu0 120
      %1643 = vperm.xlu0 %1642, %v191
      %v1644 = vpop.permute.xlu0 %1643
      %v1646 = vlaneseq
      %v1647 = vshrl.u32 %v1646, 7
      %v1648 = vsub.s32 0, %v1647
      %v1649 = vrot.slane %v207, %v1648
      %v1650 = vsub.f32 %v1644, %v1649
      %v1651 = vand.u32 2147483647, %v1650
      %1652 = vset.pattern.permute.xlu0 121
      %1653 = vperm.xlu0 %1652, %v191
      %v1654 = vpop.permute.xlu0 %1653
      %v1656 = vlaneseq
      %v1657 = vshrl.u32 %v1656, 7
      %v1658 = vsub.s32 1, %v1657
      %v1659 = vrot.slane %v207, %v1658
      %v1660 = vsub.f32 %v1654, %v1659
      %v1661 = vand.u32 2147483647, %v1660
      %v1662 = vadd.f32 %v1651, %v1661
      %1663 = vset.pattern.permute.xlu0 122
      %1664 = vperm.xlu0 %1663, %v191
      %v1665 = vpop.permute.xlu0 %1664
      %v1667 = vlaneseq
      %v1668 = vshrl.u32 %v1667, 7
      %v1669 = vsub.s32 2, %v1668
      %v1670 = vrot.slane %v207, %v1669
      %v1671 = vsub.f32 %v1665, %v1670
      %v1672 = vand.u32 2147483647, %v1671
      %v1673 = vadd.f32 %v1662, %v1672
      %1674 = vset.pattern.permute.xlu0 123
      %1675 = vperm.xlu0 %1674, %v191
      %v1676 = vpop.permute.xlu0 %1675
      %v1678 = vlaneseq
      %v1679 = vshrl.u32 %v1678, 7
      %v1680 = vsub.s32 3, %v1679
      %v1681 = vrot.slane %v207, %v1680
      %v1682 = vsub.f32 %v1676, %v1681
      %v1683 = vand.u32 2147483647, %v1682
      %v1684 = vadd.f32 %v1673, %v1683
      %1685 = vset.pattern.permute.xlu0 124
      %1686 = vperm.xlu0 %1685, %v191
      %v1687 = vpop.permute.xlu0 %1686
      %v1689 = vlaneseq
      %v1690 = vshrl.u32 %v1689, 7
      %v1691 = vsub.s32 4, %v1690
      %v1692 = vrot.slane %v207, %v1691
      %v1693 = vsub.f32 %v1687, %v1692
      %v1694 = vand.u32 2147483647, %v1693
      %v1695 = vadd.f32 %v1684, %v1694
      %1696 = vset.pattern.permute.xlu0 125
      %1697 = vperm.xlu0 %1696, %v191
      %v1698 = vpop.permute.xlu0 %1697
      %v1700 = vlaneseq
      %v1701 = vshrl.u32 %v1700, 7
      %v1702 = vsub.s32 5, %v1701
      %v1703 = vrot.slane %v207, %v1702
      %v1704 = vsub.f32 %v1698, %v1703
      %v1705 = vand.u32 2147483647, %v1704
      %v1706 = vadd.f32 %v1695, %v1705
      %1707 = vset.pattern.permute.xlu0 126
      %1708 = vperm.xlu0 %1707, %v191
      %v1709 = vpop.permute.xlu0 %1708
      %v1711 = vlaneseq
      %v1712 = vshrl.u32 %v1711, 7
      %v1713 = vsub.s32 6, %v1712
      %v1714 = vrot.slane %v207, %v1713
      %v1715 = vsub.f32 %v1709, %v1714
      %v1716 = vand.u32 2147483647, %v1715
      %v1717 = vadd.f32 %v1706, %v1716
      %1718 = vset.pattern.permute.xlu0 127
      %1719 = vperm.xlu0 %1718, %v191
      %v1720 = vpop.permute.xlu0 %1719
      %v1722 = vlaneseq
      %v1723 = vshrl.u32 %v1722, 7
      %v1724 = vsub.s32 7, %v1723
      %v1725 = vrot.slane %v207, %v1724
      %v1726 = vsub.f32 %v1720, %v1725
      %v1727 = vand.u32 2147483647, %v1726
      %v1728 = vadd.f32 %v1717, %v1727
      %v1729 = vsub.f32 0.0, %v1728
      %v1730 = vmul.f32 %v1729, 1.442695
      %v1731 = vpow.pop %v1730
      %v1732 = vsel %vm306, %v1731, 0.0
      %s1733 = scalar_lea.vmem [#allocation2], 120
      %v1734 = vld [vmem:[%s1733] sm:$0xff]
      %v1735 = vadd.f32 %v1734, %v1732
      %1736 = vst.msk [vmem:[%s1733] sm:$0xff] %vm310, %v1735
      // Predicated region
      $region33: #{tpu_custom_call.1} parent=27 // pred_check
        %p1737 = pneg %p170
      $region34: #{tpu_custom_call.1} parent=27 // pred_check_branch
        %1739 = sbr.rel (%p1737) target = $region36
      $region35: #{tpu_custom_call.1} parent=27 // pred_region
        %v1740 = vld [vmem:[#allocation2] sm:$0xff]
        %v1741 = vld [vmem:[#allocation2 + $0x8] sm:$0xff]
        %v1742 = vld [vmem:[#allocation2 + $0x10] sm:$0xff]
        %v1743 = vld [vmem:[#allocation2 + $0x18] sm:$0xff]
        %v1744 = vld [vmem:[#allocation2 + $0x20] sm:$0xff]
        %v1745 = vld [vmem:[#allocation2 + $0x28] sm:$0xff]
        %v1746 = vld [vmem:[#allocation2 + $0x30] sm:$0xff]
        %v1747 = vld [vmem:[#allocation2 + $0x38] sm:$0xff]
        %v1748 = vld [vmem:[#allocation2 + $0x40] sm:$0xff]
        %v1749 = vld [vmem:[#allocation2 + $0x48] sm:$0xff]
        %v1750 = vld [vmem:[#allocation2 + $0x50] sm:$0xff]
        %v1751 = vld [vmem:[#allocation2 + $0x58] sm:$0xff]
        %v1752 = vld [vmem:[#allocation2 + $0x60] sm:$0xff]
        %v1753 = vld [vmem:[#allocation2 + $0x68] sm:$0xff]
        %v1754 = vld [vmem:[#allocation2 + $0x70] sm:$0xff]
        %v1755 = vld [vmem:[#allocation2 + $0x78] sm:$0xff]
        %v1756 = vsel %vm310, %v1740, 0.0
        %1757 = vadd.xlane.f32.xlu0 %v1756
        %v1758 = vpop.xlane.xlu0 %1757
        %v1759 = vsel %vm310, %v1741, 0.0
        %1760 = vadd.xlane.f32.xlu0 %v1759
        %v1761 = vpop.xlane.xlu0 %1760
        %v1762 = vsel %vm310, %v1742, 0.0
        %1763 = vadd.xlane.f32.xlu0 %v1762
        %v1764 = vpop.xlane.xlu0 %1763
        %v1765 = vsel %vm310, %v1743, 0.0
        %1766 = vadd.xlane.f32.xlu0 %v1765
        %v1767 = vpop.xlane.xlu0 %1766
        %v1768 = vsel %vm310, %v1744, 0.0
        %1769 = vadd.xlane.f32.xlu0 %v1768
        %v1770 = vpop.xlane.xlu0 %1769
        %v1771 = vsel %vm310, %v1745, 0.0
        %1772 = vadd.xlane.f32.xlu0 %v1771
        %v1773 = vpop.xlane.xlu0 %1772
        %v1774 = vsel %vm310, %v1746, 0.0
        %1775 = vadd.xlane.f32.xlu0 %v1774
        %v1776 = vpop.xlane.xlu0 %1775
        %v1777 = vsel %vm310, %v1747, 0.0
        %1778 = vadd.xlane.f32.xlu0 %v1777
        %v1779 = vpop.xlane.xlu0 %1778
        %v1780 = vsel %vm310, %v1748, 0.0
        %1781 = vadd.xlane.f32.xlu0 %v1780
        %v1782 = vpop.xlane.xlu0 %1781
        %v1783 = vsel %vm310, %v1749, 0.0
        %1784 = vadd.xlane.f32.xlu0 %v1783
        %v1785 = vpop.xlane.xlu0 %1784
        %v1786 = vsel %vm310, %v1750, 0.0
        %1787 = vadd.xlane.f32.xlu0 %v1786
        %v1788 = vpop.xlane.xlu0 %1787
        %v1789 = vsel %vm310, %v1751, 0.0
        %1790 = vadd.xlane.f32.xlu0 %v1789
        %v1791 = vpop.xlane.xlu0 %1790
        %v1792 = vsel %vm310, %v1752, 0.0
        %1793 = vadd.xlane.f32.xlu0 %v1792
        %v1794 = vpop.xlane.xlu0 %1793
        %v1795 = vsel %vm310, %v1753, 0.0
        %1796 = vadd.xlane.f32.xlu0 %v1795
        %v1797 = vpop.xlane.xlu0 %1796
        %v1798 = vsel %vm310, %v1754, 0.0
        %1799 = vadd.xlane.f32.xlu0 %v1798
        %v1800 = vpop.xlane.xlu0 %1799
        %v1801 = vsel %vm310, %v1755, 0.0
        %1802 = vadd.xlane.f32.xlu0 %v1801
        %v1803 = vpop.xlane.xlu0 %1802
        %v1804 = vsub.f32 %v1758, 1.0
        %v1805 = vsub.f32 %v1761, 1.0
        %v1806 = vsub.f32 %v1764, 1.0
        %v1807 = vsub.f32 %v1767, 1.0
        %v1808 = vsub.f32 %v1770, 1.0
        %v1809 = vsub.f32 %v1773, 1.0
        %v1810 = vsub.f32 %v1776, 1.0
        %v1811 = vsub.f32 %v1779, 1.0
        %v1812 = vsub.f32 %v1782, 1.0
        %v1813 = vsub.f32 %v1785, 1.0
        %v1814 = vsub.f32 %v1788, 1.0
        %v1815 = vsub.f32 %v1791, 1.0
        %v1816 = vsub.f32 %v1794, 1.0
        %v1817 = vsub.f32 %v1797, 1.0
        %v1818 = vsub.f32 %v1800, 1.0
        %v1819 = vsub.f32 %v1803, 1.0
        %v1836 = vlaneseq
        %v1837 = vshrl.u32 %v1836, 7
        %v1838 = vsub.s32 %v209, %v1837
        %v1839 = vrot.slane %v1804, %v1838
        %v1840 = vlaneseq
        %v1841 = vshrl.u32 %v1840, 7
        %v1842 = vsub.s32 %v209, %v1841
        %v1843 = vrot.slane %v1805, %v1842
        %v1844 = vlaneseq
        %v1845 = vshrl.u32 %v1844, 7
        %v1846 = vsub.s32 %v209, %v1845
        %v1847 = vrot.slane %v1806, %v1846
        %v1848 = vlaneseq
        %v1849 = vshrl.u32 %v1848, 7
        %v1850 = vsub.s32 %v209, %v1849
        %v1851 = vrot.slane %v1807, %v1850
        %v1852 = vlaneseq
        %v1853 = vshrl.u32 %v1852, 7
        %v1854 = vsub.s32 %v209, %v1853
        %v1855 = vrot.slane %v1808, %v1854
        %v1856 = vlaneseq
        %v1857 = vshrl.u32 %v1856, 7
        %v1858 = vsub.s32 %v209, %v1857
        %v1859 = vrot.slane %v1809, %v1858
        %v1860 = vlaneseq
        %v1861 = vshrl.u32 %v1860, 7
        %v1862 = vsub.s32 %v209, %v1861
        %v1863 = vrot.slane %v1810, %v1862
        %v1864 = vlaneseq
        %v1865 = vshrl.u32 %v1864, 7
        %v1866 = vsub.s32 %v209, %v1865
        %v1867 = vrot.slane %v1811, %v1866
        %v1868 = vlaneseq
        %v1869 = vshrl.u32 %v1868, 7
        %v1870 = vsub.s32 %v209, %v1869
        %v1871 = vrot.slane %v1812, %v1870
        %v1872 = vlaneseq
        %v1873 = vshrl.u32 %v1872, 7
        %v1874 = vsub.s32 %v209, %v1873
        %v1875 = vrot.slane %v1813, %v1874
        %v1876 = vlaneseq
        %v1877 = vshrl.u32 %v1876, 7
        %v1878 = vsub.s32 %v209, %v1877
        %v1879 = vrot.slane %v1814, %v1878
        %v1880 = vlaneseq
        %v1881 = vshrl.u32 %v1880, 7
        %v1882 = vsub.s32 %v209, %v1881
        %v1883 = vrot.slane %v1815, %v1882
        %v1884 = vlaneseq
        %v1885 = vshrl.u32 %v1884, 7
        %v1886 = vsub.s32 %v209, %v1885
        %v1887 = vrot.slane %v1816, %v1886
        %v1888 = vlaneseq
        %v1889 = vshrl.u32 %v1888, 7
        %v1890 = vsub.s32 %v209, %v1889
        %v1891 = vrot.slane %v1817, %v1890
        %v1892 = vlaneseq
        %v1893 = vshrl.u32 %v1892, 7
        %v1894 = vsub.s32 %v209, %v1893
        %v1895 = vrot.slane %v1818, %v1894
        %v1896 = vlaneseq
        %v1897 = vshrl.u32 %v1896, 7
        %v1898 = vsub.s32 %v209, %v1897
        %v1899 = vrot.slane %v1819, %v1898
        %vm1900 = vcmask 1041409
        %v1901 = vsel %vm1900, %v1843, %v1839
        %vm1902 = vcmask 1042434
        %v1903 = vsel %vm1902, %v1847, %v1901
        %vm1904 = vcmask 1043459
        %v1905 = vsel %vm1904, %v1851, %v1903
        %vm1906 = vcmask 1044484
        %v1907 = vsel %vm1906, %v1855, %v1905
        %vm1908 = vcmask 1045509
        %v1909 = vsel %vm1908, %v1859, %v1907
        %vm1910 = vcmask 1046534
        %v1911 = vsel %vm1910, %v1863, %v1909
        %vm1912 = vcmask 1047559
        %v1913 = vsel %vm1912, %v1867, %v1911
        %v1914 = vsel %vm1900, %v1875, %v1871
        %v1915 = vsel %vm1902, %v1879, %v1914
        %v1916 = vsel %vm1904, %v1883, %v1915
        %v1917 = vsel %vm1906, %v1887, %v1916
        %v1918 = vsel %vm1908, %v1891, %v1917
        %v1919 = vsel %vm1910, %v1895, %v1918
        %v1920 = vsel %vm1912, %v1899, %v1919
        %vm1923 = vcmask 64512
        %1924 = vst.msk [vmem:[%s169] sm:$0xff] %vm1923, %v1913
        %1925 = vst.msk [vmem:[%s169 + $0x8] sm:$0xff] %vm1923, %v1920
      $region36: #{tpu_custom_call.1} parent=27 // pred_fallthru
        _
      %p1926 = scmp.lt.s32.totalorder %s17, 1
      %s1927 = scalar_select %p1926, %s17, 1
      %s1928 = smul.addr %s1927, 2
      %s1929 = smul.addr %s1928, 8
      %s1930 = scalar_lea.vmem %s2, %s1929
      // Predicated region
      $region37: #{tpu_custom_call.1} parent=27 // pred_check
        %p1931 = pneg %p95
      $region38: #{tpu_custom_call.1} parent=27 // pred_check_branch
        %1933 = sbr.rel (%p1931) target = $region40
      $region39: #{tpu_custom_call.1} parent=27 // pred_region
        _
      $region40: #{tpu_custom_call.1} parent=27 // pred_fallthru
        _
    $region28: #{tpu_custom_call.1} parent=5 // pred_fallthru
      _
    %p1934 = scmp.le.s32.totalorder 2, %s8
    // Predicated region
    $region41: #{tpu_custom_call.1} parent=5 // pred_check
      %p1935 = pneg %p1934
    $region42: #{tpu_custom_call.1} parent=5 // pred_check_branch
      %1937 = sbr.rel (%p1935) target = $region44
    $region43: #{tpu_custom_call.1} parent=5 // pred_region
      %s1938 = ssub.s32 %s8, 2
      // Predicated region
      $region45: #{tpu_custom_call.1} parent=43 // pred_check
        %p1939 = pneg %p101
      $region46: #{tpu_custom_call.1} parent=43 // pred_check_branch
        %1941 = sbr.rel (%p1939) target = $region48
      $region47: #{tpu_custom_call.1} parent=43 // pred_region
        %p1942 = scmp.lt.s32.totalorder %s19, 1
        %s1943 = scalar_select %p1942, %s19, 1
        %s1944 = smul.addr %s1943, 2
        %s1945 = smul.addr %s1944, 8
        %s1946 = scalar_lea.vmem %s2, %s1945
      $region48: #{tpu_custom_call.1} parent=43 // pred_fallthru
        _
    $region44: #{tpu_custom_call.1} parent=5 // pred_fallthru
      _
  $region6: #{tpu_custom_call.1} parent=0 // loop_footer
    %s12 = sadd.s32 1, %s8
  $region7: #{tpu_custom_call.1} parent=0 // loop_footer_branch
    %7 = sbr.rel target = $region3
  $region8: #{tpu_custom_call.1} parent=0 // loop_exit
    _

</llo_original>
